<compile_context>
chip_gen: v6e
topology: v6e:2x2x1
jax: 0.10.0
libtpu: 0.0.40
codegen_flags: <defaults>
</compile_context>

<pallas_src>
import functools

import jax
import jax.numpy as jnp
from jax.experimental import pallas as pl
from jax.experimental.pallas import tpu as pltpu


# --------------------------------------------------------------------------
# Packed-slab layout (shared by the packer and the kernel factory)
# --------------------------------------------------------------------------
def _round_up(n, m):
    return ((n + m - 1) // m) * m


def _weight_layout(D, H, A, H2, H3):
    """Row layout of the packed bf16 weight slab (lane width = 3*H)."""
    entries = [
        ("c1_w1t", D, H), ("c1_w2t", H, H),
        ("c2_w1t", H, H), ("c2_w2t", H, H),
        ("wih", H, 3 * H), ("whh", H, 3 * H),
        ("hw1e", H, H2), ("hw1a", A, H2),
        ("hw2t", H2, H3), ("hw3", 1, H3),
    ]
    layout, off = {}, 0
    for name, rows, cols in entries:
        layout[name] = (off, rows, cols)
        off += _round_up(rows, 16)          # keep every matrix bf16-sublane-tile aligned
    width = max(c for _, _, c in entries)
    return layout, _round_up(off, 16), width


# --------------------------------------------------------------------------
# Fused forward kernel
# --------------------------------------------------------------------------
def _make_fused_kernel(T, N, D, A, H, H2, H3):
    layout, _, _ = _weight_layout(D, H, A, H2, H3)

    def kernel(adj_ref, x_ref, w_ref, b_ref, bat_ref, out_ref, seq_buf, gi_buf):
        f32, bf16 = jnp.float32, jnp.bfloat16

        def w(name):                               # static-offset slice of the bf16 weight slab
            r0, rows, cols = layout[name]
            return w_ref[r0:r0 + rows, 0:cols]

        def b(row, c0, cols):                      # (1, cols) f32 bias row
            return b_ref[row:row + 1, c0:c0 + cols]

        def gin_layer(x_bf, w1, b1, w2, b2):
            # GINConv(eps=0): MLP(x + sum_j x_j), batched over all T*N rows.
            agg = jnp.dot(adj_ref[...], x_bf, preferred_element_type=f32)
            h = x_bf.astype(f32) + agg
            h1 = jnp.dot(h.astype(bf16), w1, preferred_element_type=f32) + b1
            h1 = jnp.maximum(h1, 0.0)              # ReLU (eval BN folded into w2/b2; dropout = id)
            h2 = jnp.dot(h1.astype(bf16), w2, preferred_element_type=f32) + b2
            return jnp.maximum(h2, 0.0)            # MLP's trailing ReLU

        def gru_pass(write_outputs):
            # Hoisted input projection for all T at once: one (T*N, 3H) matmul.
            gi_buf[...] = (jnp.dot(seq_buf[...], w("wih"), preferred_element_type=f32)
                           + b(4, 0, 3 * H))
            whh = w("whh")                         # (H, 3H) bf16, lives across the unrolled loop
            bhh = b(5, 0, 3 * H)                   # (1, 3H) f32
            h = jnp.zeros((N, H), f32)             # h_0 = 0
            for t in range(T):                     # static unroll (small T)
                off = t * N
                gi = gi_buf[off:off + N, :]        # (N, 3H) f32
                gh = jnp.dot(h.astype(bf16), whh, preferred_element_type=f32) + bhh
                r = jax.nn.sigmoid(gi[:, 0:H] + gh[:, 0:H])
                z = jax.nn.sigmoid(gi[:, H:2 * H] + gh[:, H:2 * H])
                n = jnp.tanh(gi[:, 2 * H:3 * H] + r * gh[:, 2 * H:3 * H])
                h = n + z * (h - n)                # == (1-z)*n + z*h
                if write_outputs:
                    seq_buf[off:off + N, :] = h.astype(bf16)
            return h

        # conv1 over every time slot (one T*N-row slab).
        seq_buf[...] = gin_layer(x_ref[...], w("c1_w1t"), b(0, 0, H),
                                 w("c1_w2t"), b(1, 0, H)).astype(bf16)
        # GRU #1: whole output sequence stays resident in VMEM.
        gru_pass(write_outputs=True)
        # conv2 over every time slot.
        seq_buf[...] = gin_layer(seq_buf[...], w("c2_w1t"), b(2, 0, H),
                                 w("c2_w2t"), b(3, 0, H)).astype(bf16)
        # GRU #2: only the final hidden state (== h_n of a single-layer GRU).
        h_final = gru_pass(write_outputs=False)

        # Head: one-hot gather of target nodes + split fc1 (no lane-axis concat).
        sel = bat_ref[:, 0:N]                      # (B, N) bf16 one-hot selector
        apart = bat_ref[:, N:N + A]                # (B, A) bf16 apartment features
        emb = jnp.dot(sel, h_final.astype(bf16), preferred_element_type=f32)     # (B, H)
        z1 = (jnp.dot(emb.astype(bf16), w("hw1e"), preferred_element_type=f32)
              + jnp.dot(apart, w("hw1a"), preferred_element_type=f32)
              + b(6, 0, H2))
        z1 = jnp.where(z1 > 0, z1, 0.1 * z1)       # LeakyReLU(0.1)
        z2 = jnp.dot(z1.astype(bf16), w("hw2t"), preferred_element_type=f32) + b(6, H2, H3)
        z2 = jnp.where(z2 > 0, z2, 0.05 * z2)      # LeakyReLU(0.05)
        # fc3 has a single output column -> do it as a lane reduction, not a 1-lane matmul.
        out_ref[...] = (jnp.sum(z2 * w("hw3").astype(f32), axis=1, keepdims=True)
                        + b(6, H2 + H3, 1))

    return kernel


# --------------------------------------------------------------------------
# Forward wrapper (graph glue in plain JAX, everything else in one kernel)
# --------------------------------------------------------------------------
def postal_temporal_gin_gru_forward(w_slab, b_slab, big_adj, x_seq, target_node_idx,
                                    apart_feature, *, hidden, hidden2, hidden3):
    T, N, D = x_seq.shape
    B = target_node_idx.shape[0]
    A = apart_feature.shape[-1]
    H = hidden

    x_flat = x_seq.reshape(T * N, D).astype(jnp.bfloat16)
    sel = jax.nn.one_hot(target_node_idx, N, dtype=jnp.bfloat16)            # (B, N)
    batch_slab = jnp.concatenate(
        [sel, apart_feature.reshape(B, A).astype(jnp.bfloat16)], axis=1)    # (B, N+A)

    inputs = (big_adj, x_flat, w_slab, b_slab, batch_slab)

    def full_spec(a):
        nd = a.ndim
        return pl.BlockSpec(a.shape, lambda i, _nd=nd: (0,) * _nd)

    kernel = _make_fused_kernel(T, N, D, A, H, hidden2, hidden3)
    return pl.pallas_call(
        kernel,
        out_shape=jax.ShapeDtypeStruct((B, 1), jnp.float32),
        grid=(1,),
        in_specs=[full_spec(a) for a in inputs],
        out_specs=pl.BlockSpec((B, 1), lambda i: (0, 0)),
        scratch_shapes=[
            pltpu.VMEM((T * N, H), jnp.bfloat16),       # activation slab (conv / GRU outputs)
            pltpu.VMEM((T * N, 3 * H), jnp.float32),    # fused hoisted gate projection (gi)
        ],
        compiler_params=pltpu.CompilerParams(dimension_semantics=("arbitrary",)),
    )(*inputs)


def build_block_adjacency(edge_index, num_nodes, num_time_slots):
    """Dense A[dst, src] repeated block-diagonally over time (constant per edge_index)."""
    src, dst = edge_index[0], edge_index[1]
    adj = jnp.zeros((num_nodes, num_nodes), jnp.float32).at[dst, src].add(1.0)
    big = jnp.kron(jnp.eye(num_time_slots, dtype=jnp.float32), adj)
    return big.astype(jnp.bfloat16)      # small-integer entries -> exact in bf16


# --------------------------------------------------------------------------
# Deterministic parameter init (BN folded) + packing into DMA slabs
# --------------------------------------------------------------------------
def init_params(key, input_dim, apart_dim, hidden, hidden2, hidden3):
    ks = iter(jax.random.split(key, 24))

    def lin(k, din, dout):
        k1, k2 = jax.random.split(k)
        w = jax.random.normal(k1, (dout, din), jnp.float32) * 0.1
        b = jax.random.normal(k2, (dout,), jnp.float32) * 0.05
        return w, b

    def gin_block(din, dout):
        w1, b1 = lin(next(ks), din, dout)
        w2, b2 = lin(next(ks), dout, dout)
        gamma = 1.0 + 0.1 * jax.random.normal(next(ks), (dout,), jnp.float32)
        beta = 0.05 * jax.random.normal(next(ks), (dout,), jnp.float32)
        run_mean = jnp.zeros((dout,), jnp.float32)
        run_var = jnp.ones((dout,), jnp.float32)
        # Fold eval-mode BN (applied post-ReLU, pre-Linear2) into Linear2:
        #   (scale*y + shift) @ W2^T + b2 == y @ (diag(scale) W2^T) + (shift W2^T + b2)
        scale = gamma / jnp.sqrt(run_var + 1e-5)
        shift = beta - run_mean * scale
        w2t = w2.T
        return (w1.T, b1, w2t * scale[:, None], b2 + shift @ w2t)

    conv1 = gin_block(input_dim, hidden)
    conv2 = gin_block(hidden, hidden)

    # GRU: weight_ih/hh (3H, H), gate order [r, z, n]; shared by both passes.
    wih, bih = lin(next(ks), hidden, 3 * hidden)
    whh, bhh = lin(next(ks), hidden, 3 * hidden)

    # Head: fc1 split into embedding part and apartment-feature part.
    w1, b1 = lin(next(ks), hidden + apart_dim, hidden2)
    w2, b2 = lin(next(ks), hidden2, hidden3)
    w3, b3 = lin(next(ks), hidden3, 1)

    return {
        "conv1": conv1, "conv2": conv2,
        "gru_wih_t": wih.T, "gru_whh_t": whh.T, "gru_bih": bih, "gru_bhh": bhh,
        "head_w1e_t": w1[:, :hidden].T, "head_w1a_t": w1[:, hidden:].T, "head_b1": b1,
        "head_w2t": w2.T, "head_b2": b2, "head_w3": w3, "head_b3": b3,
    }


def pack_params(p, D, A, H, H2, H3):
    layout, total_rows, width = _weight_layout(D, H, A, H2, H3)
    mats = {
        "c1_w1t": p["conv1"][0], "c1_w2t": p["conv1"][2],
        "c2_w1t": p["conv2"][0], "c2_w2t": p["conv2"][2],
        "wih": p["gru_wih_t"], "whh": p["gru_whh_t"],
        "hw1e": p["head_w1e_t"], "hw1a": p["head_w1a_t"],
        "hw2t": p["head_w2t"], "hw3": p["head_w3"],
    }
    w_slab = jnp.zeros((total_rows, width), jnp.float32)
    for name, mat in mats.items():
        r0, rows, cols = layout[name]
        w_slab = w_slab.at[r0:r0 + rows, 0:cols].set(mat)
    w_slab = w_slab.astype(jnp.bfloat16)

    b_slab = jnp.zeros((8, 3 * H), jnp.float32)
    b_slab = b_slab.at[0, 0:H].set(p["conv1"][1])
    b_slab = b_slab.at[1, 0:H].set(p["conv1"][3])
    b_slab = b_slab.at[2, 0:H].set(p["conv2"][1])
    b_slab = b_slab.at[3, 0:H].set(p["conv2"][3])
    b_slab = b_slab.at[4, 0:3 * H].set(p["gru_bih"])
    b_slab = b_slab.at[5, 0:3 * H].set(p["gru_bhh"])
    b_slab = b_slab.at[6, 0:H2].set(p["head_b1"])
    b_slab = b_slab.at[6, H2:H2 + H3].set(p["head_b2"])
    b_slab = b_slab.at[6, H2 + H3:H2 + H3 + 1].set(p["head_b3"])
    return w_slab, b_slab


if __name__ == "__main__":
    # Small config: input_dim=12 (fixed by .view(-1, 12)), apart_feature_dim=10
    # (fixed by .view(-1, 10)), hidden=32, hidden2=16, hidden3=8, T=8, N=16.
    input_dim, apart_dim = 12, 10
    hidden, hidden2, hidden3 = 32, 16, 8
    T, N, E, B = 8, 16, 32, 4

    key = jax.random.PRNGKey(0)
    k_par, k_x, k_src, k_dst, k_apart = jax.random.split(key, 5)

    params = init_params(k_par, input_dim, apart_dim, hidden, hidden2, hidden3)
    w_slab, b_slab = pack_params(params, input_dim, apart_dim, hidden, hidden2, hidden3)

    x_seq = jax.random.normal(k_x, (T, N, input_dim), jnp.float32)
    src = jax.random.randint(k_src, (E,), 0, N, jnp.int32)
    dst = jax.random.randint(k_dst, (E,), 0, N, jnp.int32)
    edge_index = jnp.stack([src, dst], axis=0)               # (2, E)
    target_node_idx = jnp.array([0, 3, 7, 12], jnp.int32)    # B target nodes
    apart_feature = jax.random.normal(k_apart, (B, apart_dim), jnp.float32)

    # Constant for a fixed edge_index -> built once, outside the per-call path.
    big_adj = build_block_adjacency(edge_index, N, T)

    fwd = jax.jit(functools.partial(postal_temporal_gin_gru_forward,
                                    hidden=hidden, hidden2=hidden2, hidden3=hidden3))
    out = fwd(w_slab, b_slab, big_adj, x_seq, target_node_idx, apart_feature)
    jax.block_until_ready(out)
    assert out.shape == (B, 1) and out.dtype == jnp.float32
    assert bool(jnp.all(jnp.isfinite(out)))
    print("KERNEL_OK")
</pallas_src>

<mosaic_0001>
module attributes {stable_mosaic.version = 11 : i64} {
  func.func @kernel(%arg0: i32, %arg1: memref<128x128xbf16, #tpu.memory_space<vmem>>, %arg2: memref<128x12xbf16, #tpu.memory_space<vmem>>, %arg3: memref<256x96xbf16, #tpu.memory_space<vmem>>, %arg4: memref<8x96xf32, #tpu.memory_space<vmem>>, %arg5: memref<4x26xbf16, #tpu.memory_space<vmem>>, %arg6: memref<4x1xf32, #tpu.memory_space<vmem>>, %arg7: memref<128x32xbf16, #tpu.memory_space<vmem>>, %arg8: memref<128x96xf32, #tpu.memory_space<vmem>>) attributes {dimension_semantics = [#tpu.dimension_semantics<arbitrary>], iteration_bounds = array<i64: 1>, scalar_prefetch = 0 : i64, scratch_operands = 2 : i64, tpu.core_type = #tpu.core_type<tc>, window_params = [{pipeline_mode = #tpu.pipeline_mode<synchronous>, transform_indices = @transform_0, window_bounds = array<i64: 128, 128>}, {pipeline_mode = #tpu.pipeline_mode<synchronous>, transform_indices = @transform_1, window_bounds = array<i64: 128, 12>}, {pipeline_mode = #tpu.pipeline_mode<synchronous>, transform_indices = @transform_2, window_bounds = array<i64: 256, 96>}, {pipeline_mode = #tpu.pipeline_mode<synchronous>, transform_indices = @transform_3, window_bounds = array<i64: 8, 96>}, {pipeline_mode = #tpu.pipeline_mode<synchronous>, transform_indices = @transform_4, window_bounds = array<i64: 4, 26>}, {pipeline_mode = #tpu.pipeline_mode<synchronous>, transform_indices = @transform_5, window_bounds = array<i64: 4, 1>}]} {
    %c0 = arith.constant 0 : index
    %c0_0 = arith.constant 0 : index
    %0 = vector.load %arg2[%c0, %c0_0] : memref<128x12xbf16, #tpu.memory_space<vmem>>, vector<128x12xbf16>
    %c0_1 = arith.constant 0 : index
    %c0_2 = arith.constant 0 : index
    %1 = vector.load %arg3[%c0_1, %c0_2] : memref<256x96xbf16, #tpu.memory_space<vmem>>, vector<12x32xbf16>
    %c0_3 = arith.constant 0 : index
    %c0_4 = arith.constant 0 : index
    %2 = vector.load %arg4[%c0_3, %c0_4] : memref<8x96xf32, #tpu.memory_space<vmem>>, vector<1x32xf32>
    %c16 = arith.constant 16 : index
    %c0_5 = arith.constant 0 : index
    %3 = vector.load %arg3[%c16, %c0_5] : memref<256x96xbf16, #tpu.memory_space<vmem>>, vector<32x32xbf16>
    %c1 = arith.constant 1 : index
    %c0_6 = arith.constant 0 : index
    %4 = vector.load %arg4[%c1, %c0_6] : memref<8x96xf32, #tpu.memory_space<vmem>>, vector<1x32xf32>
    %c0_7 = arith.constant 0 : index
    %c0_8 = arith.constant 0 : index
    %5 = vector.load %arg1[%c0_7, %c0_8] : memref<128x128xbf16, #tpu.memory_space<vmem>>, vector<128x128xbf16>
    %cst = arith.constant dense<0.000000e+00> : vector<128x12xf32>
    %6 = tpu.matmul %5, %0, %cst {dimension_numbers = #tpu.dot_dimension_numbers<[1], [0], [0], [1], [0, 0, 1, 1], [], []>} : vector<128x128xbf16>, vector<128x12xbf16>, vector<128x12xf32> -> vector<128x12xf32>
    %7 = arith.extf %0 : vector<128x12xbf16> to vector<128x12xf32>
    %8 = arith.addf %7, %6 : vector<128x12xf32>
    %9 = arith.truncf %8 : vector<128x12xf32> to vector<128x12xbf16>
    %cst_9 = arith.constant dense<0.000000e+00> : vector<128x32xf32>
    %10 = tpu.matmul %9, %1, %cst_9 {dimension_numbers = #tpu.dot_dimension_numbers<[1], [0], [0], [1], [0, 0, 1, 1], [], []>} : vector<128x12xbf16>, vector<12x32xbf16>, vector<128x32xf32> -> vector<128x32xf32>
    %11 = vector.broadcast %2 : vector<1x32xf32> to vector<128x32xf32>
    %12 = arith.addf %10, %11 : vector<128x32xf32>
    %cst_10 = arith.constant 0.000000e+00 : f32
    %13 = vector.broadcast %cst_10 : f32 to vector<128x32xf32>
    %14 = arith.maximumf %12, %13 : vector<128x32xf32>
    %15 = arith.truncf %14 : vector<128x32xf32> to vector<128x32xbf16>
    %cst_11 = arith.constant dense<0.000000e+00> : vector<128x32xf32>
    %16 = tpu.matmul %15, %3, %cst_11 {dimension_numbers = #tpu.dot_dimension_numbers<[1], [0], [0], [1], [0, 0, 1, 1], [], []>} : vector<128x32xbf16>, vector<32x32xbf16>, vector<128x32xf32> -> vector<128x32xf32>
    %17 = vector.broadcast %4 : vector<1x32xf32> to vector<128x32xf32>
    %18 = arith.addf %16, %17 : vector<128x32xf32>
    %cst_12 = arith.constant 0.000000e+00 : f32
    %19 = vector.broadcast %cst_12 : f32 to vector<128x32xf32>
    %20 = arith.maximumf %18, %19 : vector<128x32xf32>
    %21 = arith.truncf %20 : vector<128x32xf32> to vector<128x32xbf16>
    %c0_13 = arith.constant 0 : index
    %c0_14 = arith.constant 0 : index
    %22 = vector.load %arg7[%c0_13, %c0_14] : memref<128x32xbf16, #tpu.memory_space<vmem>>, vector<128x32xbf16>
    tpu.vector_store %arg7[%c0_13, %c0_14], %21 {strides = array<i32>} : memref<128x32xbf16, #tpu.memory_space<vmem>>, vector<128x32xbf16>,
    %c0_15 = arith.constant 0 : index
    %c0_16 = arith.constant 0 : index
    %23 = vector.load %arg7[%c0_15, %c0_16] : memref<128x32xbf16, #tpu.memory_space<vmem>>, vector<128x32xbf16>
    %c112 = arith.constant 112 : index
    %c0_17 = arith.constant 0 : index
    %24 = vector.load %arg3[%c112, %c0_17] : memref<256x96xbf16, #tpu.memory_space<vmem>>, vector<32x96xbf16>
    %cst_18 = arith.constant dense<0.000000e+00> : vector<128x96xf32>
    %25 = tpu.matmul %23, %24, %cst_18 {dimension_numbers = #tpu.dot_dimension_numbers<[1], [0], [0], [1], [0, 0, 1, 1], [], []>} : vector<128x32xbf16>, vector<32x96xbf16>, vector<128x96xf32> -> vector<128x96xf32>
    %c4 = arith.constant 4 : index
    %c0_19 = arith.constant 0 : index
    %26 = vector.load %arg4[%c4, %c0_19] : memref<8x96xf32, #tpu.memory_space<vmem>>, vector<1x96xf32>
    %27 = vector.broadcast %26 : vector<1x96xf32> to vector<128x96xf32>
    %28 = arith.addf %25, %27 : vector<128x96xf32>
    %c0_20 = arith.constant 0 : index
    %c0_21 = arith.constant 0 : index
    %29 = vector.load %arg8[%c0_20, %c0_21] : memref<128x96xf32, #tpu.memory_space<vmem>>, vector<128x96xf32>
    tpu.vector_store %arg8[%c0_20, %c0_21], %28 {strides = array<i32>} : memref<128x96xf32, #tpu.memory_space<vmem>>, vector<128x96xf32>,
    %c144 = arith.constant 144 : index
    %c0_22 = arith.constant 0 : index
    %30 = vector.load %arg3[%c144, %c0_22] : memref<256x96xbf16, #tpu.memory_space<vmem>>, vector<32x96xbf16>
    %c5 = arith.constant 5 : index
    %c0_23 = arith.constant 0 : index
    %31 = vector.load %arg4[%c5, %c0_23] : memref<8x96xf32, #tpu.memory_space<vmem>>, vector<1x96xf32>
    %cst_24 = arith.constant 0.000000e+00 : f32
    %32 = vector.broadcast %cst_24 : f32 to vector<16x32xf32>
    %c0_25 = arith.constant 0 : index
    %c0_26 = arith.constant 0 : index
    %33 = vector.load %arg8[%c0_25, %c0_26] : memref<128x96xf32, #tpu.memory_space<vmem>>, vector<16x96xf32>
    %34 = arith.truncf %32 : vector<16x32xf32> to vector<16x32xbf16>
    %cst_27 = arith.constant dense<0.000000e+00> : vector<16x96xf32>
    %35 = tpu.matmul %34, %30, %cst_27 {dimension_numbers = #tpu.dot_dimension_numbers<[1], [0], [0], [1], [0, 0, 1, 1], [], []>} : vector<16x32xbf16>, vector<32x96xbf16>, vector<16x96xf32> -> vector<16x96xf32>
    %36 = vector.broadcast %31 : vector<1x96xf32> to vector<16x96xf32>
    %37 = arith.addf %35, %36 : vector<16x96xf32>
    %38 = vector.extract_strided_slice %33 {offsets = [0, 0], sizes = [16, 32], strides = [1, 1]} : vector<16x96xf32> to vector<16x32xf32>
    %39 = vector.extract_strided_slice %37 {offsets = [0, 0], sizes = [16, 32], strides = [1, 1]} : vector<16x96xf32> to vector<16x32xf32>
    %40 = arith.addf %38, %39 : vector<16x32xf32>
    %41 = arith.negf %40 : vector<16x32xf32>
    %42 = math.exp %41 : vector<16x32xf32>
    %cst_28 = arith.constant 1.000000e+00 : f32
    %43 = vector.broadcast %cst_28 : f32 to vector<16x32xf32>
    %44 = arith.addf %43, %42 : vector<16x32xf32>
    %45 = arith.divf %43, %44 : vector<16x32xf32>
    %46 = vector.extract_strided_slice %33 {offsets = [0, 32], sizes = [16, 32], strides = [1, 1]} : vector<16x96xf32> to vector<16x32xf32>
    %47 = vector.extract_strided_slice %37 {offsets = [0, 32], sizes = [16, 32], strides = [1, 1]} : vector<16x96xf32> to vector<16x32xf32>
    %48 = arith.addf %46, %47 : vector<16x32xf32>
    %49 = arith.negf %48 : vector<16x32xf32>
    %50 = math.exp %49 : vector<16x32xf32>
    %cst_29 = arith.constant 1.000000e+00 : f32
    %51 = vector.broadcast %cst_29 : f32 to vector<16x32xf32>
    %52 = arith.addf %51, %50 : vector<16x32xf32>
    %53 = arith.divf %51, %52 : vector<16x32xf32>
    %54 = vector.extract_strided_slice %33 {offsets = [0, 64], sizes = [16, 32], strides = [1, 1]} : vector<16x96xf32> to vector<16x32xf32>
    %55 = vector.extract_strided_slice %37 {offsets = [0, 64], sizes = [16, 32], strides = [1, 1]} : vector<16x96xf32> to vector<16x32xf32>
    %56 = arith.mulf %45, %55 : vector<16x32xf32>
    %57 = arith.addf %54, %56 : vector<16x32xf32>
    %58 = math.tanh %57 : vector<16x32xf32>
    %59 = arith.subf %32, %58 : vector<16x32xf32>
    %60 = arith.mulf %53, %59 : vector<16x32xf32>
    %61 = arith.addf %58, %60 : vector<16x32xf32>
    %62 = arith.truncf %61 : vector<16x32xf32> to vector<16x32xbf16>
    %c0_30 = arith.constant 0 : index
    %c0_31 = arith.constant 0 : index
    %63 = vector.load %arg7[%c0_30, %c0_31] : memref<128x32xbf16, #tpu.memory_space<vmem>>, vector<16x32xbf16>
    tpu.vector_store %arg7[%c0_30, %c0_31], %62 {strides = array<i32>} : memref<128x32xbf16, #tpu.memory_space<vmem>>, vector<16x32xbf16>,
    %c16_32 = arith.constant 16 : index
    %c0_33 = arith.constant 0 : index
    %64 = vector.load %arg8[%c16_32, %c0_33] : memref<128x96xf32, #tpu.memory_space<vmem>>, vector<16x96xf32>
    %65 = arith.truncf %61 : vector<16x32xf32> to vector<16x32xbf16>
    %cst_34 = arith.constant dense<0.000000e+00> : vector<16x96xf32>
    %66 = tpu.matmul %65, %30, %cst_34 {dimension_numbers = #tpu.dot_dimension_numbers<[1], [0], [0], [1], [0, 0, 1, 1], [], []>} : vector<16x32xbf16>, vector<32x96xbf16>, vector<16x96xf32> -> vector<16x96xf32>
    %67 = vector.broadcast %31 : vector<1x96xf32> to vector<16x96xf32>
    %68 = arith.addf %66, %67 : vector<16x96xf32>
    %69 = vector.extract_strided_slice %64 {offsets = [0, 0], sizes = [16, 32], strides = [1, 1]} : vector<16x96xf32> to vector<16x32xf32>
    %70 = vector.extract_strided_slice %68 {offsets = [0, 0], sizes = [16, 32], strides = [1, 1]} : vector<16x96xf32> to vector<16x32xf32>
    %71 = arith.addf %69, %70 : vector<16x32xf32>
    %72 = arith.negf %71 : vector<16x32xf32>
    %73 = math.exp %72 : vector<16x32xf32>
    %cst_35 = arith.constant 1.000000e+00 : f32
    %74 = vector.broadcast %cst_35 : f32 to vector<16x32xf32>
    %75 = arith.addf %74, %73 : vector<16x32xf32>
    %76 = arith.divf %74, %75 : vector<16x32xf32>
    %77 = vector.extract_strided_slice %64 {offsets = [0, 32], sizes = [16, 32], strides = [1, 1]} : vector<16x96xf32> to vector<16x32xf32>
    %78 = vector.extract_strided_slice %68 {offsets = [0, 32], sizes = [16, 32], strides = [1, 1]} : vector<16x96xf32> to vector<16x32xf32>
    %79 = arith.addf %77, %78 : vector<16x32xf32>
    %80 = arith.negf %79 : vector<16x32xf32>
    %81 = math.exp %80 : vector<16x32xf32>
    %cst_36 = arith.constant 1.000000e+00 : f32
    %82 = vector.broadcast %cst_36 : f32 to vector<16x32xf32>
    %83 = arith.addf %82, %81 : vector<16x32xf32>
    %84 = arith.divf %82, %83 : vector<16x32xf32>
    %85 = vector.extract_strided_slice %64 {offsets = [0, 64], sizes = [16, 32], strides = [1, 1]} : vector<16x96xf32> to vector<16x32xf32>
    %86 = vector.extract_strided_slice %68 {offsets = [0, 64], sizes = [16, 32], strides = [1, 1]} : vector<16x96xf32> to vector<16x32xf32>
    %87 = arith.mulf %76, %86 : vector<16x32xf32>
    %88 = arith.addf %85, %87 : vector<16x32xf32>
    %89 = math.tanh %88 : vector<16x32xf32>
    %90 = arith.subf %61, %89 : vector<16x32xf32>
    %91 = arith.mulf %84, %90 : vector<16x32xf32>
    %92 = arith.addf %89, %91 : vector<16x32xf32>
    %93 = arith.truncf %92 : vector<16x32xf32> to vector<16x32xbf16>
    %c16_37 = arith.constant 16 : index
    %c0_38 = arith.constant 0 : index
    %94 = vector.load %arg7[%c16_37, %c0_38] : memref<128x32xbf16, #tpu.memory_space<vmem>>, vector<16x32xbf16>
    tpu.vector_store %arg7[%c16_37, %c0_38], %93 {strides = array<i32>} : memref<128x32xbf16, #tpu.memory_space<vmem>>, vector<16x32xbf16>,
    %c32 = arith.constant 32 : index
    %c0_39 = arith.constant 0 : index
    %95 = vector.load %arg8[%c32, %c0_39] : memref<128x96xf32, #tpu.memory_space<vmem>>, vector<16x96xf32>
    %96 = arith.truncf %92 : vector<16x32xf32> to vector<16x32xbf16>
    %cst_40 = arith.constant dense<0.000000e+00> : vector<16x96xf32>
    %97 = tpu.matmul %96, %30, %cst_40 {dimension_numbers = #tpu.dot_dimension_numbers<[1], [0], [0], [1], [0, 0, 1, 1], [], []>} : vector<16x32xbf16>, vector<32x96xbf16>, vector<16x96xf32> -> vector<16x96xf32>
    %98 = vector.broadcast %31 : vector<1x96xf32> to vector<16x96xf32>
    %99 = arith.addf %97, %98 : vector<16x96xf32>
    %100 = vector.extract_strided_slice %95 {offsets = [0, 0], sizes = [16, 32], strides = [1, 1]} : vector<16x96xf32> to vector<16x32xf32>
    %101 = vector.extract_strided_slice %99 {offsets = [0, 0], sizes = [16, 32], strides = [1, 1]} : vector<16x96xf32> to vector<16x32xf32>
    %102 = arith.addf %100, %101 : vector<16x32xf32>
    %103 = arith.negf %102 : vector<16x32xf32>
    %104 = math.exp %103 : vector<16x32xf32>
    %cst_41 = arith.constant 1.000000e+00 : f32
    %105 = vector.broadcast %cst_41 : f32 to vector<16x32xf32>
    %106 = arith.addf %105, %104 : vector<16x32xf32>
    %107 = arith.divf %105, %106 : vector<16x32xf32>
    %108 = vector.extract_strided_slice %95 {offsets = [0, 32], sizes = [16, 32], strides = [1, 1]} : vector<16x96xf32> to vector<16x32xf32>
    %109 = vector.extract_strided_slice %99 {offsets = [0, 32], sizes = [16, 32], strides = [1, 1]} : vector<16x96xf32> to vector<16x32xf32>
    %110 = arith.addf %108, %109 : vector<16x32xf32>
    %111 = arith.negf %110 : vector<16x32xf32>
    %112 = math.exp %111 : vector<16x32xf32>
    %cst_42 = arith.constant 1.000000e+00 : f32
    %113 = vector.broadcast %cst_42 : f32 to vector<16x32xf32>
    %114 = arith.addf %113, %112 : vector<16x32xf32>
    %115 = arith.divf %113, %114 : vector<16x32xf32>
    %116 = vector.extract_strided_slice %95 {offsets = [0, 64], sizes = [16, 32], strides = [1, 1]} : vector<16x96xf32> to vector<16x32xf32>
    %117 = vector.extract_strided_slice %99 {offsets = [0, 64], sizes = [16, 32], strides = [1, 1]} : vector<16x96xf32> to vector<16x32xf32>
    %118 = arith.mulf %107, %117 : vector<16x32xf32>
    %119 = arith.addf %116, %118 : vector<16x32xf32>
    %120 = math.tanh %119 : vector<16x32xf32>
    %121 = arith.subf %92, %120 : vector<16x32xf32>
    %122 = arith.mulf %115, %121 : vector<16x32xf32>
    %123 = arith.addf %120, %122 : vector<16x32xf32>
    %124 = arith.truncf %123 : vector<16x32xf32> to vector<16x32xbf16>
    %c32_43 = arith.constant 32 : index
    %c0_44 = arith.constant 0 : index
    %125 = vector.load %arg7[%c32_43, %c0_44] : memref<128x32xbf16, #tpu.memory_space<vmem>>, vector<16x32xbf16>
    tpu.vector_store %arg7[%c32_43, %c0_44], %124 {strides = array<i32>} : memref<128x32xbf16, #tpu.memory_space<vmem>>, vector<16x32xbf16>,
    %c48 = arith.constant 48 : index
    %c0_45 = arith.constant 0 : index
    %126 = vector.load %arg8[%c48, %c0_45] : memref<128x96xf32, #tpu.memory_space<vmem>>, vector<16x96xf32>
    %127 = arith.truncf %123 : vector<16x32xf32> to vector<16x32xbf16>
    %cst_46 = arith.constant dense<0.000000e+00> : vector<16x96xf32>
    %128 = tpu.matmul %127, %30, %cst_46 {dimension_numbers = #tpu.dot_dimension_numbers<[1], [0], [0], [1], [0, 0, 1, 1], [], []>} : vector<16x32xbf16>, vector<32x96xbf16>, vector<16x96xf32> -> vector<16x96xf32>
    %129 = vector.broadcast %31 : vector<1x96xf32> to vector<16x96xf32>
    %130 = arith.addf %128, %129 : vector<16x96xf32>
    %131 = vector.extract_strided_slice %126 {offsets = [0, 0], sizes = [16, 32], strides = [1, 1]} : vector<16x96xf32> to vector<16x32xf32>
    %132 = vector.extract_strided_slice %130 {offsets = [0, 0], sizes = [16, 32], strides = [1, 1]} : vector<16x96xf32> to vector<16x32xf32>
    %133 = arith.addf %131, %132 : vector<16x32xf32>
    %134 = arith.negf %133 : vector<16x32xf32>
    %135 = math.exp %134 : vector<16x32xf32>
    %cst_47 = arith.constant 1.000000e+00 : f32
    %136 = vector.broadcast %cst_47 : f32 to vector<16x32xf32>
    %137 = arith.addf %136, %135 : vector<16x32xf32>
    %138 = arith.divf %136, %137 : vector<16x32xf32>
    %139 = vector.extract_strided_slice %126 {offsets = [0, 32], sizes = [16, 32], strides = [1, 1]} : vector<16x96xf32> to vector<16x32xf32>
    %140 = vector.extract_strided_slice %130 {offsets = [0, 32], sizes = [16, 32], strides = [1, 1]} : vector<16x96xf32> to vector<16x32xf32>
    %141 = arith.addf %139, %140 : vector<16x32xf32>
    %142 = arith.negf %141 : vector<16x32xf32>
    %143 = math.exp %142 : vector<16x32xf32>
    %cst_48 = arith.constant 1.000000e+00 : f32
    %144 = vector.broadcast %cst_48 : f32 to vector<16x32xf32>
    %145 = arith.addf %144, %143 : vector<16x32xf32>
    %146 = arith.divf %144, %145 : vector<16x32xf32>
    %147 = vector.extract_strided_slice %126 {offsets = [0, 64], sizes = [16, 32], strides = [1, 1]} : vector<16x96xf32> to vector<16x32xf32>
    %148 = vector.extract_strided_slice %130 {offsets = [0, 64], sizes = [16, 32], strides = [1, 1]} : vector<16x96xf32> to vector<16x32xf32>
    %149 = arith.mulf %138, %148 : vector<16x32xf32>
    %150 = arith.addf %147, %149 : vector<16x32xf32>
    %151 = math.tanh %150 : vector<16x32xf32>
    %152 = arith.subf %123, %151 : vector<16x32xf32>
    %153 = arith.mulf %146, %152 : vector<16x32xf32>
    %154 = arith.addf %151, %153 : vector<16x32xf32>
    %155 = arith.truncf %154 : vector<16x32xf32> to vector<16x32xbf16>
    %c48_49 = arith.constant 48 : index
    %c0_50 = arith.constant 0 : index
    %156 = vector.load %arg7[%c48_49, %c0_50] : memref<128x32xbf16, #tpu.memory_space<vmem>>, vector<16x32xbf16>
    tpu.vector_store %arg7[%c48_49, %c0_50], %155 {strides = array<i32>} : memref<128x32xbf16, #tpu.memory_space<vmem>>, vector<16x32xbf16>,
    %c64 = arith.constant 64 : index
    %c0_51 = arith.constant 0 : index
    %157 = vector.load %arg8[%c64, %c0_51] : memref<128x96xf32, #tpu.memory_space<vmem>>, vector<16x96xf32>
    %158 = arith.truncf %154 : vector<16x32xf32> to vector<16x32xbf16>
    %cst_52 = arith.constant dense<0.000000e+00> : vector<16x96xf32>
    %159 = tpu.matmul %158, %30, %cst_52 {dimension_numbers = #tpu.dot_dimension_numbers<[1], [0], [0], [1], [0, 0, 1, 1], [], []>} : vector<16x32xbf16>, vector<32x96xbf16>, vector<16x96xf32> -> vector<16x96xf32>
    %160 = vector.broadcast %31 : vector<1x96xf32> to vector<16x96xf32>
    %161 = arith.addf %159, %160 : vector<16x96xf32>
    %162 = vector.extract_strided_slice %157 {offsets = [0, 0], sizes = [16, 32], strides = [1, 1]} : vector<16x96xf32> to vector<16x32xf32>
    %163 = vector.extract_strided_slice %161 {offsets = [0, 0], sizes = [16, 32], strides = [1, 1]} : vector<16x96xf32> to vector<16x32xf32>
    %164 = arith.addf %162, %163 : vector<16x32xf32>
    %165 = arith.negf %164 : vector<16x32xf32>
    %166 = math.exp %165 : vector<16x32xf32>
    %cst_53 = arith.constant 1.000000e+00 : f32
    %167 = vector.broadcast %cst_53 : f32 to vector<16x32xf32>
    %168 = arith.addf %167, %166 : vector<16x32xf32>
    %169 = arith.divf %167, %168 : vector<16x32xf32>
    %170 = vector.extract_strided_slice %157 {offsets = [0, 32], sizes = [16, 32], strides = [1, 1]} : vector<16x96xf32> to vector<16x32xf32>
    %171 = vector.extract_strided_slice %161 {offsets = [0, 32], sizes = [16, 32], strides = [1, 1]} : vector<16x96xf32> to vector<16x32xf32>
    %172 = arith.addf %170, %171 : vector<16x32xf32>
    %173 = arith.negf %172 : vector<16x32xf32>
    %174 = math.exp %173 : vector<16x32xf32>
    %cst_54 = arith.constant 1.000000e+00 : f32
    %175 = vector.broadcast %cst_54 : f32 to vector<16x32xf32>
    %176 = arith.addf %175, %174 : vector<16x32xf32>
    %177 = arith.divf %175, %176 : vector<16x32xf32>
    %178 = vector.extract_strided_slice %157 {offsets = [0, 64], sizes = [16, 32], strides = [1, 1]} : vector<16x96xf32> to vector<16x32xf32>
    %179 = vector.extract_strided_slice %161 {offsets = [0, 64], sizes = [16, 32], strides = [1, 1]} : vector<16x96xf32> to vector<16x32xf32>
    %180 = arith.mulf %169, %179 : vector<16x32xf32>
    %181 = arith.addf %178, %180 : vector<16x32xf32>
    %182 = math.tanh %181 : vector<16x32xf32>
    %183 = arith.subf %154, %182 : vector<16x32xf32>
    %184 = arith.mulf %177, %183 : vector<16x32xf32>
    %185 = arith.addf %182, %184 : vector<16x32xf32>
    %186 = arith.truncf %185 : vector<16x32xf32> to vector<16x32xbf16>
    %c64_55 = arith.constant 64 : index
    %c0_56 = arith.constant 0 : index
    %187 = vector.load %arg7[%c64_55, %c0_56] : memref<128x32xbf16, #tpu.memory_space<vmem>>, vector<16x32xbf16>
    tpu.vector_store %arg7[%c64_55, %c0_56], %186 {strides = array<i32>} : memref<128x32xbf16, #tpu.memory_space<vmem>>, vector<16x32xbf16>,
    %c80 = arith.constant 80 : index
    %c0_57 = arith.constant 0 : index
    %188 = vector.load %arg8[%c80, %c0_57] : memref<128x96xf32, #tpu.memory_space<vmem>>, vector<16x96xf32>
    %189 = arith.truncf %185 : vector<16x32xf32> to vector<16x32xbf16>
    %cst_58 = arith.constant dense<0.000000e+00> : vector<16x96xf32>
    %190 = tpu.matmul %189, %30, %cst_58 {dimension_numbers = #tpu.dot_dimension_numbers<[1], [0], [0], [1], [0, 0, 1, 1], [], []>} : vector<16x32xbf16>, vector<32x96xbf16>, vector<16x96xf32> -> vector<16x96xf32>
    %191 = vector.broadcast %31 : vector<1x96xf32> to vector<16x96xf32>
    %192 = arith.addf %190, %191 : vector<16x96xf32>
    %193 = vector.extract_strided_slice %188 {offsets = [0, 0], sizes = [16, 32], strides = [1, 1]} : vector<16x96xf32> to vector<16x32xf32>
    %194 = vector.extract_strided_slice %192 {offsets = [0, 0], sizes = [16, 32], strides = [1, 1]} : vector<16x96xf32> to vector<16x32xf32>
    %195 = arith.addf %193, %194 : vector<16x32xf32>
    %196 = arith.negf %195 : vector<16x32xf32>
    %197 = math.exp %196 : vector<16x32xf32>
    %cst_59 = arith.constant 1.000000e+00 : f32
    %198 = vector.broadcast %cst_59 : f32 to vector<16x32xf32>
    %199 = arith.addf %198, %197 : vector<16x32xf32>
    %200 = arith.divf %198, %199 : vector<16x32xf32>
    %201 = vector.extract_strided_slice %188 {offsets = [0, 32], sizes = [16, 32], strides = [1, 1]} : vector<16x96xf32> to vector<16x32xf32>
    %202 = vector.extract_strided_slice %192 {offsets = [0, 32], sizes = [16, 32], strides = [1, 1]} : vector<16x96xf32> to vector<16x32xf32>
    %203 = arith.addf %201, %202 : vector<16x32xf32>
    %204 = arith.negf %203 : vector<16x32xf32>
    %205 = math.exp %204 : vector<16x32xf32>
    %cst_60 = arith.constant 1.000000e+00 : f32
    %206 = vector.broadcast %cst_60 : f32 to vector<16x32xf32>
    %207 = arith.addf %206, %205 : vector<16x32xf32>
    %208 = arith.divf %206, %207 : vector<16x32xf32>
    %209 = vector.extract_strided_slice %188 {offsets = [0, 64], sizes = [16, 32], strides = [1, 1]} : vector<16x96xf32> to vector<16x32xf32>
    %210 = vector.extract_strided_slice %192 {offsets = [0, 64], sizes = [16, 32], strides = [1, 1]} : vector<16x96xf32> to vector<16x32xf32>
    %211 = arith.mulf %200, %210 : vector<16x32xf32>
    %212 = arith.addf %209, %211 : vector<16x32xf32>
    %213 = math.tanh %212 : vector<16x32xf32>
    %214 = arith.subf %185, %213 : vector<16x32xf32>
    %215 = arith.mulf %208, %214 : vector<16x32xf32>
    %216 = arith.addf %213, %215 : vector<16x32xf32>
    %217 = arith.truncf %216 : vector<16x32xf32> to vector<16x32xbf16>
    %c80_61 = arith.constant 80 : index
    %c0_62 = arith.constant 0 : index
    %218 = vector.load %arg7[%c80_61, %c0_62] : memref<128x32xbf16, #tpu.memory_space<vmem>>, vector<16x32xbf16>
    tpu.vector_store %arg7[%c80_61, %c0_62], %217 {strides = array<i32>} : memref<128x32xbf16, #tpu.memory_space<vmem>>, vector<16x32xbf16>,
    %c96 = arith.constant 96 : index
    %c0_63 = arith.constant 0 : index
    %219 = vector.load %arg8[%c96, %c0_63] : memref<128x96xf32, #tpu.memory_space<vmem>>, vector<16x96xf32>
    %220 = arith.truncf %216 : vector<16x32xf32> to vector<16x32xbf16>
    %cst_64 = arith.constant dense<0.000000e+00> : vector<16x96xf32>
    %221 = tpu.matmul %220, %30, %cst_64 {dimension_numbers = #tpu.dot_dimension_numbers<[1], [0], [0], [1], [0, 0, 1, 1], [], []>} : vector<16x32xbf16>, vector<32x96xbf16>, vector<16x96xf32> -> vector<16x96xf32>
    %222 = vector.broadcast %31 : vector<1x96xf32> to vector<16x96xf32>
    %223 = arith.addf %221, %222 : vector<16x96xf32>
    %224 = vector.extract_strided_slice %219 {offsets = [0, 0], sizes = [16, 32], strides = [1, 1]} : vector<16x96xf32> to vector<16x32xf32>
    %225 = vector.extract_strided_slice %223 {offsets = [0, 0], sizes = [16, 32], strides = [1, 1]} : vector<16x96xf32> to vector<16x32xf32>
    %226 = arith.addf %224, %225 : vector<16x32xf32>
    %227 = arith.negf %226 : vector<16x32xf32>
    %228 = math.exp %227 : vector<16x32xf32>
    %cst_65 = arith.constant 1.000000e+00 : f32
    %229 = vector.broadcast %cst_65 : f32 to vector<16x32xf32>
    %230 = arith.addf %229, %228 : vector<16x32xf32>
    %231 = arith.divf %229, %230 : vector<16x32xf32>
    %232 = vector.extract_strided_slice %219 {offsets = [0, 32], sizes = [16, 32], strides = [1, 1]} : vector<16x96xf32> to vector<16x32xf32>
    %233 = vector.extract_strided_slice %223 {offsets = [0, 32], sizes = [16, 32], strides = [1, 1]} : vector<16x96xf32> to vector<16x32xf32>
    %234 = arith.addf %232, %233 : vector<16x32xf32>
    %235 = arith.negf %234 : vector<16x32xf32>
    %236 = math.exp %235 : vector<16x32xf32>
    %cst_66 = arith.constant 1.000000e+00 : f32
    %237 = vector.broadcast %cst_66 : f32 to vector<16x32xf32>
    %238 = arith.addf %237, %236 : vector<16x32xf32>
    %239 = arith.divf %237, %238 : vector<16x32xf32>
    %240 = vector.extract_strided_slice %219 {offsets = [0, 64], sizes = [16, 32], strides = [1, 1]} : vector<16x96xf32> to vector<16x32xf32>
    %241 = vector.extract_strided_slice %223 {offsets = [0, 64], sizes = [16, 32], strides = [1, 1]} : vector<16x96xf32> to vector<16x32xf32>
    %242 = arith.mulf %231, %241 : vector<16x32xf32>
    %243 = arith.addf %240, %242 : vector<16x32xf32>
    %244 = math.tanh %243 : vector<16x32xf32>
    %245 = arith.subf %216, %244 : vector<16x32xf32>
    %246 = arith.mulf %239, %245 : vector<16x32xf32>
    %247 = arith.addf %244, %246 : vector<16x32xf32>
    %248 = arith.truncf %247 : vector<16x32xf32> to vector<16x32xbf16>
    %c96_67 = arith.constant 96 : index
    %c0_68 = arith.constant 0 : index
    %249 = vector.load %arg7[%c96_67, %c0_68] : memref<128x32xbf16, #tpu.memory_space<vmem>>, vector<16x32xbf16>
    tpu.vector_store %arg7[%c96_67, %c0_68], %248 {strides = array<i32>} : memref<128x32xbf16, #tpu.memory_space<vmem>>, vector<16x32xbf16>,
    %c112_69 = arith.constant 112 : index
    %c0_70 = arith.constant 0 : index
    %250 = vector.load %arg8[%c112_69, %c0_70] : memref<128x96xf32, #tpu.memory_space<vmem>>, vector<16x96xf32>
    %251 = arith.truncf %247 : vector<16x32xf32> to vector<16x32xbf16>
    %cst_71 = arith.constant dense<0.000000e+00> : vector<16x96xf32>
    %252 = tpu.matmul %251, %30, %cst_71 {dimension_numbers = #tpu.dot_dimension_numbers<[1], [0], [0], [1], [0, 0, 1, 1], [], []>} : vector<16x32xbf16>, vector<32x96xbf16>, vector<16x96xf32> -> vector<16x96xf32>
    %253 = vector.broadcast %31 : vector<1x96xf32> to vector<16x96xf32>
    %254 = arith.addf %252, %253 : vector<16x96xf32>
    %255 = vector.extract_strided_slice %250 {offsets = [0, 0], sizes = [16, 32], strides = [1, 1]} : vector<16x96xf32> to vector<16x32xf32>
    %256 = vector.extract_strided_slice %254 {offsets = [0, 0], sizes = [16, 32], strides = [1, 1]} : vector<16x96xf32> to vector<16x32xf32>
    %257 = arith.addf %255, %256 : vector<16x32xf32>
    %258 = arith.negf %257 : vector<16x32xf32>
    %259 = math.exp %258 : vector<16x32xf32>
    %cst_72 = arith.constant 1.000000e+00 : f32
    %260 = vector.broadcast %cst_72 : f32 to vector<16x32xf32>
    %261 = arith.addf %260, %259 : vector<16x32xf32>
    %262 = arith.divf %260, %261 : vector<16x32xf32>
    %263 = vector.extract_strided_slice %250 {offsets = [0, 32], sizes = [16, 32], strides = [1, 1]} : vector<16x96xf32> to vector<16x32xf32>
    %264 = vector.extract_strided_slice %254 {offsets = [0, 32], sizes = [16, 32], strides = [1, 1]} : vector<16x96xf32> to vector<16x32xf32>
    %265 = arith.addf %263, %264 : vector<16x32xf32>
    %266 = arith.negf %265 : vector<16x32xf32>
    %267 = math.exp %266 : vector<16x32xf32>
    %cst_73 = arith.constant 1.000000e+00 : f32
    %268 = vector.broadcast %cst_73 : f32 to vector<16x32xf32>
    %269 = arith.addf %268, %267 : vector<16x32xf32>
    %270 = arith.divf %268, %269 : vector<16x32xf32>
    %271 = vector.extract_strided_slice %250 {offsets = [0, 64], sizes = [16, 32], strides = [1, 1]} : vector<16x96xf32> to vector<16x32xf32>
    %272 = vector.extract_strided_slice %254 {offsets = [0, 64], sizes = [16, 32], strides = [1, 1]} : vector<16x96xf32> to vector<16x32xf32>
    %273 = arith.mulf %262, %272 : vector<16x32xf32>
    %274 = arith.addf %271, %273 : vector<16x32xf32>
    %275 = math.tanh %274 : vector<16x32xf32>
    %276 = arith.subf %247, %275 : vector<16x32xf32>
    %277 = arith.mulf %270, %276 : vector<16x32xf32>
    %278 = arith.addf %275, %277 : vector<16x32xf32>
    %279 = arith.truncf %278 : vector<16x32xf32> to vector<16x32xbf16>
    %c112_74 = arith.constant 112 : index
    %c0_75 = arith.constant 0 : index
    %280 = vector.load %arg7[%c112_74, %c0_75] : memref<128x32xbf16, #tpu.memory_space<vmem>>, vector<16x32xbf16>
    tpu.vector_store %arg7[%c112_74, %c0_75], %279 {strides = array<i32>} : memref<128x32xbf16, #tpu.memory_space<vmem>>, vector<16x32xbf16>,
    %c0_76 = arith.constant 0 : index
    %c0_77 = arith.constant 0 : index
    %281 = vector.load %arg7[%c0_76, %c0_77] : memref<128x32xbf16, #tpu.memory_space<vmem>>, vector<128x32xbf16>
    %c48_78 = arith.constant 48 : index
    %c0_79 = arith.constant 0 : index
    %282 = vector.load %arg3[%c48_78, %c0_79] : memref<256x96xbf16, #tpu.memory_space<vmem>>, vector<32x32xbf16>
    %c2 = arith.constant 2 : index
    %c0_80 = arith.constant 0 : index
    %283 = vector.load %arg4[%c2, %c0_80] : memref<8x96xf32, #tpu.memory_space<vmem>>, vector<1x32xf32>
    %c80_81 = arith.constant 80 : index
    %c0_82 = arith.constant 0 : index
    %284 = vector.load %arg3[%c80_81, %c0_82] : memref<256x96xbf16, #tpu.memory_space<vmem>>, vector<32x32xbf16>
    %c3 = arith.constant 3 : index
    %c0_83 = arith.constant 0 : index
    %285 = vector.load %arg4[%c3, %c0_83] : memref<8x96xf32, #tpu.memory_space<vmem>>, vector<1x32xf32>
    %c0_84 = arith.constant 0 : index
    %c0_85 = arith.constant 0 : index
    %286 = vector.load %arg1[%c0_84, %c0_85] : memref<128x128xbf16, #tpu.memory_space<vmem>>, vector<128x128xbf16>
    %cst_86 = arith.constant dense<0.000000e+00> : vector<128x32xf32>
    %287 = tpu.matmul %286, %281, %cst_86 {dimension_numbers = #tpu.dot_dimension_numbers<[1], [0], [0], [1], [0, 0, 1, 1], [], []>} : vector<128x128xbf16>, vector<128x32xbf16>, vector<128x32xf32> -> vector<128x32xf32>
    %288 = arith.extf %281 : vector<128x32xbf16> to vector<128x32xf32>
    %289 = arith.addf %288, %287 : vector<128x32xf32>
    %290 = arith.truncf %289 : vector<128x32xf32> to vector<128x32xbf16>
    %cst_87 = arith.constant dense<0.000000e+00> : vector<128x32xf32>
    %291 = tpu.matmul %290, %282, %cst_87 {dimension_numbers = #tpu.dot_dimension_numbers<[1], [0], [0], [1], [0, 0, 1, 1], [], []>} : vector<128x32xbf16>, vector<32x32xbf16>, vector<128x32xf32> -> vector<128x32xf32>
    %292 = vector.broadcast %283 : vector<1x32xf32> to vector<128x32xf32>
    %293 = arith.addf %291, %292 : vector<128x32xf32>
    %cst_88 = arith.constant 0.000000e+00 : f32
    %294 = vector.broadcast %cst_88 : f32 to vector<128x32xf32>
    %295 = arith.maximumf %293, %294 : vector<128x32xf32>
    %296 = arith.truncf %295 : vector<128x32xf32> to vector<128x32xbf16>
    %cst_89 = arith.constant dense<0.000000e+00> : vector<128x32xf32>
    %297 = tpu.matmul %296, %284, %cst_89 {dimension_numbers = #tpu.dot_dimension_numbers<[1], [0], [0], [1], [0, 0, 1, 1], [], []>} : vector<128x32xbf16>, vector<32x32xbf16>, vector<128x32xf32> -> vector<128x32xf32>
    %298 = vector.broadcast %285 : vector<1x32xf32> to vector<128x32xf32>
    %299 = arith.addf %297, %298 : vector<128x32xf32>
    %cst_90 = arith.constant 0.000000e+00 : f32
    %300 = vector.broadcast %cst_90 : f32 to vector<128x32xf32>
    %301 = arith.maximumf %299, %300 : vector<128x32xf32>
    %302 = arith.truncf %301 : vector<128x32xf32> to vector<128x32xbf16>
    %c0_91 = arith.constant 0 : index
    %c0_92 = arith.constant 0 : index
    %303 = vector.load %arg7[%c0_91, %c0_92] : memref<128x32xbf16, #tpu.memory_space<vmem>>, vector<128x32xbf16>
    tpu.vector_store %arg7[%c0_91, %c0_92], %302 {strides = array<i32>} : memref<128x32xbf16, #tpu.memory_space<vmem>>, vector<128x32xbf16>,
    %c0_93 = arith.constant 0 : index
    %c0_94 = arith.constant 0 : index
    %304 = vector.load %arg7[%c0_93, %c0_94] : memref<128x32xbf16, #tpu.memory_space<vmem>>, vector<128x32xbf16>
    %c112_95 = arith.constant 112 : index
    %c0_96 = arith.constant 0 : index
    %305 = vector.load %arg3[%c112_95, %c0_96] : memref<256x96xbf16, #tpu.memory_space<vmem>>, vector<32x96xbf16>
    %cst_97 = arith.constant dense<0.000000e+00> : vector<128x96xf32>
    %306 = tpu.matmul %304, %305, %cst_97 {dimension_numbers = #tpu.dot_dimension_numbers<[1], [0], [0], [1], [0, 0, 1, 1], [], []>} : vector<128x32xbf16>, vector<32x96xbf16>, vector<128x96xf32> -> vector<128x96xf32>
    %c4_98 = arith.constant 4 : index
    %c0_99 = arith.constant 0 : index
    %307 = vector.load %arg4[%c4_98, %c0_99] : memref<8x96xf32, #tpu.memory_space<vmem>>, vector<1x96xf32>
    %308 = vector.broadcast %307 : vector<1x96xf32> to vector<128x96xf32>
    %309 = arith.addf %306, %308 : vector<128x96xf32>
    %c0_100 = arith.constant 0 : index
    %c0_101 = arith.constant 0 : index
    %310 = vector.load %arg8[%c0_100, %c0_101] : memref<128x96xf32, #tpu.memory_space<vmem>>, vector<128x96xf32>
    tpu.vector_store %arg8[%c0_100, %c0_101], %309 {strides = array<i32>} : memref<128x96xf32, #tpu.memory_space<vmem>>, vector<128x96xf32>,
    %c144_102 = arith.constant 144 : index
    %c0_103 = arith.constant 0 : index
    %311 = vector.load %arg3[%c144_102, %c0_103] : memref<256x96xbf16, #tpu.memory_space<vmem>>, vector<32x96xbf16>
    %c5_104 = arith.constant 5 : index
    %c0_105 = arith.constant 0 : index
    %312 = vector.load %arg4[%c5_104, %c0_105] : memref<8x96xf32, #tpu.memory_space<vmem>>, vector<1x96xf32>
    %cst_106 = arith.constant 0.000000e+00 : f32
    %313 = vector.broadcast %cst_106 : f32 to vector<16x32xf32>
    %c0_107 = arith.constant 0 : index
    %c0_108 = arith.constant 0 : index
    %314 = vector.load %arg8[%c0_107, %c0_108] : memref<128x96xf32, #tpu.memory_space<vmem>>, vector<16x96xf32>
    %315 = arith.truncf %313 : vector<16x32xf32> to vector<16x32xbf16>
    %cst_109 = arith.constant dense<0.000000e+00> : vector<16x96xf32>
    %316 = tpu.matmul %315, %311, %cst_109 {dimension_numbers = #tpu.dot_dimension_numbers<[1], [0], [0], [1], [0, 0, 1, 1], [], []>} : vector<16x32xbf16>, vector<32x96xbf16>, vector<16x96xf32> -> vector<16x96xf32>
    %317 = vector.broadcast %312 : vector<1x96xf32> to vector<16x96xf32>
    %318 = arith.addf %316, %317 : vector<16x96xf32>
    %319 = vector.extract_strided_slice %314 {offsets = [0, 0], sizes = [16, 32], strides = [1, 1]} : vector<16x96xf32> to vector<16x32xf32>
    %320 = vector.extract_strided_slice %318 {offsets = [0, 0], sizes = [16, 32], strides = [1, 1]} : vector<16x96xf32> to vector<16x32xf32>
    %321 = arith.addf %319, %320 : vector<16x32xf32>
    %322 = arith.negf %321 : vector<16x32xf32>
    %323 = math.exp %322 : vector<16x32xf32>
    %cst_110 = arith.constant 1.000000e+00 : f32
    %324 = vector.broadcast %cst_110 : f32 to vector<16x32xf32>
    %325 = arith.addf %324, %323 : vector<16x32xf32>
    %326 = arith.divf %324, %325 : vector<16x32xf32>
    %327 = vector.extract_strided_slice %314 {offsets = [0, 32], sizes = [16, 32], strides = [1, 1]} : vector<16x96xf32> to vector<16x32xf32>
    %328 = vector.extract_strided_slice %318 {offsets = [0, 32], sizes = [16, 32], strides = [1, 1]} : vector<16x96xf32> to vector<16x32xf32>
    %329 = arith.addf %327, %328 : vector<16x32xf32>
    %330 = arith.negf %329 : vector<16x32xf32>
    %331 = math.exp %330 : vector<16x32xf32>
    %cst_111 = arith.constant 1.000000e+00 : f32
    %332 = vector.broadcast %cst_111 : f32 to vector<16x32xf32>
    %333 = arith.addf %332, %331 : vector<16x32xf32>
    %334 = arith.divf %332, %333 : vector<16x32xf32>
    %335 = vector.extract_strided_slice %314 {offsets = [0, 64], sizes = [16, 32], strides = [1, 1]} : vector<16x96xf32> to vector<16x32xf32>
    %336 = vector.extract_strided_slice %318 {offsets = [0, 64], sizes = [16, 32], strides = [1, 1]} : vector<16x96xf32> to vector<16x32xf32>
    %337 = arith.mulf %326, %336 : vector<16x32xf32>
    %338 = arith.addf %335, %337 : vector<16x32xf32>
    %339 = math.tanh %338 : vector<16x32xf32>
    %340 = arith.subf %313, %339 : vector<16x32xf32>
    %341 = arith.mulf %334, %340 : vector<16x32xf32>
    %342 = arith.addf %339, %341 : vector<16x32xf32>
    %c16_112 = arith.constant 16 : index
    %c0_113 = arith.constant 0 : index
    %343 = vector.load %arg8[%c16_112, %c0_113] : memref<128x96xf32, #tpu.memory_space<vmem>>, vector<16x96xf32>
    %344 = arith.truncf %342 : vector<16x32xf32> to vector<16x32xbf16>
    %cst_114 = arith.constant dense<0.000000e+00> : vector<16x96xf32>
    %345 = tpu.matmul %344, %311, %cst_114 {dimension_numbers = #tpu.dot_dimension_numbers<[1], [0], [0], [1], [0, 0, 1, 1], [], []>} : vector<16x32xbf16>, vector<32x96xbf16>, vector<16x96xf32> -> vector<16x96xf32>
    %346 = vector.broadcast %312 : vector<1x96xf32> to vector<16x96xf32>
    %347 = arith.addf %345, %346 : vector<16x96xf32>
    %348 = vector.extract_strided_slice %343 {offsets = [0, 0], sizes = [16, 32], strides = [1, 1]} : vector<16x96xf32> to vector<16x32xf32>
    %349 = vector.extract_strided_slice %347 {offsets = [0, 0], sizes = [16, 32], strides = [1, 1]} : vector<16x96xf32> to vector<16x32xf32>
    %350 = arith.addf %348, %349 : vector<16x32xf32>
    %351 = arith.negf %350 : vector<16x32xf32>
    %352 = math.exp %351 : vector<16x32xf32>
    %cst_115 = arith.constant 1.000000e+00 : f32
    %353 = vector.broadcast %cst_115 : f32 to vector<16x32xf32>
    %354 = arith.addf %353, %352 : vector<16x32xf32>
    %355 = arith.divf %353, %354 : vector<16x32xf32>
    %356 = vector.extract_strided_slice %343 {offsets = [0, 32], sizes = [16, 32], strides = [1, 1]} : vector<16x96xf32> to vector<16x32xf32>
    %357 = vector.extract_strided_slice %347 {offsets = [0, 32], sizes = [16, 32], strides = [1, 1]} : vector<16x96xf32> to vector<16x32xf32>
    %358 = arith.addf %356, %357 : vector<16x32xf32>
    %359 = arith.negf %358 : vector<16x32xf32>
    %360 = math.exp %359 : vector<16x32xf32>
    %cst_116 = arith.constant 1.000000e+00 : f32
    %361 = vector.broadcast %cst_116 : f32 to vector<16x32xf32>
    %362 = arith.addf %361, %360 : vector<16x32xf32>
    %363 = arith.divf %361, %362 : vector<16x32xf32>
    %364 = vector.extract_strided_slice %343 {offsets = [0, 64], sizes = [16, 32], strides = [1, 1]} : vector<16x96xf32> to vector<16x32xf32>
    %365 = vector.extract_strided_slice %347 {offsets = [0, 64], sizes = [16, 32], strides = [1, 1]} : vector<16x96xf32> to vector<16x32xf32>
    %366 = arith.mulf %355, %365 : vector<16x32xf32>
    %367 = arith.addf %364, %366 : vector<16x32xf32>
    %368 = math.tanh %367 : vector<16x32xf32>
    %369 = arith.subf %342, %368 : vector<16x32xf32>
    %370 = arith.mulf %363, %369 : vector<16x32xf32>
    %371 = arith.addf %368, %370 : vector<16x32xf32>
    %c32_117 = arith.constant 32 : index
    %c0_118 = arith.constant 0 : index
    %372 = vector.load %arg8[%c32_117, %c0_118] : memref<128x96xf32, #tpu.memory_space<vmem>>, vector<16x96xf32>
    %373 = arith.truncf %371 : vector<16x32xf32> to vector<16x32xbf16>
    %cst_119 = arith.constant dense<0.000000e+00> : vector<16x96xf32>
    %374 = tpu.matmul %373, %311, %cst_119 {dimension_numbers = #tpu.dot_dimension_numbers<[1], [0], [0], [1], [0, 0, 1, 1], [], []>} : vector<16x32xbf16>, vector<32x96xbf16>, vector<16x96xf32> -> vector<16x96xf32>
    %375 = vector.broadcast %312 : vector<1x96xf32> to vector<16x96xf32>
    %376 = arith.addf %374, %375 : vector<16x96xf32>
    %377 = vector.extract_strided_slice %372 {offsets = [0, 0], sizes = [16, 32], strides = [1, 1]} : vector<16x96xf32> to vector<16x32xf32>
    %378 = vector.extract_strided_slice %376 {offsets = [0, 0], sizes = [16, 32], strides = [1, 1]} : vector<16x96xf32> to vector<16x32xf32>
    %379 = arith.addf %377, %378 : vector<16x32xf32>
    %380 = arith.negf %379 : vector<16x32xf32>
    %381 = math.exp %380 : vector<16x32xf32>
    %cst_120 = arith.constant 1.000000e+00 : f32
    %382 = vector.broadcast %cst_120 : f32 to vector<16x32xf32>
    %383 = arith.addf %382, %381 : vector<16x32xf32>
    %384 = arith.divf %382, %383 : vector<16x32xf32>
    %385 = vector.extract_strided_slice %372 {offsets = [0, 32], sizes = [16, 32], strides = [1, 1]} : vector<16x96xf32> to vector<16x32xf32>
    %386 = vector.extract_strided_slice %376 {offsets = [0, 32], sizes = [16, 32], strides = [1, 1]} : vector<16x96xf32> to vector<16x32xf32>
    %387 = arith.addf %385, %386 : vector<16x32xf32>
    %388 = arith.negf %387 : vector<16x32xf32>
    %389 = math.exp %388 : vector<16x32xf32>
    %cst_121 = arith.constant 1.000000e+00 : f32
    %390 = vector.broadcast %cst_121 : f32 to vector<16x32xf32>
    %391 = arith.addf %390, %389 : vector<16x32xf32>
    %392 = arith.divf %390, %391 : vector<16x32xf32>
    %393 = vector.extract_strided_slice %372 {offsets = [0, 64], sizes = [16, 32], strides = [1, 1]} : vector<16x96xf32> to vector<16x32xf32>
    %394 = vector.extract_strided_slice %376 {offsets = [0, 64], sizes = [16, 32], strides = [1, 1]} : vector<16x96xf32> to vector<16x32xf32>
    %395 = arith.mulf %384, %394 : vector<16x32xf32>
    %396 = arith.addf %393, %395 : vector<16x32xf32>
    %397 = math.tanh %396 : vector<16x32xf32>
    %398 = arith.subf %371, %397 : vector<16x32xf32>
    %399 = arith.mulf %392, %398 : vector<16x32xf32>
    %400 = arith.addf %397, %399 : vector<16x32xf32>
    %c48_122 = arith.constant 48 : index
    %c0_123 = arith.constant 0 : index
    %401 = vector.load %arg8[%c48_122, %c0_123] : memref<128x96xf32, #tpu.memory_space<vmem>>, vector<16x96xf32>
    %402 = arith.truncf %400 : vector<16x32xf32> to vector<16x32xbf16>
    %cst_124 = arith.constant dense<0.000000e+00> : vector<16x96xf32>
    %403 = tpu.matmul %402, %311, %cst_124 {dimension_numbers = #tpu.dot_dimension_numbers<[1], [0], [0], [1], [0, 0, 1, 1], [], []>} : vector<16x32xbf16>, vector<32x96xbf16>, vector<16x96xf32> -> vector<16x96xf32>
    %404 = vector.broadcast %312 : vector<1x96xf32> to vector<16x96xf32>
    %405 = arith.addf %403, %404 : vector<16x96xf32>
    %406 = vector.extract_strided_slice %401 {offsets = [0, 0], sizes = [16, 32], strides = [1, 1]} : vector<16x96xf32> to vector<16x32xf32>
    %407 = vector.extract_strided_slice %405 {offsets = [0, 0], sizes = [16, 32], strides = [1, 1]} : vector<16x96xf32> to vector<16x32xf32>
    %408 = arith.addf %406, %407 : vector<16x32xf32>
    %409 = arith.negf %408 : vector<16x32xf32>
    %410 = math.exp %409 : vector<16x32xf32>
    %cst_125 = arith.constant 1.000000e+00 : f32
    %411 = vector.broadcast %cst_125 : f32 to vector<16x32xf32>
    %412 = arith.addf %411, %410 : vector<16x32xf32>
    %413 = arith.divf %411, %412 : vector<16x32xf32>
    %414 = vector.extract_strided_slice %401 {offsets = [0, 32], sizes = [16, 32], strides = [1, 1]} : vector<16x96xf32> to vector<16x32xf32>
    %415 = vector.extract_strided_slice %405 {offsets = [0, 32], sizes = [16, 32], strides = [1, 1]} : vector<16x96xf32> to vector<16x32xf32>
    %416 = arith.addf %414, %415 : vector<16x32xf32>
    %417 = arith.negf %416 : vector<16x32xf32>
    %418 = math.exp %417 : vector<16x32xf32>
    %cst_126 = arith.constant 1.000000e+00 : f32
    %419 = vector.broadcast %cst_126 : f32 to vector<16x32xf32>
    %420 = arith.addf %419, %418 : vector<16x32xf32>
    %421 = arith.divf %419, %420 : vector<16x32xf32>
    %422 = vector.extract_strided_slice %401 {offsets = [0, 64], sizes = [16, 32], strides = [1, 1]} : vector<16x96xf32> to vector<16x32xf32>
    %423 = vector.extract_strided_slice %405 {offsets = [0, 64], sizes = [16, 32], strides = [1, 1]} : vector<16x96xf32> to vector<16x32xf32>
    %424 = arith.mulf %413, %423 : vector<16x32xf32>
    %425 = arith.addf %422, %424 : vector<16x32xf32>
    %426 = math.tanh %425 : vector<16x32xf32>
    %427 = arith.subf %400, %426 : vector<16x32xf32>
    %428 = arith.mulf %421, %427 : vector<16x32xf32>
    %429 = arith.addf %426, %428 : vector<16x32xf32>
    %c64_127 = arith.constant 64 : index
    %c0_128 = arith.constant 0 : index
    %430 = vector.load %arg8[%c64_127, %c0_128] : memref<128x96xf32, #tpu.memory_space<vmem>>, vector<16x96xf32>
    %431 = arith.truncf %429 : vector<16x32xf32> to vector<16x32xbf16>
    %cst_129 = arith.constant dense<0.000000e+00> : vector<16x96xf32>
    %432 = tpu.matmul %431, %311, %cst_129 {dimension_numbers = #tpu.dot_dimension_numbers<[1], [0], [0], [1], [0, 0, 1, 1], [], []>} : vector<16x32xbf16>, vector<32x96xbf16>, vector<16x96xf32> -> vector<16x96xf32>
    %433 = vector.broadcast %312 : vector<1x96xf32> to vector<16x96xf32>
    %434 = arith.addf %432, %433 : vector<16x96xf32>
    %435 = vector.extract_strided_slice %430 {offsets = [0, 0], sizes = [16, 32], strides = [1, 1]} : vector<16x96xf32> to vector<16x32xf32>
    %436 = vector.extract_strided_slice %434 {offsets = [0, 0], sizes = [16, 32], strides = [1, 1]} : vector<16x96xf32> to vector<16x32xf32>
    %437 = arith.addf %435, %436 : vector<16x32xf32>
    %438 = arith.negf %437 : vector<16x32xf32>
    %439 = math.exp %438 : vector<16x32xf32>
    %cst_130 = arith.constant 1.000000e+00 : f32
    %440 = vector.broadcast %cst_130 : f32 to vector<16x32xf32>
    %441 = arith.addf %440, %439 : vector<16x32xf32>
    %442 = arith.divf %440, %441 : vector<16x32xf32>
    %443 = vector.extract_strided_slice %430 {offsets = [0, 32], sizes = [16, 32], strides = [1, 1]} : vector<16x96xf32> to vector<16x32xf32>
    %444 = vector.extract_strided_slice %434 {offsets = [0, 32], sizes = [16, 32], strides = [1, 1]} : vector<16x96xf32> to vector<16x32xf32>
    %445 = arith.addf %443, %444 : vector<16x32xf32>
    %446 = arith.negf %445 : vector<16x32xf32>
    %447 = math.exp %446 : vector<16x32xf32>
    %cst_131 = arith.constant 1.000000e+00 : f32
    %448 = vector.broadcast %cst_131 : f32 to vector<16x32xf32>
    %449 = arith.addf %448, %447 : vector<16x32xf32>
    %450 = arith.divf %448, %449 : vector<16x32xf32>
    %451 = vector.extract_strided_slice %430 {offsets = [0, 64], sizes = [16, 32], strides = [1, 1]} : vector<16x96xf32> to vector<16x32xf32>
    %452 = vector.extract_strided_slice %434 {offsets = [0, 64], sizes = [16, 32], strides = [1, 1]} : vector<16x96xf32> to vector<16x32xf32>
    %453 = arith.mulf %442, %452 : vector<16x32xf32>
    %454 = arith.addf %451, %453 : vector<16x32xf32>
    %455 = math.tanh %454 : vector<16x32xf32>
    %456 = arith.subf %429, %455 : vector<16x32xf32>
    %457 = arith.mulf %450, %456 : vector<16x32xf32>
    %458 = arith.addf %455, %457 : vector<16x32xf32>
    %c80_132 = arith.constant 80 : index
    %c0_133 = arith.constant 0 : index
    %459 = vector.load %arg8[%c80_132, %c0_133] : memref<128x96xf32, #tpu.memory_space<vmem>>, vector<16x96xf32>
    %460 = arith.truncf %458 : vector<16x32xf32> to vector<16x32xbf16>
    %cst_134 = arith.constant dense<0.000000e+00> : vector<16x96xf32>
    %461 = tpu.matmul %460, %311, %cst_134 {dimension_numbers = #tpu.dot_dimension_numbers<[1], [0], [0], [1], [0, 0, 1, 1], [], []>} : vector<16x32xbf16>, vector<32x96xbf16>, vector<16x96xf32> -> vector<16x96xf32>
    %462 = vector.broadcast %312 : vector<1x96xf32> to vector<16x96xf32>
    %463 = arith.addf %461, %462 : vector<16x96xf32>
    %464 = vector.extract_strided_slice %459 {offsets = [0, 0], sizes = [16, 32], strides = [1, 1]} : vector<16x96xf32> to vector<16x32xf32>
    %465 = vector.extract_strided_slice %463 {offsets = [0, 0], sizes = [16, 32], strides = [1, 1]} : vector<16x96xf32> to vector<16x32xf32>
    %466 = arith.addf %464, %465 : vector<16x32xf32>
    %467 = arith.negf %466 : vector<16x32xf32>
    %468 = math.exp %467 : vector<16x32xf32>
    %cst_135 = arith.constant 1.000000e+00 : f32
    %469 = vector.broadcast %cst_135 : f32 to vector<16x32xf32>
    %470 = arith.addf %469, %468 : vector<16x32xf32>
    %471 = arith.divf %469, %470 : vector<16x32xf32>
    %472 = vector.extract_strided_slice %459 {offsets = [0, 32], sizes = [16, 32], strides = [1, 1]} : vector<16x96xf32> to vector<16x32xf32>
    %473 = vector.extract_strided_slice %463 {offsets = [0, 32], sizes = [16, 32], strides = [1, 1]} : vector<16x96xf32> to vector<16x32xf32>
    %474 = arith.addf %472, %473 : vector<16x32xf32>
    %475 = arith.negf %474 : vector<16x32xf32>
    %476 = math.exp %475 : vector<16x32xf32>
    %cst_136 = arith.constant 1.000000e+00 : f32
    %477 = vector.broadcast %cst_136 : f32 to vector<16x32xf32>
    %478 = arith.addf %477, %476 : vector<16x32xf32>
    %479 = arith.divf %477, %478 : vector<16x32xf32>
    %480 = vector.extract_strided_slice %459 {offsets = [0, 64], sizes = [16, 32], strides = [1, 1]} : vector<16x96xf32> to vector<16x32xf32>
    %481 = vector.extract_strided_slice %463 {offsets = [0, 64], sizes = [16, 32], strides = [1, 1]} : vector<16x96xf32> to vector<16x32xf32>
    %482 = arith.mulf %471, %481 : vector<16x32xf32>
    %483 = arith.addf %480, %482 : vector<16x32xf32>
    %484 = math.tanh %483 : vector<16x32xf32>
    %485 = arith.subf %458, %484 : vector<16x32xf32>
    %486 = arith.mulf %479, %485 : vector<16x32xf32>
    %487 = arith.addf %484, %486 : vector<16x32xf32>
    %c96_137 = arith.constant 96 : index
    %c0_138 = arith.constant 0 : index
    %488 = vector.load %arg8[%c96_137, %c0_138] : memref<128x96xf32, #tpu.memory_space<vmem>>, vector<16x96xf32>
    %489 = arith.truncf %487 : vector<16x32xf32> to vector<16x32xbf16>
    %cst_139 = arith.constant dense<0.000000e+00> : vector<16x96xf32>
    %490 = tpu.matmul %489, %311, %cst_139 {dimension_numbers = #tpu.dot_dimension_numbers<[1], [0], [0], [1], [0, 0, 1, 1], [], []>} : vector<16x32xbf16>, vector<32x96xbf16>, vector<16x96xf32> -> vector<16x96xf32>
    %491 = vector.broadcast %312 : vector<1x96xf32> to vector<16x96xf32>
    %492 = arith.addf %490, %491 : vector<16x96xf32>
    %493 = vector.extract_strided_slice %488 {offsets = [0, 0], sizes = [16, 32], strides = [1, 1]} : vector<16x96xf32> to vector<16x32xf32>
    %494 = vector.extract_strided_slice %492 {offsets = [0, 0], sizes = [16, 32], strides = [1, 1]} : vector<16x96xf32> to vector<16x32xf32>
    %495 = arith.addf %493, %494 : vector<16x32xf32>
    %496 = arith.negf %495 : vector<16x32xf32>
    %497 = math.exp %496 : vector<16x32xf32>
    %cst_140 = arith.constant 1.000000e+00 : f32
    %498 = vector.broadcast %cst_140 : f32 to vector<16x32xf32>
    %499 = arith.addf %498, %497 : vector<16x32xf32>
    %500 = arith.divf %498, %499 : vector<16x32xf32>
    %501 = vector.extract_strided_slice %488 {offsets = [0, 32], sizes = [16, 32], strides = [1, 1]} : vector<16x96xf32> to vector<16x32xf32>
    %502 = vector.extract_strided_slice %492 {offsets = [0, 32], sizes = [16, 32], strides = [1, 1]} : vector<16x96xf32> to vector<16x32xf32>
    %503 = arith.addf %501, %502 : vector<16x32xf32>
    %504 = arith.negf %503 : vector<16x32xf32>
    %505 = math.exp %504 : vector<16x32xf32>
    %cst_141 = arith.constant 1.000000e+00 : f32
    %506 = vector.broadcast %cst_141 : f32 to vector<16x32xf32>
    %507 = arith.addf %506, %505 : vector<16x32xf32>
    %508 = arith.divf %506, %507 : vector<16x32xf32>
    %509 = vector.extract_strided_slice %488 {offsets = [0, 64], sizes = [16, 32], strides = [1, 1]} : vector<16x96xf32> to vector<16x32xf32>
    %510 = vector.extract_strided_slice %492 {offsets = [0, 64], sizes = [16, 32], strides = [1, 1]} : vector<16x96xf32> to vector<16x32xf32>
    %511 = arith.mulf %500, %510 : vector<16x32xf32>
    %512 = arith.addf %509, %511 : vector<16x32xf32>
    %513 = math.tanh %512 : vector<16x32xf32>
    %514 = arith.subf %487, %513 : vector<16x32xf32>
    %515 = arith.mulf %508, %514 : vector<16x32xf32>
    %516 = arith.addf %513, %515 : vector<16x32xf32>
    %c112_142 = arith.constant 112 : index
    %c0_143 = arith.constant 0 : index
    %517 = vector.load %arg8[%c112_142, %c0_143] : memref<128x96xf32, #tpu.memory_space<vmem>>, vector<16x96xf32>
    %518 = arith.truncf %516 : vector<16x32xf32> to vector<16x32xbf16>
    %cst_144 = arith.constant dense<0.000000e+00> : vector<16x96xf32>
    %519 = tpu.matmul %518, %311, %cst_144 {dimension_numbers = #tpu.dot_dimension_numbers<[1], [0], [0], [1], [0, 0, 1, 1], [], []>} : vector<16x32xbf16>, vector<32x96xbf16>, vector<16x96xf32> -> vector<16x96xf32>
    %520 = vector.broadcast %312 : vector<1x96xf32> to vector<16x96xf32>
    %521 = arith.addf %519, %520 : vector<16x96xf32>
    %522 = vector.extract_strided_slice %517 {offsets = [0, 0], sizes = [16, 32], strides = [1, 1]} : vector<16x96xf32> to vector<16x32xf32>
    %523 = vector.extract_strided_slice %521 {offsets = [0, 0], sizes = [16, 32], strides = [1, 1]} : vector<16x96xf32> to vector<16x32xf32>
    %524 = arith.addf %522, %523 : vector<16x32xf32>
    %525 = arith.negf %524 : vector<16x32xf32>
    %526 = math.exp %525 : vector<16x32xf32>
    %cst_145 = arith.constant 1.000000e+00 : f32
    %527 = vector.broadcast %cst_145 : f32 to vector<16x32xf32>
    %528 = arith.addf %527, %526 : vector<16x32xf32>
    %529 = arith.divf %527, %528 : vector<16x32xf32>
    %530 = vector.extract_strided_slice %517 {offsets = [0, 32], sizes = [16, 32], strides = [1, 1]} : vector<16x96xf32> to vector<16x32xf32>
    %531 = vector.extract_strided_slice %521 {offsets = [0, 32], sizes = [16, 32], strides = [1, 1]} : vector<16x96xf32> to vector<16x32xf32>
    %532 = arith.addf %530, %531 : vector<16x32xf32>
    %533 = arith.negf %532 : vector<16x32xf32>
    %534 = math.exp %533 : vector<16x32xf32>
    %cst_146 = arith.constant 1.000000e+00 : f32
    %535 = vector.broadcast %cst_146 : f32 to vector<16x32xf32>
    %536 = arith.addf %535, %534 : vector<16x32xf32>
    %537 = arith.divf %535, %536 : vector<16x32xf32>
    %538 = vector.extract_strided_slice %517 {offsets = [0, 64], sizes = [16, 32], strides = [1, 1]} : vector<16x96xf32> to vector<16x32xf32>
    %539 = vector.extract_strided_slice %521 {offsets = [0, 64], sizes = [16, 32], strides = [1, 1]} : vector<16x96xf32> to vector<16x32xf32>
    %540 = arith.mulf %529, %539 : vector<16x32xf32>
    %541 = arith.addf %538, %540 : vector<16x32xf32>
    %542 = math.tanh %541 : vector<16x32xf32>
    %543 = arith.subf %516, %542 : vector<16x32xf32>
    %544 = arith.mulf %537, %543 : vector<16x32xf32>
    %545 = arith.addf %542, %544 : vector<16x32xf32>
    %c0_147 = arith.constant 0 : index
    %c0_148 = arith.constant 0 : index
    %546 = vector.load %arg5[%c0_147, %c0_148] : memref<4x26xbf16, #tpu.memory_space<vmem>>, vector<4x16xbf16>
    %c0_149 = arith.constant 0 : index
    %c16_150 = arith.constant 16 : index
    %547 = vector.load %arg5[%c0_149, %c16_150] : memref<4x26xbf16, #tpu.memory_space<vmem>>, vector<4x10xbf16>
    %548 = arith.truncf %545 : vector<16x32xf32> to vector<16x32xbf16>
    %cst_151 = arith.constant dense<0.000000e+00> : vector<4x32xf32>
    %549 = tpu.matmul %546, %548, %cst_151 {dimension_numbers = #tpu.dot_dimension_numbers<[1], [0], [0], [1], [0, 0, 1, 1], [], []>} : vector<4x16xbf16>, vector<16x32xbf16>, vector<4x32xf32> -> vector<4x32xf32>
    %550 = arith.truncf %549 : vector<4x32xf32> to vector<4x32xbf16>
    %c176 = arith.constant 176 : index
    %c0_152 = arith.constant 0 : index
    %551 = vector.load %arg3[%c176, %c0_152] : memref<256x96xbf16, #tpu.memory_space<vmem>>, vector<32x16xbf16>
    %cst_153 = arith.constant dense<0.000000e+00> : vector<4x16xf32>
    %552 = tpu.matmul %550, %551, %cst_153 {dimension_numbers = #tpu.dot_dimension_numbers<[1], [0], [0], [1], [0, 0, 1, 1], [], []>} : vector<4x32xbf16>, vector<32x16xbf16>, vector<4x16xf32> -> vector<4x16xf32>
    %c208 = arith.constant 208 : index
    %c0_154 = arith.constant 0 : index
    %553 = vector.load %arg3[%c208, %c0_154] : memref<256x96xbf16, #tpu.memory_space<vmem>>, vector<10x16xbf16>
    %cst_155 = arith.constant dense<0.000000e+00> : vector<4x16xf32>
    %554 = tpu.matmul %547, %553, %cst_155 {dimension_numbers = #tpu.dot_dimension_numbers<[1], [0], [0], [1], [0, 0, 1, 1], [], []>} : vector<4x10xbf16>, vector<10x16xbf16>, vector<4x16xf32> -> vector<4x16xf32>
    %555 = arith.addf %552, %554 : vector<4x16xf32>
    %c6 = arith.constant 6 : index
    %c0_156 = arith.constant 0 : index
    %556 = vector.load %arg4[%c6, %c0_156] : memref<8x96xf32, #tpu.memory_space<vmem>>, vector<1x16xf32>
    %557 = vector.broadcast %556 : vector<1x16xf32> to vector<4x16xf32>
    %558 = arith.addf %555, %557 : vector<4x16xf32>
    %cst_157 = arith.constant 0.000000e+00 : f32
    %559 = vector.broadcast %cst_157 : f32 to vector<4x16xf32>
    %560 = arith.cmpf ogt, %558, %559 : vector<4x16xf32>
    %cst_158 = arith.constant 1.000000e-01 : f32
    %561 = vector.broadcast %cst_158 : f32 to vector<4x16xf32>
    %562 = arith.mulf %561, %558 : vector<4x16xf32>
    %563 = arith.select %560, %558, %562 : vector<4x16xi1>, vector<4x16xf32>
    %564 = arith.truncf %563 : vector<4x16xf32> to vector<4x16xbf16>
    %c224 = arith.constant 224 : index
    %c0_159 = arith.constant 0 : index
    %565 = vector.load %arg3[%c224, %c0_159] : memref<256x96xbf16, #tpu.memory_space<vmem>>, vector<16x8xbf16>
    %cst_160 = arith.constant dense<0.000000e+00> : vector<4x8xf32>
    %566 = tpu.matmul %564, %565, %cst_160 {dimension_numbers = #tpu.dot_dimension_numbers<[1], [0], [0], [1], [0, 0, 1, 1], [], []>} : vector<4x16xbf16>, vector<16x8xbf16>, vector<4x8xf32> -> vector<4x8xf32>
    %c6_161 = arith.constant 6 : index
    %c16_162 = arith.constant 16 : index
    %567 = vector.load %arg4[%c6_161, %c16_162] : memref<8x96xf32, #tpu.memory_space<vmem>>, vector<1x8xf32>
    %568 = vector.broadcast %567 : vector<1x8xf32> to vector<4x8xf32>
    %569 = arith.addf %566, %568 : vector<4x8xf32>
    %cst_163 = arith.constant 0.000000e+00 : f32
    %570 = vector.broadcast %cst_163 : f32 to vector<4x8xf32>
    %571 = arith.cmpf ogt, %569, %570 : vector<4x8xf32>
    %cst_164 = arith.constant 5.000000e-02 : f32
    %572 = vector.broadcast %cst_164 : f32 to vector<4x8xf32>
    %573 = arith.mulf %572, %569 : vector<4x8xf32>
    %574 = arith.select %571, %569, %573 : vector<4x8xi1>, vector<4x8xf32>
    %c240 = arith.constant 240 : index
    %c0_165 = arith.constant 0 : index
    %575 = vector.load %arg3[%c240, %c0_165] : memref<256x96xbf16, #tpu.memory_space<vmem>>, vector<1x8xbf16>
    %576 = arith.extf %575 : vector<1x8xbf16> to vector<1x8xf32>
    %577 = vector.broadcast %576 : vector<1x8xf32> to vector<4x8xf32>
    %578 = arith.mulf %574, %577 : vector<4x8xf32>
    %cst_166 = arith.constant dense<0.000000e+00> : vector<4xf32>
    %579 = vector.multi_reduction <add>, %578, %cst_166 [1] : vector<4x8xf32> to vector<4xf32>
    %580 = vector.shape_cast %579 : vector<4xf32> to vector<4x1xf32>
    %c6_167 = arith.constant 6 : index
    %c24 = arith.constant 24 : index
    %581 = vector.load %arg4[%c6_167, %c24] : memref<8x96xf32, #tpu.memory_space<vmem>>, vector<1x1xf32>
    %582 = vector.broadcast %581 : vector<1x1xf32> to vector<4x1xf32>
    %583 = arith.addf %580, %582 : vector<4x1xf32>
    %c0_168 = arith.constant 0 : index
    %c0_169 = arith.constant 0 : index
    %584 = vector.load %arg6[%c0_168, %c0_169] : memref<4x1xf32, #tpu.memory_space<vmem>>, vector<4x1xf32>
    tpu.vector_store %arg6[%c0_168, %c0_169], %583 {strides = array<i32>} : memref<4x1xf32, #tpu.memory_space<vmem>>, vector<4x1xf32>,
    return
  }
  func.func @transform_0(%arg0: i32) -> (i32, i32) {
    %c0_i32 = arith.constant 0 : i32
    %c0_i32_0 = arith.constant 0 : i32
    %c0_i32_1 = arith.constant 0 : i32
    return %c0_i32, %c0_i32_0 : i32, i32
  }
  func.func @transform_1(%arg0: i32) -> (i32, i32) {
    %c0_i32 = arith.constant 0 : i32
    %c0_i32_0 = arith.constant 0 : i32
    %c0_i32_1 = arith.constant 0 : i32
    return %c0_i32, %c0_i32_0 : i32, i32
  }
  func.func @transform_2(%arg0: i32) -> (i32, i32) {
    %c0_i32 = arith.constant 0 : i32
    %c0_i32_0 = arith.constant 0 : i32
    %c0_i32_1 = arith.constant 0 : i32
    return %c0_i32, %c0_i32_0 : i32, i32
  }
  func.func @transform_3(%arg0: i32) -> (i32, i32) {
    %c0_i32 = arith.constant 0 : i32
    %c0_i32_0 = arith.constant 0 : i32
    %c0_i32_1 = arith.constant 0 : i32
    return %c0_i32, %c0_i32_0 : i32, i32
  }
  func.func @transform_4(%arg0: i32) -> (i32, i32) {
    %c0_i32 = arith.constant 0 : i32
    %c0_i32_0 = arith.constant 0 : i32
    %c0_i32_1 = arith.constant 0 : i32
    return %c0_i32, %c0_i32_0 : i32, i32
  }
  func.func @transform_5(%arg0: i32) -> (i32, i32) {
    %c0_i32 = arith.constant 0 : i32
    %c0_i32_0 = arith.constant 0 : i32
    %c0_i32_1 = arith.constant 0 : i32
    return %c0_i32, %c0_i32_0 : i32, i32
  }
}

</mosaic_0001>

<llo_original>
// kernel: postal_temporal_gin_gru_forward.1
$region0: #{postal_temporal_gin_gru_forward.1}
  #allocation0 [shape = 'u32[]', space=smem, size = 0x4, offset = 0x4, fixed_abs, tag = 'smem constant byte address 0x4 - core index']
  #allocation1 [shape = 'u32[144,128]{1,0:T(1,128)}', space=vmem, size = 0x12000, scoped, tag = 'internal scratch']
  #allocation2 [shape = 'bf16[128,32]{1,0:T(8,128)(2,1)}', space=vmem, size = 0x8000, scoped, tag = 'scratch operand']
  #allocation3 [shape = 'f32[128,96]{1,0:T(8,128)}', space=vmem, size = 0x10000, scoped, tag = 'scratch operand']
  %s0 = inlined_call_operand.vmem [shape: bf16[128,128], index: 0, kind: input, shape index: {}]
  %s1 = inlined_call_operand.vmem [shape: bf16[128,12], index: 1, kind: input, shape index: {}]
  %s2 = inlined_call_operand.vmem [shape: bf16[256,96], index: 2, kind: input, shape index: {}]
  %s3 = inlined_call_operand.vmem [shape: f32[8,96], index: 3, kind: input, shape index: {}]
  %s4 = inlined_call_operand.vmem [shape: bf16[4,26], index: 4, kind: input, shape index: {}]
  %s5 = inlined_call_operand.vmem [shape: f32[4,1], index: 5, kind: output, shape index: {}]
  %s6 = sld [smem:[#allocation0]]
  $region30: #{postal_temporal_gin_gru_forward.1} parent=0
    _
  %s8 = ssub.s32 1, %s6
  %s9 = scalar_select 0, %s8, %s6
  // Predicated region
  $region2: #{postal_temporal_gin_gru_forward.1} parent=0 // pred_check
    _
  $region3: #{postal_temporal_gin_gru_forward.1} parent=0 // pred_check_branch
    %11 = sbr.rel (0) target = $region5
  $region4: #{postal_temporal_gin_gru_forward.1} parent=0 // pred_region
    _
  $region5: #{postal_temporal_gin_gru_forward.1} parent=0 // pred_fallthru
    _
  // Predicated region
  $region6: #{postal_temporal_gin_gru_forward.1} parent=0 // pred_check
    _
  $region7: #{postal_temporal_gin_gru_forward.1} parent=0 // pred_check_branch
    %13 = sbr.rel (0) target = $region9
  $region8: #{postal_temporal_gin_gru_forward.1} parent=0 // pred_region
    _
  $region9: #{postal_temporal_gin_gru_forward.1} parent=0 // pred_fallthru
    _
  // Predicated region
  $region10: #{postal_temporal_gin_gru_forward.1} parent=0 // pred_check
    _
  $region11: #{postal_temporal_gin_gru_forward.1} parent=0 // pred_check_branch
    %15 = sbr.rel (0) target = $region13
  $region12: #{postal_temporal_gin_gru_forward.1} parent=0 // pred_region
    _
  $region13: #{postal_temporal_gin_gru_forward.1} parent=0 // pred_fallthru
    _
  // Predicated region
  $region14: #{postal_temporal_gin_gru_forward.1} parent=0 // pred_check
    _
  $region15: #{postal_temporal_gin_gru_forward.1} parent=0 // pred_check_branch
    %17 = sbr.rel (0) target = $region17
  $region16: #{postal_temporal_gin_gru_forward.1} parent=0 // pred_region
    _
  $region17: #{postal_temporal_gin_gru_forward.1} parent=0 // pred_fallthru
    _
  // Predicated region
  $region18: #{postal_temporal_gin_gru_forward.1} parent=0 // pred_check
    _
  $region19: #{postal_temporal_gin_gru_forward.1} parent=0 // pred_check_branch
    %19 = sbr.rel (0) target = $region21
  $region20: #{postal_temporal_gin_gru_forward.1} parent=0 // pred_region
    _
  $region21: #{postal_temporal_gin_gru_forward.1} parent=0 // pred_fallthru
    _
  %v21 = vld [vmem:[%s1] sm:$0xf]
  %v22 = vld [vmem:[%s1 + $0x4] sm:$0xf]
  %v23 = vld [vmem:[%s1 + $0x8] sm:$0xf]
  %v24 = vld [vmem:[%s1 + $0xc] sm:$0xf]
  %v25 = vld [vmem:[%s1 + $0x10] sm:$0xf]
  %v26 = vld [vmem:[%s1 + $0x14] sm:$0xf]
  %v27 = vld [vmem:[%s1 + $0x18] sm:$0xf]
  %v28 = vld [vmem:[%s1 + $0x1c] sm:$0xf]
  %v29 = vld [vmem:[%s1 + $0x20] sm:$0xf]
  %v30 = vld [vmem:[%s1 + $0x24] sm:$0xf]
  %v31 = vld [vmem:[%s1 + $0x28] sm:$0xf]
  %v32 = vld [vmem:[%s1 + $0x2c] sm:$0xf]
  %v33 = vld [vmem:[%s1 + $0x30] sm:$0xf]
  %v34 = vld [vmem:[%s1 + $0x34] sm:$0xf]
  %v35 = vld [vmem:[%s1 + $0x38] sm:$0xf]
  %v36 = vld [vmem:[%s1 + $0x3c] sm:$0xf]
  %v37 = vld [vmem:[%s2] sm:$0xf]
  %v38 = vld [vmem:[%s2 + $0x4] sm:$0x3]
  %v39 = vld [vmem:[%s3] sm:$0x1]
  %v40 = vld [vmem:[%s2 + $0x8] sm:$0xf]
  %v41 = vld [vmem:[%s2 + $0xc] sm:$0xf]
  %v42 = vld [vmem:[%s2 + $0x10] sm:$0xf]
  %v43 = vld [vmem:[%s2 + $0x14] sm:$0xf]
  %v44 = vld [vmem:[%s3 + $0x1] sm:$0x1]
  %v45 = vld [vmem:[%s0] sm:$0xf]
  %v46 = vld [vmem:[%s0 + $0x4] sm:$0xf]
  %v47 = vld [vmem:[%s0 + $0x8] sm:$0xf]
  %v48 = vld [vmem:[%s0 + $0xc] sm:$0xf]
  %v49 = vld [vmem:[%s0 + $0x10] sm:$0xf]
  %v50 = vld [vmem:[%s0 + $0x14] sm:$0xf]
  %v51 = vld [vmem:[%s0 + $0x18] sm:$0xf]
  %v52 = vld [vmem:[%s0 + $0x1c] sm:$0xf]
  %v53 = vld [vmem:[%s0 + $0x20] sm:$0xf]
  %v54 = vld [vmem:[%s0 + $0x24] sm:$0xf]
  %v55 = vld [vmem:[%s0 + $0x28] sm:$0xf]
  %v56 = vld [vmem:[%s0 + $0x2c] sm:$0xf]
  %v57 = vld [vmem:[%s0 + $0x30] sm:$0xf]
  %v58 = vld [vmem:[%s0 + $0x34] sm:$0xf]
  %v59 = vld [vmem:[%s0 + $0x38] sm:$0xf]
  %v60 = vld [vmem:[%s0 + $0x3c] sm:$0xf]
  %v77 = vunpack.c.l.b16 %v45
  %v78 = vunpack.c.l.b16 %v46
  %v79 = vunpack.c.l.b16 %v47
  %v80 = vunpack.c.l.b16 %v48
  %v81 = vunpack.c.l.b16 %v49
  %v82 = vunpack.c.l.b16 %v50
  %v83 = vunpack.c.l.b16 %v51
  %v84 = vunpack.c.l.b16 %v52
  %v85 = vunpack.c.l.b16 %v53
  %v86 = vunpack.c.l.b16 %v54
  %v87 = vunpack.c.l.b16 %v55
  %v88 = vunpack.c.l.b16 %v56
  %v89 = vunpack.c.l.b16 %v57
  %v90 = vunpack.c.l.b16 %v58
  %v91 = vunpack.c.l.b16 %v59
  %v92 = vunpack.c.l.b16 %v60
  %v93 = vpack.c.b16 %v78, %v77
  %v94 = vpack.c.b16 %v80, %v79
  %v95 = vpack.c.b16 %v82, %v81
  %v96 = vpack.c.b16 %v84, %v83
  %v97 = vpack.c.b16 %v86, %v85
  %v98 = vpack.c.b16 %v88, %v87
  %v99 = vpack.c.b16 %v90, %v89
  %v100 = vpack.c.b16 %v92, %v91
  %v125 = vunpack.c.l.b16 %v21
  %v126 = vunpack.c.l.b16 %v22
  %v127 = vunpack.c.l.b16 %v23
  %v128 = vunpack.c.l.b16 %v24
  %v129 = vunpack.c.l.b16 %v25
  %v130 = vunpack.c.l.b16 %v26
  %v131 = vunpack.c.l.b16 %v27
  %v132 = vunpack.c.l.b16 %v28
  %v133 = vunpack.c.l.b16 %v29
  %v134 = vunpack.c.l.b16 %v30
  %v135 = vunpack.c.l.b16 %v31
  %v136 = vunpack.c.l.b16 %v32
  %v137 = vunpack.c.l.b16 %v33
  %v138 = vunpack.c.l.b16 %v34
  %v139 = vunpack.c.l.b16 %v35
  %v140 = vunpack.c.l.b16 %v36
  %v141 = vpack.c.b16 %v126, %v125
  %v142 = vpack.c.b16 %v128, %v127
  %v143 = vpack.c.b16 %v130, %v129
  %v144 = vpack.c.b16 %v132, %v131
  %v145 = vpack.c.b16 %v134, %v133
  %v146 = vpack.c.b16 %v136, %v135
  %v147 = vpack.c.b16 %v138, %v137
  %v148 = vpack.c.b16 %v140, %v139
  %157 = vmatprep.subr.bf16.mxu0 0
  %158 = vmatpush1.bf16.msra.mxu0 %v148
  %159 = vmatprep.subr.bf16.mxu0 0
  %160 = vmatpush1.bf16.msra.mxu0 %v147
  %161 = vmatprep.subr.bf16.mxu0 0
  %162 = vmatpush1.bf16.msra.mxu0 %v146
  %163 = vmatprep.subr.bf16.mxu0 0
  %164 = vmatpush1.bf16.msra.mxu0 %v145
  %165 = vmatprep.subr.bf16.mxu0 0
  %166 = vmatpush1.bf16.msra.mxu0 %v144
  %167 = vmatprep.subr.bf16.mxu0 0
  %168 = vmatpush1.bf16.msra.mxu0 %v143
  %169 = vmatprep.subr.bf16.mxu0 0
  %170 = vmatpush1.bf16.msra.mxu0 %v142
  %171 = vmatprep.subr.bf16.mxu0 0
  %172 = vmatpush1.bf16.msra.mxu0 %v141
  %173 = vmatprep.subr.bf16.mxu0 0
  %174 = vmatpush2.bf16.msra.mxu0 0
  %175 = vmatprep.subr.bf16.mxu0 0
  %176 = vmatpush2.bf16.msra.mxu0 0
  %177 = vmatprep.subr.bf16.mxu0 0
  %178 = vmatpush2.bf16.msra.mxu0 0
  %179 = vmatprep.subr.bf16.mxu0 0
  %180 = vmatpush2.bf16.msra.mxu0 0
  %181 = vmatprep.subr.bf16.mxu0 0
  %182 = vmatpush2.bf16.msra.mxu0 0
  %183 = vmatprep.subr.bf16.mxu0 0
  %184 = vmatpush2.bf16.msra.mxu0 0
  %185 = vmatprep.subr.bf16.mxu0 0
  %186 = vmatpush2.bf16.msra.mxu0 0
  %187 = vmatprep.subr.bf16.mxu0 0
  %188 = vmatpush2.bf16.msra.mxu0 0
  %189 = vmatprep.mubr.bf16.mxu0 0
  %190 = vmatmul.mubr.bf16.gmra.mxu0 %v93
  %v191 = vpop.f32.mrf.mxu0
  %v192 = vadd.f32 0.0, %v191
  %v193 = vpop.f32.mrf.mxu0
  %v194 = vpop.f32.mrf.mxu0
  %v195 = vadd.f32 0.0, %v194
  %v196 = vpop.f32.mrf.mxu0
  %197 = vmatprep.mubr.bf16.mxu0 0
  %198 = vmatmul.mubr.bf16.gmra.mxu0 %v94
  %v199 = vpop.f32.mrf.mxu0
  %v200 = vadd.f32 0.0, %v199
  %v201 = vpop.f32.mrf.mxu0
  %v202 = vpop.f32.mrf.mxu0
  %v203 = vadd.f32 0.0, %v202
  %v204 = vpop.f32.mrf.mxu0
  %205 = vmatprep.mubr.bf16.mxu0 0
  %206 = vmatmul.mubr.bf16.gmra.mxu0 %v95
  %v207 = vpop.f32.mrf.mxu0
  %v208 = vadd.f32 0.0, %v207
  %v209 = vpop.f32.mrf.mxu0
  %v210 = vpop.f32.mrf.mxu0
  %v211 = vadd.f32 0.0, %v210
  %v212 = vpop.f32.mrf.mxu0
  %213 = vmatprep.mubr.bf16.mxu0 0
  %214 = vmatmul.mubr.bf16.gmra.mxu0 %v96
  %v215 = vpop.f32.mrf.mxu0
  %v216 = vadd.f32 0.0, %v215
  %v217 = vpop.f32.mrf.mxu0
  %v218 = vpop.f32.mrf.mxu0
  %v219 = vadd.f32 0.0, %v218
  %v220 = vpop.f32.mrf.mxu0
  %221 = vmatprep.mubr.bf16.mxu0 0
  %222 = vmatmul.mubr.bf16.gmra.mxu0 %v97
  %v223 = vpop.f32.mrf.mxu0
  %v224 = vadd.f32 0.0, %v223
  %v225 = vpop.f32.mrf.mxu0
  %v226 = vpop.f32.mrf.mxu0
  %v227 = vadd.f32 0.0, %v226
  %v228 = vpop.f32.mrf.mxu0
  %229 = vmatprep.mubr.bf16.mxu0 0
  %230 = vmatmul.mubr.bf16.gmra.mxu0 %v98
  %v231 = vpop.f32.mrf.mxu0
  %v232 = vadd.f32 0.0, %v231
  %v233 = vpop.f32.mrf.mxu0
  %v234 = vpop.f32.mrf.mxu0
  %v235 = vadd.f32 0.0, %v234
  %v236 = vpop.f32.mrf.mxu0
  %237 = vmatprep.mubr.bf16.mxu0 0
  %238 = vmatmul.mubr.bf16.gmra.mxu0 %v99
  %v239 = vpop.f32.mrf.mxu0
  %v240 = vadd.f32 0.0, %v239
  %v241 = vpop.f32.mrf.mxu0
  %v242 = vpop.f32.mrf.mxu0
  %v243 = vadd.f32 0.0, %v242
  %v244 = vpop.f32.mrf.mxu0
  %245 = vmatprep.mubr.bf16.mxu0 0
  %246 = vmatmul.mubr.bf16.gmra.mxu0 %v100
  %v247 = vpop.f32.mrf.mxu0
  %v248 = vadd.f32 0.0, %v247
  %v249 = vpop.f32.mrf.mxu0
  %v250 = vpop.f32.mrf.mxu0
  %v251 = vadd.f32 0.0, %v250
  %v252 = vpop.f32.mrf.mxu0
  %253 = vdwg.mxu0
  %v254 = vunpack.c.l.bf16 %v21
  %v255 = vunpack.c.l.bf16 %v22
  %v256 = vunpack.c.l.bf16 %v23
  %v257 = vunpack.c.l.bf16 %v24
  %v258 = vunpack.c.l.bf16 %v25
  %v259 = vunpack.c.l.bf16 %v26
  %v260 = vunpack.c.l.bf16 %v27
  %v261 = vunpack.c.l.bf16 %v28
  %v262 = vunpack.c.l.bf16 %v29
  %v263 = vunpack.c.l.bf16 %v30
  %v264 = vunpack.c.l.bf16 %v31
  %v265 = vunpack.c.l.bf16 %v32
  %v266 = vunpack.c.l.bf16 %v33
  %v267 = vunpack.c.l.bf16 %v34
  %v268 = vunpack.c.l.bf16 %v35
  %v269 = vunpack.c.l.bf16 %v36
  %v270 = vadd.f32 %v254, %v192
  %v271 = vadd.f32 %v255, %v195
  %v272 = vadd.f32 %v256, %v200
  %v273 = vadd.f32 %v257, %v203
  %v274 = vadd.f32 %v258, %v208
  %v275 = vadd.f32 %v259, %v211
  %v276 = vadd.f32 %v260, %v216
  %v277 = vadd.f32 %v261, %v219
  %v278 = vadd.f32 %v262, %v224
  %v279 = vadd.f32 %v263, %v227
  %v280 = vadd.f32 %v264, %v232
  %v281 = vadd.f32 %v265, %v235
  %v282 = vadd.f32 %v266, %v240
  %v283 = vadd.f32 %v267, %v243
  %v284 = vadd.f32 %v268, %v248
  %v285 = vadd.f32 %v269, %v251
  %v286 = vpack.c.bf16 %v271, %v270
  %v287 = vpack.c.bf16 %v273, %v272
  %v288 = vpack.c.bf16 %v275, %v274
  %v289 = vpack.c.bf16 %v277, %v276
  %v290 = vpack.c.bf16 %v279, %v278
  %v291 = vpack.c.bf16 %v281, %v280
  %v292 = vpack.c.bf16 %v283, %v282
  %v293 = vpack.c.bf16 %v285, %v284
  %v294 = vlaneseq
  %v295 = vshrl.u32 %v294, 7
  %v296 = vsub.s32 0, %v295
  %v297 = vrot.slane %v39, %v296
  %v300 = vunpack.c.l.b16 %v37
  %v301 = vunpack.c.l.b16 %v38
  %v302 = vpack.c.b16 %v301, %v300
  %vm303 = vcmask 97280
  %v305 = vsel %vm303, %v286, 0
  %v308 = vsel %vm303, %v287, 0
  %v311 = vsel %vm303, %v288, 0
  %v314 = vsel %vm303, %v289, 0
  %v317 = vsel %vm303, %v290, 0
  %v320 = vsel %vm303, %v291, 0
  %v323 = vsel %vm303, %v292, 0
  %v326 = vsel %vm303, %v293, 0
  %vm328 = vcmask 1045504
  %v330 = vsel %vm328, %v302, 0
  %332 = vmatprep.subr.bf16.mxu0 0
  %333 = vmatpush1.bf16.msra.mxu0 0
  %334 = vmatprep.subr.bf16.mxu0 0
  %335 = vmatpush1.bf16.msra.mxu0 0
  %336 = vmatprep.subr.bf16.mxu0 0
  %337 = vmatpush1.bf16.msra.mxu0 0
  %338 = vmatprep.subr.bf16.mxu0 0
  %339 = vmatpush1.bf16.msra.mxu0 0
  %340 = vmatprep.subr.bf16.mxu0 0
  %341 = vmatpush1.bf16.msra.mxu0 0
  %342 = vmatprep.subr.bf16.mxu0 0
  %343 = vmatpush1.bf16.msra.mxu0 0
  %344 = vmatprep.subr.bf16.mxu0 0
  %345 = vmatpush1.bf16.msra.mxu0 0
  %346 = vmatprep.subr.bf16.mxu0 0
  %347 = vmatpush1.bf16.msra.mxu0 %v330
  %348 = vmatprep.subr.bf16.mxu0 0
  %349 = vmatpush2.bf16.msra.mxu0 0
  %350 = vmatprep.subr.bf16.mxu0 0
  %351 = vmatpush2.bf16.msra.mxu0 0
  %352 = vmatprep.subr.bf16.mxu0 0
  %353 = vmatpush2.bf16.msra.mxu0 0
  %354 = vmatprep.subr.bf16.mxu0 0
  %355 = vmatpush2.bf16.msra.mxu0 0
  %356 = vmatprep.subr.bf16.mxu0 0
  %357 = vmatpush2.bf16.msra.mxu0 0
  %358 = vmatprep.subr.bf16.mxu0 0
  %359 = vmatpush2.bf16.msra.mxu0 0
  %360 = vmatprep.subr.bf16.mxu0 0
  %361 = vmatpush2.bf16.msra.mxu0 0
  %362 = vmatprep.subr.bf16.mxu0 0
  %363 = vmatpush2.bf16.msra.mxu0 0
  %364 = vmatprep.mubr.bf16.mxu0 0
  %365 = vmatmul.mubr.bf16.gmra.mxu0 %v305
  %v366 = vpop.f32.mrf.mxu0
  %v367 = vadd.f32 %v297, %v366
  %v368 = vpop.f32.mrf.mxu0
  %v369 = vpop.f32.mrf.mxu0
  %v370 = vadd.f32 %v297, %v369
  %v371 = vpop.f32.mrf.mxu0
  %372 = vmatprep.mubr.bf16.mxu0 0
  %373 = vmatmul.mubr.bf16.gmra.mxu0 %v308
  %v374 = vpop.f32.mrf.mxu0
  %v375 = vadd.f32 %v297, %v374
  %v376 = vpop.f32.mrf.mxu0
  %v377 = vpop.f32.mrf.mxu0
  %v378 = vadd.f32 %v297, %v377
  %v379 = vpop.f32.mrf.mxu0
  %380 = vmatprep.mubr.bf16.mxu0 0
  %381 = vmatmul.mubr.bf16.gmra.mxu0 %v311
  %v382 = vpop.f32.mrf.mxu0
  %v383 = vadd.f32 %v297, %v382
  %v384 = vpop.f32.mrf.mxu0
  %v385 = vpop.f32.mrf.mxu0
  %v386 = vadd.f32 %v297, %v385
  %v387 = vpop.f32.mrf.mxu0
  %388 = vmatprep.mubr.bf16.mxu0 0
  %389 = vmatmul.mubr.bf16.gmra.mxu0 %v314
  %v390 = vpop.f32.mrf.mxu0
  %v391 = vadd.f32 %v297, %v390
  %v392 = vpop.f32.mrf.mxu0
  %v393 = vpop.f32.mrf.mxu0
  %v394 = vadd.f32 %v297, %v393
  %v395 = vpop.f32.mrf.mxu0
  %396 = vmatprep.mubr.bf16.mxu0 0
  %397 = vmatmul.mubr.bf16.gmra.mxu0 %v317
  %v398 = vpop.f32.mrf.mxu0
  %v399 = vadd.f32 %v297, %v398
  %v400 = vpop.f32.mrf.mxu0
  %v401 = vpop.f32.mrf.mxu0
  %v402 = vadd.f32 %v297, %v401
  %v403 = vpop.f32.mrf.mxu0
  %404 = vmatprep.mubr.bf16.mxu0 0
  %405 = vmatmul.mubr.bf16.gmra.mxu0 %v320
  %v406 = vpop.f32.mrf.mxu0
  %v407 = vadd.f32 %v297, %v406
  %v408 = vpop.f32.mrf.mxu0
  %v409 = vpop.f32.mrf.mxu0
  %v410 = vadd.f32 %v297, %v409
  %v411 = vpop.f32.mrf.mxu0
  %412 = vmatprep.mubr.bf16.mxu0 0
  %413 = vmatmul.mubr.bf16.gmra.mxu0 %v323
  %v414 = vpop.f32.mrf.mxu0
  %v415 = vadd.f32 %v297, %v414
  %v416 = vpop.f32.mrf.mxu0
  %v417 = vpop.f32.mrf.mxu0
  %v418 = vadd.f32 %v297, %v417
  %v419 = vpop.f32.mrf.mxu0
  %420 = vmatprep.mubr.bf16.mxu0 0
  %421 = vmatmul.mubr.bf16.gmra.mxu0 %v326
  %v422 = vpop.f32.mrf.mxu0
  %v423 = vadd.f32 %v297, %v422
  %v424 = vpop.f32.mrf.mxu0
  %v425 = vpop.f32.mrf.mxu0
  %v426 = vadd.f32 %v297, %v425
  %v427 = vpop.f32.mrf.mxu0
  %428 = vdwg.mxu0
  %v429 = vmax.f32 %v367, 0.0
  %v430 = vmax.f32 %v370, 0.0
  %v431 = vmax.f32 %v375, 0.0
  %v432 = vmax.f32 %v378, 0.0
  %v433 = vmax.f32 %v383, 0.0
  %v434 = vmax.f32 %v386, 0.0
  %v435 = vmax.f32 %v391, 0.0
  %v436 = vmax.f32 %v394, 0.0
  %v437 = vmax.f32 %v399, 0.0
  %v438 = vmax.f32 %v402, 0.0
  %v439 = vmax.f32 %v407, 0.0
  %v440 = vmax.f32 %v410, 0.0
  %v441 = vmax.f32 %v415, 0.0
  %v442 = vmax.f32 %v418, 0.0
  %v443 = vmax.f32 %v423, 0.0
  %v444 = vmax.f32 %v426, 0.0
  %v445 = vpack.c.bf16 %v430, %v429
  %v446 = vpack.c.bf16 %v432, %v431
  %v447 = vpack.c.bf16 %v434, %v433
  %v448 = vpack.c.bf16 %v436, %v435
  %v449 = vpack.c.bf16 %v438, %v437
  %v450 = vpack.c.bf16 %v440, %v439
  %v451 = vpack.c.bf16 %v442, %v441
  %v452 = vpack.c.bf16 %v444, %v443
  %v453 = vlaneseq
  %v454 = vshrl.u32 %v453, 7
  %v455 = vsub.s32 0, %v454
  %v456 = vrot.slane %v44, %v455
  %v461 = vunpack.c.l.b16 %v40
  %v462 = vunpack.c.l.b16 %v41
  %v463 = vunpack.c.l.b16 %v42
  %v464 = vunpack.c.l.b16 %v43
  %v465 = vpack.c.b16 %v462, %v461
  %v466 = vpack.c.b16 %v464, %v463
  %vm469 = vcmask 261120
  %v471 = vsel %vm469, %v445, 0
  %v474 = vsel %vm469, %v446, 0
  %v477 = vsel %vm469, %v447, 0
  %v480 = vsel %vm469, %v448, 0
  %v483 = vsel %vm469, %v449, 0
  %v486 = vsel %vm469, %v450, 0
  %v489 = vsel %vm469, %v451, 0
  %v492 = vsel %vm469, %v452, 0
  %494 = vmatprep.subr.bf16.mxu0 0
  %495 = vmatpush1.bf16.msra.mxu0 0
  %496 = vmatprep.subr.bf16.mxu0 0
  %497 = vmatpush1.bf16.msra.mxu0 0
  %498 = vmatprep.subr.bf16.mxu0 0
  %499 = vmatpush1.bf16.msra.mxu0 0
  %500 = vmatprep.subr.bf16.mxu0 0
  %501 = vmatpush1.bf16.msra.mxu0 0
  %502 = vmatprep.subr.bf16.mxu0 0
  %503 = vmatpush1.bf16.msra.mxu0 0
  %504 = vmatprep.subr.bf16.mxu0 0
  %505 = vmatpush1.bf16.msra.mxu0 0
  %506 = vmatprep.subr.bf16.mxu0 0
  %507 = vmatpush1.bf16.msra.mxu0 %v466
  %508 = vmatprep.subr.bf16.mxu0 0
  %509 = vmatpush1.bf16.msra.mxu0 %v465
  %510 = vmatprep.subr.bf16.mxu0 0
  %511 = vmatpush2.bf16.msra.mxu0 0
  %512 = vmatprep.subr.bf16.mxu0 0
  %513 = vmatpush2.bf16.msra.mxu0 0
  %514 = vmatprep.subr.bf16.mxu0 0
  %515 = vmatpush2.bf16.msra.mxu0 0
  %516 = vmatprep.subr.bf16.mxu0 0
  %517 = vmatpush2.bf16.msra.mxu0 0
  %518 = vmatprep.subr.bf16.mxu0 0
  %519 = vmatpush2.bf16.msra.mxu0 0
  %520 = vmatprep.subr.bf16.mxu0 0
  %521 = vmatpush2.bf16.msra.mxu0 0
  %522 = vmatprep.subr.bf16.mxu0 0
  %523 = vmatpush2.bf16.msra.mxu0 0
  %524 = vmatprep.subr.bf16.mxu0 0
  %525 = vmatpush2.bf16.msra.mxu0 0
  %526 = vmatprep.mubr.bf16.mxu0 0
  %527 = vmatmul.mubr.bf16.gmra.mxu0 %v471
  %v528 = vpop.f32.mrf.mxu0
  %v529 = vadd.f32 %v456, %v528
  %v530 = vpop.f32.mrf.mxu0
  %v531 = vpop.f32.mrf.mxu0
  %v532 = vadd.f32 %v456, %v531
  %v533 = vpop.f32.mrf.mxu0
  %534 = vmatprep.mubr.bf16.mxu0 0
  %535 = vmatmul.mubr.bf16.gmra.mxu0 %v474
  %v536 = vpop.f32.mrf.mxu0
  %v537 = vadd.f32 %v456, %v536
  %v538 = vpop.f32.mrf.mxu0
  %v539 = vpop.f32.mrf.mxu0
  %v540 = vadd.f32 %v456, %v539
  %v541 = vpop.f32.mrf.mxu0
  %542 = vmatprep.mubr.bf16.mxu0 0
  %543 = vmatmul.mubr.bf16.gmra.mxu0 %v477
  %v544 = vpop.f32.mrf.mxu0
  %v545 = vadd.f32 %v456, %v544
  %v546 = vpop.f32.mrf.mxu0
  %v547 = vpop.f32.mrf.mxu0
  %v548 = vadd.f32 %v456, %v547
  %v549 = vpop.f32.mrf.mxu0
  %550 = vmatprep.mubr.bf16.mxu0 0
  %551 = vmatmul.mubr.bf16.gmra.mxu0 %v480
  %v552 = vpop.f32.mrf.mxu0
  %v553 = vadd.f32 %v456, %v552
  %v554 = vpop.f32.mrf.mxu0
  %v555 = vpop.f32.mrf.mxu0
  %v556 = vadd.f32 %v456, %v555
  %v557 = vpop.f32.mrf.mxu0
  %558 = vmatprep.mubr.bf16.mxu0 0
  %559 = vmatmul.mubr.bf16.gmra.mxu0 %v483
  %v560 = vpop.f32.mrf.mxu0
  %v561 = vadd.f32 %v456, %v560
  %v562 = vpop.f32.mrf.mxu0
  %v563 = vpop.f32.mrf.mxu0
  %v564 = vadd.f32 %v456, %v563
  %v565 = vpop.f32.mrf.mxu0
  %566 = vmatprep.mubr.bf16.mxu0 0
  %567 = vmatmul.mubr.bf16.gmra.mxu0 %v486
  %v568 = vpop.f32.mrf.mxu0
  %v569 = vadd.f32 %v456, %v568
  %v570 = vpop.f32.mrf.mxu0
  %v571 = vpop.f32.mrf.mxu0
  %v572 = vadd.f32 %v456, %v571
  %v573 = vpop.f32.mrf.mxu0
  %574 = vmatprep.mubr.bf16.mxu0 0
  %575 = vmatmul.mubr.bf16.gmra.mxu0 %v489
  %v576 = vpop.f32.mrf.mxu0
  %v577 = vadd.f32 %v456, %v576
  %v578 = vpop.f32.mrf.mxu0
  %v579 = vpop.f32.mrf.mxu0
  %v580 = vadd.f32 %v456, %v579
  %v581 = vpop.f32.mrf.mxu0
  %582 = vmatprep.mubr.bf16.mxu0 0
  %583 = vmatmul.mubr.bf16.gmra.mxu0 %v492
  %v584 = vpop.f32.mrf.mxu0
  %v585 = vadd.f32 %v456, %v584
  %v586 = vpop.f32.mrf.mxu0
  %v587 = vpop.f32.mrf.mxu0
  %v588 = vadd.f32 %v456, %v587
  %v589 = vpop.f32.mrf.mxu0
  %590 = vdwg.mxu0
  %v591 = vmax.f32 %v529, 0.0
  %v592 = vmax.f32 %v532, 0.0
  %v593 = vmax.f32 %v537, 0.0
  %v594 = vmax.f32 %v540, 0.0
  %v595 = vmax.f32 %v545, 0.0
  %v596 = vmax.f32 %v548, 0.0
  %v597 = vmax.f32 %v553, 0.0
  %v598 = vmax.f32 %v556, 0.0
  %v599 = vmax.f32 %v561, 0.0
  %v600 = vmax.f32 %v564, 0.0
  %v601 = vmax.f32 %v569, 0.0
  %v602 = vmax.f32 %v572, 0.0
  %v603 = vmax.f32 %v577, 0.0
  %v604 = vmax.f32 %v580, 0.0
  %v605 = vmax.f32 %v585, 0.0
  %v606 = vmax.f32 %v588, 0.0
  %v607 = vpack.c.bf16 %v592, %v591
  %v608 = vpack.c.bf16 %v594, %v593
  %v609 = vpack.c.bf16 %v596, %v595
  %v610 = vpack.c.bf16 %v598, %v597
  %v611 = vpack.c.bf16 %v600, %v599
  %v612 = vpack.c.bf16 %v602, %v601
  %v613 = vpack.c.bf16 %v604, %v603
  %v614 = vpack.c.bf16 %v606, %v605
  %v623 = vunpack.c.l.b16 %v607
  %v624 = vunpack.c.h.b16 %v607
  %v625 = vunpack.c.l.b16 %v608
  %v626 = vunpack.c.h.b16 %v608
  %v627 = vunpack.c.l.b16 %v609
  %v628 = vunpack.c.h.b16 %v609
  %v629 = vunpack.c.l.b16 %v610
  %v630 = vunpack.c.h.b16 %v610
  %v631 = vunpack.c.l.b16 %v611
  %v632 = vunpack.c.h.b16 %v611
  %v633 = vunpack.c.l.b16 %v612
  %v634 = vunpack.c.h.b16 %v612
  %v635 = vunpack.c.l.b16 %v613
  %v636 = vunpack.c.h.b16 %v613
  %v637 = vunpack.c.l.b16 %v614
  %v638 = vunpack.c.h.b16 %v614
  %v639 = vpack.c.b16 %v623, %v623
  %v640 = vpack.c.b16 %v624, %v624
  %v641 = vpack.c.b16 %v625, %v625
  %v642 = vpack.c.b16 %v626, %v626
  %v643 = vpack.c.b16 %v627, %v627
  %v644 = vpack.c.b16 %v628, %v628
  %v645 = vpack.c.b16 %v629, %v629
  %v646 = vpack.c.b16 %v630, %v630
  %v647 = vpack.c.b16 %v631, %v631
  %v648 = vpack.c.b16 %v632, %v632
  %v649 = vpack.c.b16 %v633, %v633
  %v650 = vpack.c.b16 %v634, %v634
  %v651 = vpack.c.b16 %v635, %v635
  %v652 = vpack.c.b16 %v636, %v636
  %v653 = vpack.c.b16 %v637, %v637
  %v654 = vpack.c.b16 %v638, %v638
  %vm671 = vcmask 257024
  %672 = vst.msk [vmem:[#allocation2] sm:$0xf] %vm671, %v639
  %673 = vst.msk [vmem:[#allocation2 + $0x4] sm:$0xf] %vm671, %v640
  %674 = vst.msk [vmem:[#allocation2 + $0x8] sm:$0xf] %vm671, %v641
  %675 = vst.msk [vmem:[#allocation2 + $0xc] sm:$0xf] %vm671, %v642
  %676 = vst.msk [vmem:[#allocation2 + $0x10] sm:$0xf] %vm671, %v643
  %677 = vst.msk [vmem:[#allocation2 + $0x14] sm:$0xf] %vm671, %v644
  %678 = vst.msk [vmem:[#allocation2 + $0x18] sm:$0xf] %vm671, %v645
  %679 = vst.msk [vmem:[#allocation2 + $0x1c] sm:$0xf] %vm671, %v646
  %680 = vst.msk [vmem:[#allocation2 + $0x20] sm:$0xf] %vm671, %v647
  %681 = vst.msk [vmem:[#allocation2 + $0x24] sm:$0xf] %vm671, %v648
  %682 = vst.msk [vmem:[#allocation2 + $0x28] sm:$0xf] %vm671, %v649
  %683 = vst.msk [vmem:[#allocation2 + $0x2c] sm:$0xf] %vm671, %v650
  %684 = vst.msk [vmem:[#allocation2 + $0x30] sm:$0xf] %vm671, %v651
  %685 = vst.msk [vmem:[#allocation2 + $0x34] sm:$0xf] %vm671, %v652
  %686 = vst.msk [vmem:[#allocation2 + $0x38] sm:$0xf] %vm671, %v653
  %687 = vst.msk [vmem:[#allocation2 + $0x3c] sm:$0xf] %vm671, %v654
  %v688 = vld [vmem:[#allocation2] sm:$0xf]
  %v689 = vld [vmem:[#allocation2 + $0x4] sm:$0xf]
  %v690 = vld [vmem:[#allocation2 + $0x8] sm:$0xf]
  %v691 = vld [vmem:[#allocation2 + $0xc] sm:$0xf]
  %v692 = vld [vmem:[#allocation2 + $0x10] sm:$0xf]
  %v693 = vld [vmem:[#allocation2 + $0x14] sm:$0xf]
  %v694 = vld [vmem:[#allocation2 + $0x18] sm:$0xf]
  %v695 = vld [vmem:[#allocation2 + $0x1c] sm:$0xf]
  %v696 = vld [vmem:[#allocation2 + $0x20] sm:$0xf]
  %v697 = vld [vmem:[#allocation2 + $0x24] sm:$0xf]
  %v698 = vld [vmem:[#allocation2 + $0x28] sm:$0xf]
  %v699 = vld [vmem:[#allocation2 + $0x2c] sm:$0xf]
  %v700 = vld [vmem:[#allocation2 + $0x30] sm:$0xf]
  %v701 = vld [vmem:[#allocation2 + $0x34] sm:$0xf]
  %v702 = vld [vmem:[#allocation2 + $0x38] sm:$0xf]
  %v703 = vld [vmem:[#allocation2 + $0x3c] sm:$0xf]
  %v704 = vld [vmem:[%s2 + $0x38] sm:$0xf]
  %v705 = vld [vmem:[%s2 + $0x3c] sm:$0xf]
  %v706 = vld [vmem:[%s2 + $0x40] sm:$0xf]
  %v707 = vld [vmem:[%s2 + $0x44] sm:$0xf]
  %v708 = vld [vmem:[%s3 + $0x4] sm:$0x1]
  %v709 = vlaneseq
  %v710 = vshrl.u32 %v709, 7
  %v711 = vsub.s32 0, %v710
  %v712 = vrot.slane %v708, %v711
  %v729 = vunpack.c.l.b16 %v688
  %v730 = vunpack.c.l.b16 %v689
  %v731 = vunpack.c.l.b16 %v690
  %v732 = vunpack.c.l.b16 %v691
  %v733 = vunpack.c.l.b16 %v692
  %v734 = vunpack.c.l.b16 %v693
  %v735 = vunpack.c.l.b16 %v694
  %v736 = vunpack.c.l.b16 %v695
  %v737 = vunpack.c.l.b16 %v696
  %v738 = vunpack.c.l.b16 %v697
  %v739 = vunpack.c.l.b16 %v698
  %v740 = vunpack.c.l.b16 %v699
  %v741 = vunpack.c.l.b16 %v700
  %v742 = vunpack.c.l.b16 %v701
  %v743 = vunpack.c.l.b16 %v702
  %v744 = vunpack.c.l.b16 %v703
  %v745 = vpack.c.b16 %v730, %v729
  %v746 = vpack.c.b16 %v732, %v731
  %v747 = vpack.c.b16 %v734, %v733
  %v748 = vpack.c.b16 %v736, %v735
  %v749 = vpack.c.b16 %v738, %v737
  %v750 = vpack.c.b16 %v740, %v739
  %v751 = vpack.c.b16 %v742, %v741
  %v752 = vpack.c.b16 %v744, %v743
  %v757 = vunpack.c.l.b16 %v704
  %v758 = vunpack.c.l.b16 %v705
  %v759 = vunpack.c.l.b16 %v706
  %v760 = vunpack.c.l.b16 %v707
  %v761 = vpack.c.b16 %v758, %v757
  %v762 = vpack.c.b16 %v760, %v759
  %v766 = vsel %vm469, %v745, 0
  %v769 = vsel %vm469, %v746, 0
  %v772 = vsel %vm469, %v747, 0
  %v775 = vsel %vm469, %v748, 0
  %v778 = vsel %vm469, %v749, 0
  %v781 = vsel %vm469, %v750, 0
  %v784 = vsel %vm469, %v751, 0
  %v787 = vsel %vm469, %v752, 0
  %789 = vmatprep.subr.bf16.mxu0 0
  %790 = vmatpush1.bf16.msra.mxu0 0
  %791 = vmatprep.subr.bf16.mxu0 0
  %792 = vmatpush1.bf16.msra.mxu0 0
  %793 = vmatprep.subr.bf16.mxu0 0
  %794 = vmatpush1.bf16.msra.mxu0 0
  %795 = vmatprep.subr.bf16.mxu0 0
  %796 = vmatpush1.bf16.msra.mxu0 0
  %797 = vmatprep.subr.bf16.mxu0 0
  %798 = vmatpush1.bf16.msra.mxu0 0
  %799 = vmatprep.subr.bf16.mxu0 0
  %800 = vmatpush1.bf16.msra.mxu0 0
  %801 = vmatprep.subr.bf16.mxu0 0
  %802 = vmatpush1.bf16.msra.mxu0 %v762
  %803 = vmatprep.subr.bf16.mxu0 0
  %804 = vmatpush1.bf16.msra.mxu0 %v761
  %805 = vmatprep.subr.bf16.mxu0 0
  %806 = vmatpush2.bf16.msra.mxu0 0
  %807 = vmatprep.subr.bf16.mxu0 0
  %808 = vmatpush2.bf16.msra.mxu0 0
  %809 = vmatprep.subr.bf16.mxu0 0
  %810 = vmatpush2.bf16.msra.mxu0 0
  %811 = vmatprep.subr.bf16.mxu0 0
  %812 = vmatpush2.bf16.msra.mxu0 0
  %813 = vmatprep.subr.bf16.mxu0 0
  %814 = vmatpush2.bf16.msra.mxu0 0
  %815 = vmatprep.subr.bf16.mxu0 0
  %816 = vmatpush2.bf16.msra.mxu0 0
  %817 = vmatprep.subr.bf16.mxu0 0
  %818 = vmatpush2.bf16.msra.mxu0 0
  %819 = vmatprep.subr.bf16.mxu0 0
  %820 = vmatpush2.bf16.msra.mxu0 0
  %821 = vmatprep.mubr.bf16.mxu0 0
  %822 = vmatmul.mubr.bf16.gmra.mxu0 %v766
  %v823 = vpop.f32.mrf.mxu0
  %v824 = vadd.f32 %v712, %v823
  %v825 = vpop.f32.mrf.mxu0
  %v826 = vpop.f32.mrf.mxu0
  %v827 = vadd.f32 %v712, %v826
  %v828 = vpop.f32.mrf.mxu0
  %829 = vmatprep.mubr.bf16.mxu0 0
  %830 = vmatmul.mubr.bf16.gmra.mxu0 %v769
  %v831 = vpop.f32.mrf.mxu0
  %v832 = vadd.f32 %v712, %v831
  %v833 = vpop.f32.mrf.mxu0
  %v834 = vpop.f32.mrf.mxu0
  %v835 = vadd.f32 %v712, %v834
  %v836 = vpop.f32.mrf.mxu0
  %837 = vmatprep.mubr.bf16.mxu0 0
  %838 = vmatmul.mubr.bf16.gmra.mxu0 %v772
  %v839 = vpop.f32.mrf.mxu0
  %v840 = vadd.f32 %v712, %v839
  %v841 = vpop.f32.mrf.mxu0
  %v842 = vpop.f32.mrf.mxu0
  %v843 = vadd.f32 %v712, %v842
  %v844 = vpop.f32.mrf.mxu0
  %845 = vmatprep.mubr.bf16.mxu0 0
  %846 = vmatmul.mubr.bf16.gmra.mxu0 %v775
  %v847 = vpop.f32.mrf.mxu0
  %v848 = vadd.f32 %v712, %v847
  %v849 = vpop.f32.mrf.mxu0
  %v850 = vpop.f32.mrf.mxu0
  %v851 = vadd.f32 %v712, %v850
  %v852 = vpop.f32.mrf.mxu0
  %853 = vmatprep.mubr.bf16.mxu0 0
  %854 = vmatmul.mubr.bf16.gmra.mxu0 %v778
  %v855 = vpop.f32.mrf.mxu0
  %v856 = vadd.f32 %v712, %v855
  %v857 = vpop.f32.mrf.mxu0
  %v858 = vpop.f32.mrf.mxu0
  %v859 = vadd.f32 %v712, %v858
  %v860 = vpop.f32.mrf.mxu0
  %861 = vmatprep.mubr.bf16.mxu0 0
  %862 = vmatmul.mubr.bf16.gmra.mxu0 %v781
  %v863 = vpop.f32.mrf.mxu0
  %v864 = vadd.f32 %v712, %v863
  %v865 = vpop.f32.mrf.mxu0
  %v866 = vpop.f32.mrf.mxu0
  %v867 = vadd.f32 %v712, %v866
  %v868 = vpop.f32.mrf.mxu0
  %869 = vmatprep.mubr.bf16.mxu0 0
  %870 = vmatmul.mubr.bf16.gmra.mxu0 %v784
  %v871 = vpop.f32.mrf.mxu0
  %v872 = vadd.f32 %v712, %v871
  %v873 = vpop.f32.mrf.mxu0
  %v874 = vpop.f32.mrf.mxu0
  %v875 = vadd.f32 %v712, %v874
  %v876 = vpop.f32.mrf.mxu0
  %877 = vmatprep.mubr.bf16.mxu0 0
  %878 = vmatmul.mubr.bf16.gmra.mxu0 %v787
  %v879 = vpop.f32.mrf.mxu0
  %v880 = vadd.f32 %v712, %v879
  %v881 = vpop.f32.mrf.mxu0
  %v882 = vpop.f32.mrf.mxu0
  %v883 = vadd.f32 %v712, %v882
  %v884 = vpop.f32.mrf.mxu0
  %885 = vdwg.mxu0
  %vm886 = vcmask 785408
  %887 = vst.msk [vmem:[#allocation3] sm:$0xff] %vm886, %v824
  %888 = vst.msk [vmem:[#allocation3 + $0x8] sm:$0xff] %vm886, %v827
  %889 = vst.msk [vmem:[#allocation3 + $0x10] sm:$0xff] %vm886, %v832
  %890 = vst.msk [vmem:[#allocation3 + $0x18] sm:$0xff] %vm886, %v835
  %891 = vst.msk [vmem:[#allocation3 + $0x20] sm:$0xff] %vm886, %v840
  %892 = vst.msk [vmem:[#allocation3 + $0x28] sm:$0xff] %vm886, %v843
  %893 = vst.msk [vmem:[#allocation3 + $0x30] sm:$0xff] %vm886, %v848
  %894 = vst.msk [vmem:[#allocation3 + $0x38] sm:$0xff] %vm886, %v851
  %895 = vst.msk [vmem:[#allocation3 + $0x40] sm:$0xff] %vm886, %v856
  %896 = vst.msk [vmem:[#allocation3 + $0x48] sm:$0xff] %vm886, %v859
  %897 = vst.msk [vmem:[#allocation3 + $0x50] sm:$0xff] %vm886, %v864
  %898 = vst.msk [vmem:[#allocation3 + $0x58] sm:$0xff] %vm886, %v867
  %899 = vst.msk [vmem:[#allocation3 + $0x60] sm:$0xff] %vm886, %v872
  %900 = vst.msk [vmem:[#allocation3 + $0x68] sm:$0xff] %vm886, %v875
  %901 = vst.msk [vmem:[#allocation3 + $0x70] sm:$0xff] %vm886, %v880
  %902 = vst.msk [vmem:[#allocation3 + $0x78] sm:$0xff] %vm886, %v883
  %v903 = vld [vmem:[%s2 + $0x48] sm:$0xf]
  %v904 = vld [vmem:[%s2 + $0x4c] sm:$0xf]
  %v905 = vld [vmem:[%s2 + $0x50] sm:$0xf]
  %v906 = vld [vmem:[%s2 + $0x54] sm:$0xf]
  %v907 = vld [vmem:[%s3 + $0x5] sm:$0x1]
  %v908 = vld [vmem:[#allocation3] sm:$0xff]
  %v909 = vld [vmem:[#allocation3 + $0x8] sm:$0xff]
  %v910 = vlaneseq
  %v911 = vshrl.u32 %v910, 7
  %v912 = vsub.s32 0, %v911
  %v913 = vrot.slane %v907, %v912
  %v918 = vunpack.c.l.b16 %v903
  %v919 = vunpack.c.l.b16 %v904
  %v920 = vunpack.c.l.b16 %v905
  %v921 = vunpack.c.l.b16 %v906
  %v922 = vpack.c.b16 %v919, %v918
  %v923 = vpack.c.b16 %v921, %v920
  %v927 = vsel %vm469, 0, 0
  %929 = vmatprep.subr.bf16.mxu0 0
  %930 = vmatpush1.bf16.msra.mxu0 0
  %931 = vmatprep.subr.bf16.mxu0 0
  %932 = vmatpush1.bf16.msra.mxu0 0
  %933 = vmatprep.subr.bf16.mxu0 0
  %934 = vmatpush1.bf16.msra.mxu0 0
  %935 = vmatprep.subr.bf16.mxu0 0
  %936 = vmatpush1.bf16.msra.mxu0 0
  %937 = vmatprep.subr.bf16.mxu0 0
  %938 = vmatpush1.bf16.msra.mxu0 0
  %939 = vmatprep.subr.bf16.mxu0 0
  %940 = vmatpush1.bf16.msra.mxu0 0
  %941 = vmatprep.subr.bf16.mxu0 0
  %942 = vmatpush1.bf16.msra.mxu0 %v923
  %943 = vmatprep.subr.bf16.mxu0 0
  %944 = vmatpush1.bf16.msra.mxu0 %v922
  %945 = vmatprep.subr.bf16.mxu0 0
  %946 = vmatpush2.bf16.msra.mxu0 0
  %947 = vmatprep.subr.bf16.mxu0 0
  %948 = vmatpush2.bf16.msra.mxu0 0
  %949 = vmatprep.subr.bf16.mxu0 0
  %950 = vmatpush2.bf16.msra.mxu0 0
  %951 = vmatprep.subr.bf16.mxu0 0
  %952 = vmatpush2.bf16.msra.mxu0 0
  %953 = vmatprep.subr.bf16.mxu0 0
  %954 = vmatpush2.bf16.msra.mxu0 0
  %955 = vmatprep.subr.bf16.mxu0 0
  %956 = vmatpush2.bf16.msra.mxu0 0
  %957 = vmatprep.subr.bf16.mxu0 0
  %958 = vmatpush2.bf16.msra.mxu0 0
  %959 = vmatprep.subr.bf16.mxu0 0
  %960 = vmatpush2.bf16.msra.mxu0 0
  %961 = vmatprep.mubr.bf16.mxu0 0
  %962 = vmatmul.mubr.bf16.gmra.mxu0 %v927
  %v963 = vpop.f32.mrf.mxu0
  %v964 = vadd.f32 %v913, %v963
  %v965 = vpop.f32.mrf.mxu0
  %v966 = vpop.f32.mrf.mxu0
  %v967 = vadd.f32 %v913, %v966
  %v968 = vpop.f32.mrf.mxu0
  %969 = vdwg.mxu0
  %v970 = vadd.f32 %v908, %v964
  %v971 = vadd.f32 %v909, %v967
  %v972 = vxor.u32 %v970, 2147483648
  %v973 = vxor.u32 %v971, 2147483648
  %v974 = vmul.f32 %v972, 1.442695
  %v975 = vpow.pop %v974
  %v976 = vmul.f32 %v973, 1.442695
  %v977 = vpow.pop %v976
  %v978 = vadd.f32 %v975, 1.0
  %v979 = vadd.f32 %v977, 1.0
  %v980 = vrcp.pop %v978
  %v981 = vmul.f32 1.0, %v980
  %v982 = vrcp.pop %v979
  %v983 = vmul.f32 1.0, %v982
  %986 = vrot.lane.b32.xlu0 %v964, 64
  %v987 = vpop.permute.xlu0 %986
  %988 = vrot.lane.b32.xlu0 %v967, 64
  %v989 = vpop.permute.xlu0 %988
  %v992 = vmul.f32 %v981, %v987
  %v993 = vmul.f32 %v983, %v989
  %996 = vrot.lane.b32.xlu0 %v992, 64
  %v997 = vpop.permute.xlu0 %996
  %998 = vrot.lane.b32.xlu0 %v993, 64
  %v999 = vpop.permute.xlu0 %998
  %v1002 = vadd.f32 %v908, %v997
  %v1003 = vadd.f32 %v909, %v999
  %v1004 = vtanh.pop %v1002
  %v1005 = vtanh.pop %v1003
  %v1006 = vsub.f32 0.0, %v1004
  %v1007 = vsub.f32 0.0, %v1005
  %1010 = vrot.lane.b32.xlu0 %v1006, 96
  %v1011 = vpop.permute.xlu0 %1010
  %1012 = vrot.lane.b32.xlu0 %v1007, 96
  %v1013 = vpop.permute.xlu0 %1012
  %v1016 = vmul.f32 %v981, %v1011
  %v1017 = vmul.f32 %v983, %v1013
  %1020 = vrot.lane.b32.xlu0 %v1016, 32
  %v1021 = vpop.permute.xlu0 %1020
  %1022 = vrot.lane.b32.xlu0 %v1017, 32
  %v1023 = vpop.permute.xlu0 %1022
  %v1026 = vadd.f32 %v1004, %v1021
  %v1027 = vadd.f32 %v1005, %v1023
  %v1028 = vpack.c.bf16 %v1027, %v1026
  %v1030 = vunpack.c.l.b16 %v1028
  %v1031 = vunpack.c.h.b16 %v1028
  %v1032 = vpack.c.b16 %v1030, %v1030
  %v1033 = vpack.c.b16 %v1031, %v1031
  %1034 = vrot.lane.b32.xlu0 %v1032, 64
  %v1035 = vpop.permute.xlu0 %1034
  %1036 = vrot.lane.b32.xlu0 %v1033, 64
  %v1037 = vpop.permute.xlu0 %1036
  %1040 = vst.msk [vmem:[#allocation2] sm:$0xf] %vm671, %v1035
  %1041 = vst.msk [vmem:[#allocation2 + $0x4] sm:$0xf] %vm671, %v1037
  %v1042 = vld [vmem:[#allocation3 + $0x10] sm:$0xff]
  %v1043 = vld [vmem:[#allocation3 + $0x18] sm:$0xff]
  %1044 = vrot.lane.b32.xlu0 %v1028, 64
  %v1045 = vpop.permute.xlu0 %1044
  %v1047 = vsel %vm469, %v1045, 0
  %1049 = vmatprep.subr.bf16.mxu0 0
  %1050 = vmatpush1.bf16.msra.mxu0 0
  %1051 = vmatprep.subr.bf16.mxu0 0
  %1052 = vmatpush1.bf16.msra.mxu0 0
  %1053 = vmatprep.subr.bf16.mxu0 0
  %1054 = vmatpush1.bf16.msra.mxu0 0
  %1055 = vmatprep.subr.bf16.mxu0 0
  %1056 = vmatpush1.bf16.msra.mxu0 0
  %1057 = vmatprep.subr.bf16.mxu0 0
  %1058 = vmatpush1.bf16.msra.mxu0 0
  %1059 = vmatprep.subr.bf16.mxu0 0
  %1060 = vmatpush1.bf16.msra.mxu0 0
  %1061 = vmatprep.subr.bf16.mxu0 0
  %1062 = vmatpush1.bf16.msra.mxu0 %v923
  %1063 = vmatprep.subr.bf16.mxu0 0
  %1064 = vmatpush1.bf16.msra.mxu0 %v922
  %1065 = vmatprep.subr.bf16.mxu0 0
  %1066 = vmatpush2.bf16.msra.mxu0 0
  %1067 = vmatprep.subr.bf16.mxu0 0
  %1068 = vmatpush2.bf16.msra.mxu0 0
  %1069 = vmatprep.subr.bf16.mxu0 0
  %1070 = vmatpush2.bf16.msra.mxu0 0
  %1071 = vmatprep.subr.bf16.mxu0 0
  %1072 = vmatpush2.bf16.msra.mxu0 0
  %1073 = vmatprep.subr.bf16.mxu0 0
  %1074 = vmatpush2.bf16.msra.mxu0 0
  %1075 = vmatprep.subr.bf16.mxu0 0
  %1076 = vmatpush2.bf16.msra.mxu0 0
  %1077 = vmatprep.subr.bf16.mxu0 0
  %1078 = vmatpush2.bf16.msra.mxu0 0
  %1079 = vmatprep.subr.bf16.mxu0 0
  %1080 = vmatpush2.bf16.msra.mxu0 0
  %1081 = vmatprep.mubr.bf16.mxu0 0
  %1082 = vmatmul.mubr.bf16.gmra.mxu0 %v1047
  %v1083 = vpop.f32.mrf.mxu0
  %v1084 = vadd.f32 %v913, %v1083
  %v1085 = vpop.f32.mrf.mxu0
  %v1086 = vpop.f32.mrf.mxu0
  %v1087 = vadd.f32 %v913, %v1086
  %v1088 = vpop.f32.mrf.mxu0
  %1089 = vdwg.mxu0
  %v1090 = vadd.f32 %v1042, %v1084
  %v1091 = vadd.f32 %v1043, %v1087
  %v1092 = vxor.u32 %v1090, 2147483648
  %v1093 = vxor.u32 %v1091, 2147483648
  %v1094 = vmul.f32 %v1092, 1.442695
  %v1095 = vpow.pop %v1094
  %v1096 = vmul.f32 %v1093, 1.442695
  %v1097 = vpow.pop %v1096
  %v1098 = vadd.f32 %v1095, 1.0
  %v1099 = vadd.f32 %v1097, 1.0
  %v1100 = vrcp.pop %v1098
  %v1101 = vmul.f32 1.0, %v1100
  %v1102 = vrcp.pop %v1099
  %v1103 = vmul.f32 1.0, %v1102
  %1106 = vrot.lane.b32.xlu0 %v1084, 64
  %v1107 = vpop.permute.xlu0 %1106
  %1108 = vrot.lane.b32.xlu0 %v1087, 64
  %v1109 = vpop.permute.xlu0 %1108
  %v1112 = vmul.f32 %v1101, %v1107
  %v1113 = vmul.f32 %v1103, %v1109
  %1116 = vrot.lane.b32.xlu0 %v1112, 64
  %v1117 = vpop.permute.xlu0 %1116
  %1118 = vrot.lane.b32.xlu0 %v1113, 64
  %v1119 = vpop.permute.xlu0 %1118
  %v1122 = vadd.f32 %v1042, %v1117
  %v1123 = vadd.f32 %v1043, %v1119
  %v1124 = vtanh.pop %v1122
  %v1125 = vtanh.pop %v1123
  %v1126 = vsub.f32 %v1026, %v1124
  %v1127 = vsub.f32 %v1027, %v1125
  %1130 = vrot.lane.b32.xlu0 %v1126, 96
  %v1131 = vpop.permute.xlu0 %1130
  %1132 = vrot.lane.b32.xlu0 %v1127, 96
  %v1133 = vpop.permute.xlu0 %1132
  %v1136 = vmul.f32 %v1101, %v1131
  %v1137 = vmul.f32 %v1103, %v1133
  %1140 = vrot.lane.b32.xlu0 %v1136, 32
  %v1141 = vpop.permute.xlu0 %1140
  %1142 = vrot.lane.b32.xlu0 %v1137, 32
  %v1143 = vpop.permute.xlu0 %1142
  %v1146 = vadd.f32 %v1124, %v1141
  %v1147 = vadd.f32 %v1125, %v1143
  %v1148 = vpack.c.bf16 %v1147, %v1146
  %v1150 = vunpack.c.l.b16 %v1148
  %v1151 = vunpack.c.h.b16 %v1148
  %v1152 = vpack.c.b16 %v1150, %v1150
  %v1153 = vpack.c.b16 %v1151, %v1151
  %1154 = vrot.lane.b32.xlu0 %v1152, 64
  %v1155 = vpop.permute.xlu0 %1154
  %1156 = vrot.lane.b32.xlu0 %v1153, 64
  %v1157 = vpop.permute.xlu0 %1156
  %1160 = vst.msk [vmem:[#allocation2 + $0x8] sm:$0xf] %vm671, %v1155
  %1161 = vst.msk [vmem:[#allocation2 + $0xc] sm:$0xf] %vm671, %v1157
  %v1162 = vld [vmem:[#allocation3 + $0x20] sm:$0xff]
  %v1163 = vld [vmem:[#allocation3 + $0x28] sm:$0xff]
  %1164 = vrot.lane.b32.xlu0 %v1148, 64
  %v1165 = vpop.permute.xlu0 %1164
  %v1167 = vsel %vm469, %v1165, 0
  %1169 = vmatprep.subr.bf16.mxu0 0
  %1170 = vmatpush1.bf16.msra.mxu0 0
  %1171 = vmatprep.subr.bf16.mxu0 0
  %1172 = vmatpush1.bf16.msra.mxu0 0
  %1173 = vmatprep.subr.bf16.mxu0 0
  %1174 = vmatpush1.bf16.msra.mxu0 0
  %1175 = vmatprep.subr.bf16.mxu0 0
  %1176 = vmatpush1.bf16.msra.mxu0 0
  %1177 = vmatprep.subr.bf16.mxu0 0
  %1178 = vmatpush1.bf16.msra.mxu0 0
  %1179 = vmatprep.subr.bf16.mxu0 0
  %1180 = vmatpush1.bf16.msra.mxu0 0
  %1181 = vmatprep.subr.bf16.mxu0 0
  %1182 = vmatpush1.bf16.msra.mxu0 %v923
  %1183 = vmatprep.subr.bf16.mxu0 0
  %1184 = vmatpush1.bf16.msra.mxu0 %v922
  %1185 = vmatprep.subr.bf16.mxu0 0
  %1186 = vmatpush2.bf16.msra.mxu0 0
  %1187 = vmatprep.subr.bf16.mxu0 0
  %1188 = vmatpush2.bf16.msra.mxu0 0
  %1189 = vmatprep.subr.bf16.mxu0 0
  %1190 = vmatpush2.bf16.msra.mxu0 0
  %1191 = vmatprep.subr.bf16.mxu0 0
  %1192 = vmatpush2.bf16.msra.mxu0 0
  %1193 = vmatprep.subr.bf16.mxu0 0
  %1194 = vmatpush2.bf16.msra.mxu0 0
  %1195 = vmatprep.subr.bf16.mxu0 0
  %1196 = vmatpush2.bf16.msra.mxu0 0
  %1197 = vmatprep.subr.bf16.mxu0 0
  %1198 = vmatpush2.bf16.msra.mxu0 0
  %1199 = vmatprep.subr.bf16.mxu0 0
  %1200 = vmatpush2.bf16.msra.mxu0 0
  %1201 = vmatprep.mubr.bf16.mxu0 0
  %1202 = vmatmul.mubr.bf16.gmra.mxu0 %v1167
  %v1203 = vpop.f32.mrf.mxu0
  %v1204 = vadd.f32 %v913, %v1203
  %v1205 = vpop.f32.mrf.mxu0
  %v1206 = vpop.f32.mrf.mxu0
  %v1207 = vadd.f32 %v913, %v1206
  %v1208 = vpop.f32.mrf.mxu0
  %1209 = vdwg.mxu0
  %v1210 = vadd.f32 %v1162, %v1204
  %v1211 = vadd.f32 %v1163, %v1207
  %v1212 = vxor.u32 %v1210, 2147483648
  %v1213 = vxor.u32 %v1211, 2147483648
  %v1214 = vmul.f32 %v1212, 1.442695
  %v1215 = vpow.pop %v1214
  %v1216 = vmul.f32 %v1213, 1.442695
  %v1217 = vpow.pop %v1216
  %v1218 = vadd.f32 %v1215, 1.0
  %v1219 = vadd.f32 %v1217, 1.0
  %v1220 = vrcp.pop %v1218
  %v1221 = vmul.f32 1.0, %v1220
  %v1222 = vrcp.pop %v1219
  %v1223 = vmul.f32 1.0, %v1222
  %1226 = vrot.lane.b32.xlu0 %v1204, 64
  %v1227 = vpop.permute.xlu0 %1226
  %1228 = vrot.lane.b32.xlu0 %v1207, 64
  %v1229 = vpop.permute.xlu0 %1228
  %v1232 = vmul.f32 %v1221, %v1227
  %v1233 = vmul.f32 %v1223, %v1229
  %1236 = vrot.lane.b32.xlu0 %v1232, 64
  %v1237 = vpop.permute.xlu0 %1236
  %1238 = vrot.lane.b32.xlu0 %v1233, 64
  %v1239 = vpop.permute.xlu0 %1238
  %v1242 = vadd.f32 %v1162, %v1237
  %v1243 = vadd.f32 %v1163, %v1239
  %v1244 = vtanh.pop %v1242
  %v1245 = vtanh.pop %v1243
  %v1246 = vsub.f32 %v1146, %v1244
  %v1247 = vsub.f32 %v1147, %v1245
  %1250 = vrot.lane.b32.xlu0 %v1246, 96
  %v1251 = vpop.permute.xlu0 %1250
  %1252 = vrot.lane.b32.xlu0 %v1247, 96
  %v1253 = vpop.permute.xlu0 %1252
  %v1256 = vmul.f32 %v1221, %v1251
  %v1257 = vmul.f32 %v1223, %v1253
  %1260 = vrot.lane.b32.xlu0 %v1256, 32
  %v1261 = vpop.permute.xlu0 %1260
  %1262 = vrot.lane.b32.xlu0 %v1257, 32
  %v1263 = vpop.permute.xlu0 %1262
  %v1266 = vadd.f32 %v1244, %v1261
  %v1267 = vadd.f32 %v1245, %v1263
  %v1268 = vpack.c.bf16 %v1267, %v1266
  %v1270 = vunpack.c.l.b16 %v1268
  %v1271 = vunpack.c.h.b16 %v1268
  %v1272 = vpack.c.b16 %v1270, %v1270
  %v1273 = vpack.c.b16 %v1271, %v1271
  %1274 = vrot.lane.b32.xlu0 %v1272, 64
  %v1275 = vpop.permute.xlu0 %1274
  %1276 = vrot.lane.b32.xlu0 %v1273, 64
  %v1277 = vpop.permute.xlu0 %1276
  %1280 = vst.msk [vmem:[#allocation2 + $0x10] sm:$0xf] %vm671, %v1275
  %1281 = vst.msk [vmem:[#allocation2 + $0x14] sm:$0xf] %vm671, %v1277
  %v1282 = vld [vmem:[#allocation3 + $0x30] sm:$0xff]
  %v1283 = vld [vmem:[#allocation3 + $0x38] sm:$0xff]
  %1284 = vrot.lane.b32.xlu0 %v1268, 64
  %v1285 = vpop.permute.xlu0 %1284
  %v1287 = vsel %vm469, %v1285, 0
  %1289 = vmatprep.subr.bf16.mxu0 0
  %1290 = vmatpush1.bf16.msra.mxu0 0
  %1291 = vmatprep.subr.bf16.mxu0 0
  %1292 = vmatpush1.bf16.msra.mxu0 0
  %1293 = vmatprep.subr.bf16.mxu0 0
  %1294 = vmatpush1.bf16.msra.mxu0 0
  %1295 = vmatprep.subr.bf16.mxu0 0
  %1296 = vmatpush1.bf16.msra.mxu0 0
  %1297 = vmatprep.subr.bf16.mxu0 0
  %1298 = vmatpush1.bf16.msra.mxu0 0
  %1299 = vmatprep.subr.bf16.mxu0 0
  %1300 = vmatpush1.bf16.msra.mxu0 0
  %1301 = vmatprep.subr.bf16.mxu0 0
  %1302 = vmatpush1.bf16.msra.mxu0 %v923
  %1303 = vmatprep.subr.bf16.mxu0 0
  %1304 = vmatpush1.bf16.msra.mxu0 %v922
  %1305 = vmatprep.subr.bf16.mxu0 0
  %1306 = vmatpush2.bf16.msra.mxu0 0
  %1307 = vmatprep.subr.bf16.mxu0 0
  %1308 = vmatpush2.bf16.msra.mxu0 0
  %1309 = vmatprep.subr.bf16.mxu0 0
  %1310 = vmatpush2.bf16.msra.mxu0 0
  %1311 = vmatprep.subr.bf16.mxu0 0
  %1312 = vmatpush2.bf16.msra.mxu0 0
  %1313 = vmatprep.subr.bf16.mxu0 0
  %1314 = vmatpush2.bf16.msra.mxu0 0
  %1315 = vmatprep.subr.bf16.mxu0 0
  %1316 = vmatpush2.bf16.msra.mxu0 0
  %1317 = vmatprep.subr.bf16.mxu0 0
  %1318 = vmatpush2.bf16.msra.mxu0 0
  %1319 = vmatprep.subr.bf16.mxu0 0
  %1320 = vmatpush2.bf16.msra.mxu0 0
  %1321 = vmatprep.mubr.bf16.mxu0 0
  %1322 = vmatmul.mubr.bf16.gmra.mxu0 %v1287
  %v1323 = vpop.f32.mrf.mxu0
  %v1324 = vadd.f32 %v913, %v1323
  %v1325 = vpop.f32.mrf.mxu0
  %v1326 = vpop.f32.mrf.mxu0
  %v1327 = vadd.f32 %v913, %v1326
  %v1328 = vpop.f32.mrf.mxu0
  %1329 = vdwg.mxu0
  %v1330 = vadd.f32 %v1282, %v1324
  %v1331 = vadd.f32 %v1283, %v1327
  %v1332 = vxor.u32 %v1330, 2147483648
  %v1333 = vxor.u32 %v1331, 2147483648
  %v1334 = vmul.f32 %v1332, 1.442695
  %v1335 = vpow.pop %v1334
  %v1336 = vmul.f32 %v1333, 1.442695
  %v1337 = vpow.pop %v1336
  %v1338 = vadd.f32 %v1335, 1.0
  %v1339 = vadd.f32 %v1337, 1.0
  %v1340 = vrcp.pop %v1338
  %v1341 = vmul.f32 1.0, %v1340
  %v1342 = vrcp.pop %v1339
  %v1343 = vmul.f32 1.0, %v1342
  %1346 = vrot.lane.b32.xlu0 %v1324, 64
  %v1347 = vpop.permute.xlu0 %1346
  %1348 = vrot.lane.b32.xlu0 %v1327, 64
  %v1349 = vpop.permute.xlu0 %1348
  %v1352 = vmul.f32 %v1341, %v1347
  %v1353 = vmul.f32 %v1343, %v1349
  %1356 = vrot.lane.b32.xlu0 %v1352, 64
  %v1357 = vpop.permute.xlu0 %1356
  %1358 = vrot.lane.b32.xlu0 %v1353, 64
  %v1359 = vpop.permute.xlu0 %1358
  %v1362 = vadd.f32 %v1282, %v1357
  %v1363 = vadd.f32 %v1283, %v1359
  %v1364 = vtanh.pop %v1362
  %v1365 = vtanh.pop %v1363
  %v1366 = vsub.f32 %v1266, %v1364
  %v1367 = vsub.f32 %v1267, %v1365
  %1370 = vrot.lane.b32.xlu0 %v1366, 96
  %v1371 = vpop.permute.xlu0 %1370
  %1372 = vrot.lane.b32.xlu0 %v1367, 96
  %v1373 = vpop.permute.xlu0 %1372
  %v1376 = vmul.f32 %v1341, %v1371
  %v1377 = vmul.f32 %v1343, %v1373
  %1380 = vrot.lane.b32.xlu0 %v1376, 32
  %v1381 = vpop.permute.xlu0 %1380
  %1382 = vrot.lane.b32.xlu0 %v1377, 32
  %v1383 = vpop.permute.xlu0 %1382
  %v1386 = vadd.f32 %v1364, %v1381
  %v1387 = vadd.f32 %v1365, %v1383
  %v1388 = vpack.c.bf16 %v1387, %v1386
  %v1390 = vunpack.c.l.b16 %v1388
  %v1391 = vunpack.c.h.b16 %v1388
  %v1392 = vpack.c.b16 %v1390, %v1390
  %v1393 = vpack.c.b16 %v1391, %v1391
  %1394 = vrot.lane.b32.xlu0 %v1392, 64
  %v1395 = vpop.permute.xlu0 %1394
  %1396 = vrot.lane.b32.xlu0 %v1393, 64
  %v1397 = vpop.permute.xlu0 %1396
  %1400 = vst.msk [vmem:[#allocation2 + $0x18] sm:$0xf] %vm671, %v1395
  %1401 = vst.msk [vmem:[#allocation2 + $0x1c] sm:$0xf] %vm671, %v1397
  %v1402 = vld [vmem:[#allocation3 + $0x40] sm:$0xff]
  %v1403 = vld [vmem:[#allocation3 + $0x48] sm:$0xff]
  %1404 = vrot.lane.b32.xlu0 %v1388, 64
  %v1405 = vpop.permute.xlu0 %1404
  %v1407 = vsel %vm469, %v1405, 0
  %1409 = vmatprep.subr.bf16.mxu0 0
  %1410 = vmatpush1.bf16.msra.mxu0 0
  %1411 = vmatprep.subr.bf16.mxu0 0
  %1412 = vmatpush1.bf16.msra.mxu0 0
  %1413 = vmatprep.subr.bf16.mxu0 0
  %1414 = vmatpush1.bf16.msra.mxu0 0
  %1415 = vmatprep.subr.bf16.mxu0 0
  %1416 = vmatpush1.bf16.msra.mxu0 0
  %1417 = vmatprep.subr.bf16.mxu0 0
  %1418 = vmatpush1.bf16.msra.mxu0 0
  %1419 = vmatprep.subr.bf16.mxu0 0
  %1420 = vmatpush1.bf16.msra.mxu0 0
  %1421 = vmatprep.subr.bf16.mxu0 0
  %1422 = vmatpush1.bf16.msra.mxu0 %v923
  %1423 = vmatprep.subr.bf16.mxu0 0
  %1424 = vmatpush1.bf16.msra.mxu0 %v922
  %1425 = vmatprep.subr.bf16.mxu0 0
  %1426 = vmatpush2.bf16.msra.mxu0 0
  %1427 = vmatprep.subr.bf16.mxu0 0
  %1428 = vmatpush2.bf16.msra.mxu0 0
  %1429 = vmatprep.subr.bf16.mxu0 0
  %1430 = vmatpush2.bf16.msra.mxu0 0
  %1431 = vmatprep.subr.bf16.mxu0 0
  %1432 = vmatpush2.bf16.msra.mxu0 0
  %1433 = vmatprep.subr.bf16.mxu0 0
  %1434 = vmatpush2.bf16.msra.mxu0 0
  %1435 = vmatprep.subr.bf16.mxu0 0
  %1436 = vmatpush2.bf16.msra.mxu0 0
  %1437 = vmatprep.subr.bf16.mxu0 0
  %1438 = vmatpush2.bf16.msra.mxu0 0
  %1439 = vmatprep.subr.bf16.mxu0 0
  %1440 = vmatpush2.bf16.msra.mxu0 0
  %1441 = vmatprep.mubr.bf16.mxu0 0
  %1442 = vmatmul.mubr.bf16.gmra.mxu0 %v1407
  %v1443 = vpop.f32.mrf.mxu0
  %v1444 = vadd.f32 %v913, %v1443
  %v1445 = vpop.f32.mrf.mxu0
  %v1446 = vpop.f32.mrf.mxu0
  %v1447 = vadd.f32 %v913, %v1446
  %v1448 = vpop.f32.mrf.mxu0
  %1449 = vdwg.mxu0
  %v1450 = vadd.f32 %v1402, %v1444
  %v1451 = vadd.f32 %v1403, %v1447
  %v1452 = vxor.u32 %v1450, 2147483648
  %v1453 = vxor.u32 %v1451, 2147483648
  %v1454 = vmul.f32 %v1452, 1.442695
  %v1455 = vpow.pop %v1454
  %v1456 = vmul.f32 %v1453, 1.442695
  %v1457 = vpow.pop %v1456
  %v1458 = vadd.f32 %v1455, 1.0
  %v1459 = vadd.f32 %v1457, 1.0
  %v1460 = vrcp.pop %v1458
  %v1461 = vmul.f32 1.0, %v1460
  %v1462 = vrcp.pop %v1459
  %v1463 = vmul.f32 1.0, %v1462
  %1466 = vrot.lane.b32.xlu0 %v1444, 64
  %v1467 = vpop.permute.xlu0 %1466
  %1468 = vrot.lane.b32.xlu0 %v1447, 64
  %v1469 = vpop.permute.xlu0 %1468
  %v1472 = vmul.f32 %v1461, %v1467
  %v1473 = vmul.f32 %v1463, %v1469
  %1476 = vrot.lane.b32.xlu0 %v1472, 64
  %v1477 = vpop.permute.xlu0 %1476
  %1478 = vrot.lane.b32.xlu0 %v1473, 64
  %v1479 = vpop.permute.xlu0 %1478
  %v1482 = vadd.f32 %v1402, %v1477
  %v1483 = vadd.f32 %v1403, %v1479
  %v1484 = vtanh.pop %v1482
  %v1485 = vtanh.pop %v1483
  %v1486 = vsub.f32 %v1386, %v1484
  %v1487 = vsub.f32 %v1387, %v1485
  %1490 = vrot.lane.b32.xlu0 %v1486, 96
  %v1491 = vpop.permute.xlu0 %1490
  %1492 = vrot.lane.b32.xlu0 %v1487, 96
  %v1493 = vpop.permute.xlu0 %1492
  %v1496 = vmul.f32 %v1461, %v1491
  %v1497 = vmul.f32 %v1463, %v1493
  %1500 = vrot.lane.b32.xlu0 %v1496, 32
  %v1501 = vpop.permute.xlu0 %1500
  %1502 = vrot.lane.b32.xlu0 %v1497, 32
  %v1503 = vpop.permute.xlu0 %1502
  %v1506 = vadd.f32 %v1484, %v1501
  %v1507 = vadd.f32 %v1485, %v1503
  %v1508 = vpack.c.bf16 %v1507, %v1506
  %v1510 = vunpack.c.l.b16 %v1508
  %v1511 = vunpack.c.h.b16 %v1508
  %v1512 = vpack.c.b16 %v1510, %v1510
  %v1513 = vpack.c.b16 %v1511, %v1511
  %1514 = vrot.lane.b32.xlu0 %v1512, 64
  %v1515 = vpop.permute.xlu0 %1514
  %1516 = vrot.lane.b32.xlu0 %v1513, 64
  %v1517 = vpop.permute.xlu0 %1516
  %1520 = vst.msk [vmem:[#allocation2 + $0x20] sm:$0xf] %vm671, %v1515
  %1521 = vst.msk [vmem:[#allocation2 + $0x24] sm:$0xf] %vm671, %v1517
  %v1522 = vld [vmem:[#allocation3 + $0x50] sm:$0xff]
  %v1523 = vld [vmem:[#allocation3 + $0x58] sm:$0xff]
  %1524 = vrot.lane.b32.xlu0 %v1508, 64
  %v1525 = vpop.permute.xlu0 %1524
  %v1527 = vsel %vm469, %v1525, 0
  %1529 = vmatprep.subr.bf16.mxu0 0
  %1530 = vmatpush1.bf16.msra.mxu0 0
  %1531 = vmatprep.subr.bf16.mxu0 0
  %1532 = vmatpush1.bf16.msra.mxu0 0
  %1533 = vmatprep.subr.bf16.mxu0 0
  %1534 = vmatpush1.bf16.msra.mxu0 0
  %1535 = vmatprep.subr.bf16.mxu0 0
  %1536 = vmatpush1.bf16.msra.mxu0 0
  %1537 = vmatprep.subr.bf16.mxu0 0
  %1538 = vmatpush1.bf16.msra.mxu0 0
  %1539 = vmatprep.subr.bf16.mxu0 0
  %1540 = vmatpush1.bf16.msra.mxu0 0
  %1541 = vmatprep.subr.bf16.mxu0 0
  %1542 = vmatpush1.bf16.msra.mxu0 %v923
  %1543 = vmatprep.subr.bf16.mxu0 0
  %1544 = vmatpush1.bf16.msra.mxu0 %v922
  %1545 = vmatprep.subr.bf16.mxu0 0
  %1546 = vmatpush2.bf16.msra.mxu0 0
  %1547 = vmatprep.subr.bf16.mxu0 0
  %1548 = vmatpush2.bf16.msra.mxu0 0
  %1549 = vmatprep.subr.bf16.mxu0 0
  %1550 = vmatpush2.bf16.msra.mxu0 0
  %1551 = vmatprep.subr.bf16.mxu0 0
  %1552 = vmatpush2.bf16.msra.mxu0 0
  %1553 = vmatprep.subr.bf16.mxu0 0
  %1554 = vmatpush2.bf16.msra.mxu0 0
  %1555 = vmatprep.subr.bf16.mxu0 0
  %1556 = vmatpush2.bf16.msra.mxu0 0
  %1557 = vmatprep.subr.bf16.mxu0 0
  %1558 = vmatpush2.bf16.msra.mxu0 0
  %1559 = vmatprep.subr.bf16.mxu0 0
  %1560 = vmatpush2.bf16.msra.mxu0 0
  %1561 = vmatprep.mubr.bf16.mxu0 0
  %1562 = vmatmul.mubr.bf16.gmra.mxu0 %v1527
  %v1563 = vpop.f32.mrf.mxu0
  %v1564 = vadd.f32 %v913, %v1563
  %v1565 = vpop.f32.mrf.mxu0
  %v1566 = vpop.f32.mrf.mxu0
  %v1567 = vadd.f32 %v913, %v1566
  %v1568 = vpop.f32.mrf.mxu0
  %1569 = vdwg.mxu0
  %v1570 = vadd.f32 %v1522, %v1564
  %v1571 = vadd.f32 %v1523, %v1567
  %v1572 = vxor.u32 %v1570, 2147483648
  %v1573 = vxor.u32 %v1571, 2147483648
  %v1574 = vmul.f32 %v1572, 1.442695
  %v1575 = vpow.pop %v1574
  %v1576 = vmul.f32 %v1573, 1.442695
  %v1577 = vpow.pop %v1576
  %v1578 = vadd.f32 %v1575, 1.0
  %v1579 = vadd.f32 %v1577, 1.0
  %v1580 = vrcp.pop %v1578
  %v1581 = vmul.f32 1.0, %v1580
  %v1582 = vrcp.pop %v1579
  %v1583 = vmul.f32 1.0, %v1582
  %1586 = vrot.lane.b32.xlu0 %v1564, 64
  %v1587 = vpop.permute.xlu0 %1586
  %1588 = vrot.lane.b32.xlu0 %v1567, 64
  %v1589 = vpop.permute.xlu0 %1588
  %v1592 = vmul.f32 %v1581, %v1587
  %v1593 = vmul.f32 %v1583, %v1589
  %1596 = vrot.lane.b32.xlu0 %v1592, 64
  %v1597 = vpop.permute.xlu0 %1596
  %1598 = vrot.lane.b32.xlu0 %v1593, 64
  %v1599 = vpop.permute.xlu0 %1598
  %v1602 = vadd.f32 %v1522, %v1597
  %v1603 = vadd.f32 %v1523, %v1599
  %v1604 = vtanh.pop %v1602
  %v1605 = vtanh.pop %v1603
  %v1606 = vsub.f32 %v1506, %v1604
  %v1607 = vsub.f32 %v1507, %v1605
  %1610 = vrot.lane.b32.xlu0 %v1606, 96
  %v1611 = vpop.permute.xlu0 %1610
  %1612 = vrot.lane.b32.xlu0 %v1607, 96
  %v1613 = vpop.permute.xlu0 %1612
  %v1616 = vmul.f32 %v1581, %v1611
  %v1617 = vmul.f32 %v1583, %v1613
  %1620 = vrot.lane.b32.xlu0 %v1616, 32
  %v1621 = vpop.permute.xlu0 %1620
  %1622 = vrot.lane.b32.xlu0 %v1617, 32
  %v1623 = vpop.permute.xlu0 %1622
  %v1626 = vadd.f32 %v1604, %v1621
  %v1627 = vadd.f32 %v1605, %v1623
  %v1628 = vpack.c.bf16 %v1627, %v1626
  %v1630 = vunpack.c.l.b16 %v1628
  %v1631 = vunpack.c.h.b16 %v1628
  %v1632 = vpack.c.b16 %v1630, %v1630
  %v1633 = vpack.c.b16 %v1631, %v1631
  %1634 = vrot.lane.b32.xlu0 %v1632, 64
  %v1635 = vpop.permute.xlu0 %1634
  %1636 = vrot.lane.b32.xlu0 %v1633, 64
  %v1637 = vpop.permute.xlu0 %1636
  %1640 = vst.msk [vmem:[#allocation2 + $0x28] sm:$0xf] %vm671, %v1635
  %1641 = vst.msk [vmem:[#allocation2 + $0x2c] sm:$0xf] %vm671, %v1637
  %v1642 = vld [vmem:[#allocation3 + $0x60] sm:$0xff]
  %v1643 = vld [vmem:[#allocation3 + $0x68] sm:$0xff]
  %1644 = vrot.lane.b32.xlu0 %v1628, 64
  %v1645 = vpop.permute.xlu0 %1644
  %v1647 = vsel %vm469, %v1645, 0
  %1649 = vmatprep.subr.bf16.mxu0 0
  %1650 = vmatpush1.bf16.msra.mxu0 0
  %1651 = vmatprep.subr.bf16.mxu0 0
  %1652 = vmatpush1.bf16.msra.mxu0 0
  %1653 = vmatprep.subr.bf16.mxu0 0
  %1654 = vmatpush1.bf16.msra.mxu0 0
  %1655 = vmatprep.subr.bf16.mxu0 0
  %1656 = vmatpush1.bf16.msra.mxu0 0
  %1657 = vmatprep.subr.bf16.mxu0 0
  %1658 = vmatpush1.bf16.msra.mxu0 0
  %1659 = vmatprep.subr.bf16.mxu0 0
  %1660 = vmatpush1.bf16.msra.mxu0 0
  %1661 = vmatprep.subr.bf16.mxu0 0
  %1662 = vmatpush1.bf16.msra.mxu0 %v923
  %1663 = vmatprep.subr.bf16.mxu0 0
  %1664 = vmatpush1.bf16.msra.mxu0 %v922
  %1665 = vmatprep.subr.bf16.mxu0 0
  %1666 = vmatpush2.bf16.msra.mxu0 0
  %1667 = vmatprep.subr.bf16.mxu0 0
  %1668 = vmatpush2.bf16.msra.mxu0 0
  %1669 = vmatprep.subr.bf16.mxu0 0
  %1670 = vmatpush2.bf16.msra.mxu0 0
  %1671 = vmatprep.subr.bf16.mxu0 0
  %1672 = vmatpush2.bf16.msra.mxu0 0
  %1673 = vmatprep.subr.bf16.mxu0 0
  %1674 = vmatpush2.bf16.msra.mxu0 0
  %1675 = vmatprep.subr.bf16.mxu0 0
  %1676 = vmatpush2.bf16.msra.mxu0 0
  %1677 = vmatprep.subr.bf16.mxu0 0
  %1678 = vmatpush2.bf16.msra.mxu0 0
  %1679 = vmatprep.subr.bf16.mxu0 0
  %1680 = vmatpush2.bf16.msra.mxu0 0
  %1681 = vmatprep.mubr.bf16.mxu0 0
  %1682 = vmatmul.mubr.bf16.gmra.mxu0 %v1647
  %v1683 = vpop.f32.mrf.mxu0
  %v1684 = vadd.f32 %v913, %v1683
  %v1685 = vpop.f32.mrf.mxu0
  %v1686 = vpop.f32.mrf.mxu0
  %v1687 = vadd.f32 %v913, %v1686
  %v1688 = vpop.f32.mrf.mxu0
  %1689 = vdwg.mxu0
  %v1690 = vadd.f32 %v1642, %v1684
  %v1691 = vadd.f32 %v1643, %v1687
  %v1692 = vxor.u32 %v1690, 2147483648
  %v1693 = vxor.u32 %v1691, 2147483648
  %v1694 = vmul.f32 %v1692, 1.442695
  %v1695 = vpow.pop %v1694
  %v1696 = vmul.f32 %v1693, 1.442695
  %v1697 = vpow.pop %v1696
  %v1698 = vadd.f32 %v1695, 1.0
  %v1699 = vadd.f32 %v1697, 1.0
  %v1700 = vrcp.pop %v1698
  %v1701 = vmul.f32 1.0, %v1700
  %v1702 = vrcp.pop %v1699
  %v1703 = vmul.f32 1.0, %v1702
  %1706 = vrot.lane.b32.xlu0 %v1684, 64
  %v1707 = vpop.permute.xlu0 %1706
  %1708 = vrot.lane.b32.xlu0 %v1687, 64
  %v1709 = vpop.permute.xlu0 %1708
  %v1712 = vmul.f32 %v1701, %v1707
  %v1713 = vmul.f32 %v1703, %v1709
  %1716 = vrot.lane.b32.xlu0 %v1712, 64
  %v1717 = vpop.permute.xlu0 %1716
  %1718 = vrot.lane.b32.xlu0 %v1713, 64
  %v1719 = vpop.permute.xlu0 %1718
  %v1722 = vadd.f32 %v1642, %v1717
  %v1723 = vadd.f32 %v1643, %v1719
  %v1724 = vtanh.pop %v1722
  %v1725 = vtanh.pop %v1723
  %v1726 = vsub.f32 %v1626, %v1724
  %v1727 = vsub.f32 %v1627, %v1725
  %1730 = vrot.lane.b32.xlu0 %v1726, 96
  %v1731 = vpop.permute.xlu0 %1730
  %1732 = vrot.lane.b32.xlu0 %v1727, 96
  %v1733 = vpop.permute.xlu0 %1732
  %v1736 = vmul.f32 %v1701, %v1731
  %v1737 = vmul.f32 %v1703, %v1733
  %1740 = vrot.lane.b32.xlu0 %v1736, 32
  %v1741 = vpop.permute.xlu0 %1740
  %1742 = vrot.lane.b32.xlu0 %v1737, 32
  %v1743 = vpop.permute.xlu0 %1742
  %v1746 = vadd.f32 %v1724, %v1741
  %v1747 = vadd.f32 %v1725, %v1743
  %v1748 = vpack.c.bf16 %v1747, %v1746
  %v1750 = vunpack.c.l.b16 %v1748
  %v1751 = vunpack.c.h.b16 %v1748
  %v1752 = vpack.c.b16 %v1750, %v1750
  %v1753 = vpack.c.b16 %v1751, %v1751
  %1754 = vrot.lane.b32.xlu0 %v1752, 64
  %v1755 = vpop.permute.xlu0 %1754
  %1756 = vrot.lane.b32.xlu0 %v1753, 64
  %v1757 = vpop.permute.xlu0 %1756
  %1760 = vst.msk [vmem:[#allocation2 + $0x30] sm:$0xf] %vm671, %v1755
  %1761 = vst.msk [vmem:[#allocation2 + $0x34] sm:$0xf] %vm671, %v1757
  %v1762 = vld [vmem:[#allocation3 + $0x70] sm:$0xff]
  %v1763 = vld [vmem:[#allocation3 + $0x78] sm:$0xff]
  %1764 = vrot.lane.b32.xlu0 %v1748, 64
  %v1765 = vpop.permute.xlu0 %1764
  %v1767 = vsel %vm469, %v1765, 0
  %1769 = vmatprep.subr.bf16.mxu0 0
  %1770 = vmatpush1.bf16.msra.mxu0 0
  %1771 = vmatprep.subr.bf16.mxu0 0
  %1772 = vmatpush1.bf16.msra.mxu0 0
  %1773 = vmatprep.subr.bf16.mxu0 0
  %1774 = vmatpush1.bf16.msra.mxu0 0
  %1775 = vmatprep.subr.bf16.mxu0 0
  %1776 = vmatpush1.bf16.msra.mxu0 0
  %1777 = vmatprep.subr.bf16.mxu0 0
  %1778 = vmatpush1.bf16.msra.mxu0 0
  %1779 = vmatprep.subr.bf16.mxu0 0
  %1780 = vmatpush1.bf16.msra.mxu0 0
  %1781 = vmatprep.subr.bf16.mxu0 0
  %1782 = vmatpush1.bf16.msra.mxu0 %v923
  %1783 = vmatprep.subr.bf16.mxu0 0
  %1784 = vmatpush1.bf16.msra.mxu0 %v922
  %1785 = vmatprep.subr.bf16.mxu0 0
  %1786 = vmatpush2.bf16.msra.mxu0 0
  %1787 = vmatprep.subr.bf16.mxu0 0
  %1788 = vmatpush2.bf16.msra.mxu0 0
  %1789 = vmatprep.subr.bf16.mxu0 0
  %1790 = vmatpush2.bf16.msra.mxu0 0
  %1791 = vmatprep.subr.bf16.mxu0 0
  %1792 = vmatpush2.bf16.msra.mxu0 0
  %1793 = vmatprep.subr.bf16.mxu0 0
  %1794 = vmatpush2.bf16.msra.mxu0 0
  %1795 = vmatprep.subr.bf16.mxu0 0
  %1796 = vmatpush2.bf16.msra.mxu0 0
  %1797 = vmatprep.subr.bf16.mxu0 0
  %1798 = vmatpush2.bf16.msra.mxu0 0
  %1799 = vmatprep.subr.bf16.mxu0 0
  %1800 = vmatpush2.bf16.msra.mxu0 0
  %1801 = vmatprep.mubr.bf16.mxu0 0
  %1802 = vmatmul.mubr.bf16.gmra.mxu0 %v1767
  %v1803 = vpop.f32.mrf.mxu0
  %v1804 = vadd.f32 %v913, %v1803
  %v1805 = vpop.f32.mrf.mxu0
  %v1806 = vpop.f32.mrf.mxu0
  %v1807 = vadd.f32 %v913, %v1806
  %v1808 = vpop.f32.mrf.mxu0
  %1809 = vdwg.mxu0
  %v1810 = vadd.f32 %v1762, %v1804
  %v1811 = vadd.f32 %v1763, %v1807
  %v1812 = vxor.u32 %v1810, 2147483648
  %v1813 = vxor.u32 %v1811, 2147483648
  %v1814 = vmul.f32 %v1812, 1.442695
  %v1815 = vpow.pop %v1814
  %v1816 = vmul.f32 %v1813, 1.442695
  %v1817 = vpow.pop %v1816
  %v1818 = vadd.f32 %v1815, 1.0
  %v1819 = vadd.f32 %v1817, 1.0
  %v1820 = vrcp.pop %v1818
  %v1821 = vmul.f32 1.0, %v1820
  %v1822 = vrcp.pop %v1819
  %v1823 = vmul.f32 1.0, %v1822
  %1826 = vrot.lane.b32.xlu0 %v1804, 64
  %v1827 = vpop.permute.xlu0 %1826
  %1828 = vrot.lane.b32.xlu0 %v1807, 64
  %v1829 = vpop.permute.xlu0 %1828
  %v1832 = vmul.f32 %v1821, %v1827
  %v1833 = vmul.f32 %v1823, %v1829
  %1836 = vrot.lane.b32.xlu0 %v1832, 64
  %v1837 = vpop.permute.xlu0 %1836
  %1838 = vrot.lane.b32.xlu0 %v1833, 64
  %v1839 = vpop.permute.xlu0 %1838
  %v1842 = vadd.f32 %v1762, %v1837
  %v1843 = vadd.f32 %v1763, %v1839
  %v1844 = vtanh.pop %v1842
  %v1845 = vtanh.pop %v1843
  %v1846 = vsub.f32 %v1746, %v1844
  %v1847 = vsub.f32 %v1747, %v1845
  %1850 = vrot.lane.b32.xlu0 %v1846, 96
  %v1851 = vpop.permute.xlu0 %1850
  %1852 = vrot.lane.b32.xlu0 %v1847, 96
  %v1853 = vpop.permute.xlu0 %1852
  %v1856 = vmul.f32 %v1821, %v1851
  %v1857 = vmul.f32 %v1823, %v1853
  %1860 = vrot.lane.b32.xlu0 %v1856, 32
  %v1861 = vpop.permute.xlu0 %1860
  %1862 = vrot.lane.b32.xlu0 %v1857, 32
  %v1863 = vpop.permute.xlu0 %1862
  %v1866 = vadd.f32 %v1844, %v1861
  %v1867 = vadd.f32 %v1845, %v1863
  %v1868 = vpack.c.bf16 %v1867, %v1866
  %v1870 = vunpack.c.l.b16 %v1868
  %v1871 = vunpack.c.h.b16 %v1868
  %v1872 = vpack.c.b16 %v1870, %v1870
  %v1873 = vpack.c.b16 %v1871, %v1871
  %1874 = vrot.lane.b32.xlu0 %v1872, 64
  %v1875 = vpop.permute.xlu0 %1874
  %1876 = vrot.lane.b32.xlu0 %v1873, 64
  %v1877 = vpop.permute.xlu0 %1876
  %1880 = vst.msk [vmem:[#allocation2 + $0x38] sm:$0xf] %vm671, %v1875
  %1881 = vst.msk [vmem:[#allocation2 + $0x3c] sm:$0xf] %vm671, %v1877
  %v1882 = vld [vmem:[#allocation2] sm:$0xf]
  %v1883 = vld [vmem:[#allocation2 + $0x4] sm:$0xf]
  %v1884 = vld [vmem:[#allocation2 + $0x8] sm:$0xf]
  %v1885 = vld [vmem:[#allocation2 + $0xc] sm:$0xf]
  %v1886 = vld [vmem:[#allocation2 + $0x10] sm:$0xf]
  %v1887 = vld [vmem:[#allocation2 + $0x14] sm:$0xf]
  %v1888 = vld [vmem:[#allocation2 + $0x18] sm:$0xf]
  %v1889 = vld [vmem:[#allocation2 + $0x1c] sm:$0xf]
  %v1890 = vld [vmem:[#allocation2 + $0x20] sm:$0xf]
  %v1891 = vld [vmem:[#allocation2 + $0x24] sm:$0xf]
  %v1892 = vld [vmem:[#allocation2 + $0x28] sm:$0xf]
  %v1893 = vld [vmem:[#allocation2 + $0x2c] sm:$0xf]
  %v1894 = vld [vmem:[#allocation2 + $0x30] sm:$0xf]
  %v1895 = vld [vmem:[#allocation2 + $0x34] sm:$0xf]
  %v1896 = vld [vmem:[#allocation2 + $0x38] sm:$0xf]
  %v1897 = vld [vmem:[#allocation2 + $0x3c] sm:$0xf]
  %v1898 = vld [vmem:[%s2 + $0x18] sm:$0xf]
  %v1899 = vld [vmem:[%s2 + $0x1c] sm:$0xf]
  %v1900 = vld [vmem:[%s2 + $0x20] sm:$0xf]
  %v1901 = vld [vmem:[%s2 + $0x24] sm:$0xf]
  %v1902 = vld [vmem:[%s3 + $0x2] sm:$0x1]
  %v1903 = vld [vmem:[%s2 + $0x28] sm:$0xf]
  %v1904 = vld [vmem:[%s2 + $0x2c] sm:$0xf]
  %v1905 = vld [vmem:[%s2 + $0x30] sm:$0xf]
  %v1906 = vld [vmem:[%s2 + $0x34] sm:$0xf]
  %v1907 = vld [vmem:[%s3 + $0x3] sm:$0x1]
  %v1908 = vld [vmem:[%s0] sm:$0xf]
  %v1909 = vld [vmem:[%s0 + $0x4] sm:$0xf]
  %v1910 = vld [vmem:[%s0 + $0x8] sm:$0xf]
  %v1911 = vld [vmem:[%s0 + $0xc] sm:$0xf]
  %v1912 = vld [vmem:[%s0 + $0x10] sm:$0xf]
  %v1913 = vld [vmem:[%s0 + $0x14] sm:$0xf]
  %v1914 = vld [vmem:[%s0 + $0x18] sm:$0xf]
  %v1915 = vld [vmem:[%s0 + $0x1c] sm:$0xf]
  %v1916 = vld [vmem:[%s0 + $0x20] sm:$0xf]
  %v1917 = vld [vmem:[%s0 + $0x24] sm:$0xf]
  %v1918 = vld [vmem:[%s0 + $0x28] sm:$0xf]
  %v1919 = vld [vmem:[%s0 + $0x2c] sm:$0xf]
  %v1920 = vld [vmem:[%s0 + $0x30] sm:$0xf]
  %v1921 = vld [vmem:[%s0 + $0x34] sm:$0xf]
  %v1922 = vld [vmem:[%s0 + $0x38] sm:$0xf]
  %v1923 = vld [vmem:[%s0 + $0x3c] sm:$0xf]
  %v1940 = vunpack.c.l.b16 %v1908
  %v1941 = vunpack.c.l.b16 %v1909
  %v1942 = vunpack.c.l.b16 %v1910
  %v1943 = vunpack.c.l.b16 %v1911
  %v1944 = vunpack.c.l.b16 %v1912
  %v1945 = vunpack.c.l.b16 %v1913
  %v1946 = vunpack.c.l.b16 %v1914
  %v1947 = vunpack.c.l.b16 %v1915
  %v1948 = vunpack.c.l.b16 %v1916
  %v1949 = vunpack.c.l.b16 %v1917
  %v1950 = vunpack.c.l.b16 %v1918
  %v1951 = vunpack.c.l.b16 %v1919
  %v1952 = vunpack.c.l.b16 %v1920
  %v1953 = vunpack.c.l.b16 %v1921
  %v1954 = vunpack.c.l.b16 %v1922
  %v1955 = vunpack.c.l.b16 %v1923
  %v1956 = vpack.c.b16 %v1941, %v1940
  %v1957 = vpack.c.b16 %v1943, %v1942
  %v1958 = vpack.c.b16 %v1945, %v1944
  %v1959 = vpack.c.b16 %v1947, %v1946
  %v1960 = vpack.c.b16 %v1949, %v1948
  %v1961 = vpack.c.b16 %v1951, %v1950
  %v1962 = vpack.c.b16 %v1953, %v1952
  %v1963 = vpack.c.b16 %v1955, %v1954
  %v1988 = vunpack.c.l.b16 %v1882
  %v1989 = vunpack.c.l.b16 %v1883
  %v1990 = vunpack.c.l.b16 %v1884
  %v1991 = vunpack.c.l.b16 %v1885
  %v1992 = vunpack.c.l.b16 %v1886
  %v1993 = vunpack.c.l.b16 %v1887
  %v1994 = vunpack.c.l.b16 %v1888
  %v1995 = vunpack.c.l.b16 %v1889
  %v1996 = vunpack.c.l.b16 %v1890
  %v1997 = vunpack.c.l.b16 %v1891
  %v1998 = vunpack.c.l.b16 %v1892
  %v1999 = vunpack.c.l.b16 %v1893
  %v2000 = vunpack.c.l.b16 %v1894
  %v2001 = vunpack.c.l.b16 %v1895
  %v2002 = vunpack.c.l.b16 %v1896
  %v2003 = vunpack.c.l.b16 %v1897
  %v2004 = vpack.c.b16 %v1989, %v1988
  %v2005 = vpack.c.b16 %v1991, %v1990
  %v2006 = vpack.c.b16 %v1993, %v1992
  %v2007 = vpack.c.b16 %v1995, %v1994
  %v2008 = vpack.c.b16 %v1997, %v1996
  %v2009 = vpack.c.b16 %v1999, %v1998
  %v2010 = vpack.c.b16 %v2001, %v2000
  %v2011 = vpack.c.b16 %v2003, %v2002
  %2020 = vmatprep.subr.bf16.mxu0 0
  %2021 = vmatpush1.bf16.msra.mxu0 %v2011
  %2022 = vmatprep.subr.bf16.mxu0 0
  %2023 = vmatpush1.bf16.msra.mxu0 %v2010
  %2024 = vmatprep.subr.bf16.mxu0 0
  %2025 = vmatpush1.bf16.msra.mxu0 %v2009
  %2026 = vmatprep.subr.bf16.mxu0 0
  %2027 = vmatpush1.bf16.msra.mxu0 %v2008
  %2028 = vmatprep.subr.bf16.mxu0 0
  %2029 = vmatpush1.bf16.msra.mxu0 %v2007
  %2030 = vmatprep.subr.bf16.mxu0 0
  %2031 = vmatpush1.bf16.msra.mxu0 %v2006
  %2032 = vmatprep.subr.bf16.mxu0 0
  %2033 = vmatpush1.bf16.msra.mxu0 %v2005
  %2034 = vmatprep.subr.bf16.mxu0 0
  %2035 = vmatpush1.bf16.msra.mxu0 %v2004
  %2036 = vmatprep.subr.bf16.mxu0 0
  %2037 = vmatpush2.bf16.msra.mxu0 0
  %2038 = vmatprep.subr.bf16.mxu0 0
  %2039 = vmatpush2.bf16.msra.mxu0 0
  %2040 = vmatprep.subr.bf16.mxu0 0
  %2041 = vmatpush2.bf16.msra.mxu0 0
  %2042 = vmatprep.subr.bf16.mxu0 0
  %2043 = vmatpush2.bf16.msra.mxu0 0
  %2044 = vmatprep.subr.bf16.mxu0 0
  %2045 = vmatpush2.bf16.msra.mxu0 0
  %2046 = vmatprep.subr.bf16.mxu0 0
  %2047 = vmatpush2.bf16.msra.mxu0 0
  %2048 = vmatprep.subr.bf16.mxu0 0
  %2049 = vmatpush2.bf16.msra.mxu0 0
  %2050 = vmatprep.subr.bf16.mxu0 0
  %2051 = vmatpush2.bf16.msra.mxu0 0
  %2052 = vmatprep.mubr.bf16.mxu0 0
  %2053 = vmatmul.mubr.bf16.gmra.mxu0 %v1956
  %v2054 = vpop.f32.mrf.mxu0
  %v2055 = vadd.f32 0.0, %v2054
  %v2056 = vpop.f32.mrf.mxu0
  %v2057 = vpop.f32.mrf.mxu0
  %v2058 = vadd.f32 0.0, %v2057
  %v2059 = vpop.f32.mrf.mxu0
  %2060 = vmatprep.mubr.bf16.mxu0 0
  %2061 = vmatmul.mubr.bf16.gmra.mxu0 %v1957
  %v2062 = vpop.f32.mrf.mxu0
  %v2063 = vadd.f32 0.0, %v2062
  %v2064 = vpop.f32.mrf.mxu0
  %v2065 = vpop.f32.mrf.mxu0
  %v2066 = vadd.f32 0.0, %v2065
  %v2067 = vpop.f32.mrf.mxu0
  %2068 = vmatprep.mubr.bf16.mxu0 0
  %2069 = vmatmul.mubr.bf16.gmra.mxu0 %v1958
  %v2070 = vpop.f32.mrf.mxu0
  %v2071 = vadd.f32 0.0, %v2070
  %v2072 = vpop.f32.mrf.mxu0
  %v2073 = vpop.f32.mrf.mxu0
  %v2074 = vadd.f32 0.0, %v2073
  %v2075 = vpop.f32.mrf.mxu0
  %2076 = vmatprep.mubr.bf16.mxu0 0
  %2077 = vmatmul.mubr.bf16.gmra.mxu0 %v1959
  %v2078 = vpop.f32.mrf.mxu0
  %v2079 = vadd.f32 0.0, %v2078
  %v2080 = vpop.f32.mrf.mxu0
  %v2081 = vpop.f32.mrf.mxu0
  %v2082 = vadd.f32 0.0, %v2081
  %v2083 = vpop.f32.mrf.mxu0
  %2084 = vmatprep.mubr.bf16.mxu0 0
  %2085 = vmatmul.mubr.bf16.gmra.mxu0 %v1960
  %v2086 = vpop.f32.mrf.mxu0
  %v2087 = vadd.f32 0.0, %v2086
  %v2088 = vpop.f32.mrf.mxu0
  %v2089 = vpop.f32.mrf.mxu0
  %v2090 = vadd.f32 0.0, %v2089
  %v2091 = vpop.f32.mrf.mxu0
  %2092 = vmatprep.mubr.bf16.mxu0 0
  %2093 = vmatmul.mubr.bf16.gmra.mxu0 %v1961
  %v2094 = vpop.f32.mrf.mxu0
  %v2095 = vadd.f32 0.0, %v2094
  %v2096 = vpop.f32.mrf.mxu0
  %v2097 = vpop.f32.mrf.mxu0
  %v2098 = vadd.f32 0.0, %v2097
  %v2099 = vpop.f32.mrf.mxu0
  %2100 = vmatprep.mubr.bf16.mxu0 0
  %2101 = vmatmul.mubr.bf16.gmra.mxu0 %v1962
  %v2102 = vpop.f32.mrf.mxu0
  %v2103 = vadd.f32 0.0, %v2102
  %v2104 = vpop.f32.mrf.mxu0
  %v2105 = vpop.f32.mrf.mxu0
  %v2106 = vadd.f32 0.0, %v2105
  %v2107 = vpop.f32.mrf.mxu0
  %2108 = vmatprep.mubr.bf16.mxu0 0
  %2109 = vmatmul.mubr.bf16.gmra.mxu0 %v1963
  %v2110 = vpop.f32.mrf.mxu0
  %v2111 = vadd.f32 0.0, %v2110
  %v2112 = vpop.f32.mrf.mxu0
  %v2113 = vpop.f32.mrf.mxu0
  %v2114 = vadd.f32 0.0, %v2113
  %v2115 = vpop.f32.mrf.mxu0
  %2116 = vdwg.mxu0
  %v2117 = vunpack.c.l.bf16 %v1882
  %v2118 = vunpack.c.l.bf16 %v1883
  %v2119 = vunpack.c.l.bf16 %v1884
  %v2120 = vunpack.c.l.bf16 %v1885
  %v2121 = vunpack.c.l.bf16 %v1886
  %v2122 = vunpack.c.l.bf16 %v1887
  %v2123 = vunpack.c.l.bf16 %v1888
  %v2124 = vunpack.c.l.bf16 %v1889
  %v2125 = vunpack.c.l.bf16 %v1890
  %v2126 = vunpack.c.l.bf16 %v1891
  %v2127 = vunpack.c.l.bf16 %v1892
  %v2128 = vunpack.c.l.bf16 %v1893
  %v2129 = vunpack.c.l.bf16 %v1894
  %v2130 = vunpack.c.l.bf16 %v1895
  %v2131 = vunpack.c.l.bf16 %v1896
  %v2132 = vunpack.c.l.bf16 %v1897
  %v2133 = vadd.f32 %v2117, %v2055
  %v2134 = vadd.f32 %v2118, %v2058
  %v2135 = vadd.f32 %v2119, %v2063
  %v2136 = vadd.f32 %v2120, %v2066
  %v2137 = vadd.f32 %v2121, %v2071
  %v2138 = vadd.f32 %v2122, %v2074
  %v2139 = vadd.f32 %v2123, %v2079
  %v2140 = vadd.f32 %v2124, %v2082
  %v2141 = vadd.f32 %v2125, %v2087
  %v2142 = vadd.f32 %v2126, %v2090
  %v2143 = vadd.f32 %v2127, %v2095
  %v2144 = vadd.f32 %v2128, %v2098
  %v2145 = vadd.f32 %v2129, %v2103
  %v2146 = vadd.f32 %v2130, %v2106
  %v2147 = vadd.f32 %v2131, %v2111
  %v2148 = vadd.f32 %v2132, %v2114
  %v2149 = vpack.c.bf16 %v2134, %v2133
  %v2150 = vpack.c.bf16 %v2136, %v2135
  %v2151 = vpack.c.bf16 %v2138, %v2137
  %v2152 = vpack.c.bf16 %v2140, %v2139
  %v2153 = vpack.c.bf16 %v2142, %v2141
  %v2154 = vpack.c.bf16 %v2144, %v2143
  %v2155 = vpack.c.bf16 %v2146, %v2145
  %v2156 = vpack.c.bf16 %v2148, %v2147
  %v2157 = vlaneseq
  %v2158 = vshrl.u32 %v2157, 7
  %v2159 = vsub.s32 0, %v2158
  %v2160 = vrot.slane %v1902, %v2159
  %v2165 = vunpack.c.l.b16 %v1898
  %v2166 = vunpack.c.l.b16 %v1899
  %v2167 = vunpack.c.l.b16 %v1900
  %v2168 = vunpack.c.l.b16 %v1901
  %v2169 = vpack.c.b16 %v2166, %v2165
  %v2170 = vpack.c.b16 %v2168, %v2167
  %v2174 = vsel %vm469, %v2149, 0
  %v2177 = vsel %vm469, %v2150, 0
  %v2180 = vsel %vm469, %v2151, 0
  %v2183 = vsel %vm469, %v2152, 0
  %v2186 = vsel %vm469, %v2153, 0
  %v2189 = vsel %vm469, %v2154, 0
  %v2192 = vsel %vm469, %v2155, 0
  %v2195 = vsel %vm469, %v2156, 0
  %2197 = vmatprep.subr.bf16.mxu0 0
  %2198 = vmatpush1.bf16.msra.mxu0 0
  %2199 = vmatprep.subr.bf16.mxu0 0
  %2200 = vmatpush1.bf16.msra.mxu0 0
  %2201 = vmatprep.subr.bf16.mxu0 0
  %2202 = vmatpush1.bf16.msra.mxu0 0
  %2203 = vmatprep.subr.bf16.mxu0 0
  %2204 = vmatpush1.bf16.msra.mxu0 0
  %2205 = vmatprep.subr.bf16.mxu0 0
  %2206 = vmatpush1.bf16.msra.mxu0 0
  %2207 = vmatprep.subr.bf16.mxu0 0
  %2208 = vmatpush1.bf16.msra.mxu0 0
  %2209 = vmatprep.subr.bf16.mxu0 0
  %2210 = vmatpush1.bf16.msra.mxu0 %v2170
  %2211 = vmatprep.subr.bf16.mxu0 0
  %2212 = vmatpush1.bf16.msra.mxu0 %v2169
  %2213 = vmatprep.subr.bf16.mxu0 0
  %2214 = vmatpush2.bf16.msra.mxu0 0
  %2215 = vmatprep.subr.bf16.mxu0 0
  %2216 = vmatpush2.bf16.msra.mxu0 0
  %2217 = vmatprep.subr.bf16.mxu0 0
  %2218 = vmatpush2.bf16.msra.mxu0 0
  %2219 = vmatprep.subr.bf16.mxu0 0
  %2220 = vmatpush2.bf16.msra.mxu0 0
  %2221 = vmatprep.subr.bf16.mxu0 0
  %2222 = vmatpush2.bf16.msra.mxu0 0
  %2223 = vmatprep.subr.bf16.mxu0 0
  %2224 = vmatpush2.bf16.msra.mxu0 0
  %2225 = vmatprep.subr.bf16.mxu0 0
  %2226 = vmatpush2.bf16.msra.mxu0 0
  %2227 = vmatprep.subr.bf16.mxu0 0
  %2228 = vmatpush2.bf16.msra.mxu0 0
  %2229 = vmatprep.mubr.bf16.mxu0 0
  %2230 = vmatmul.mubr.bf16.gmra.mxu0 %v2174
  %v2231 = vpop.f32.mrf.mxu0
  %v2232 = vadd.f32 %v2160, %v2231
  %v2233 = vpop.f32.mrf.mxu0
  %v2234 = vpop.f32.mrf.mxu0
  %v2235 = vadd.f32 %v2160, %v2234
  %v2236 = vpop.f32.mrf.mxu0
  %2237 = vmatprep.mubr.bf16.mxu0 0
  %2238 = vmatmul.mubr.bf16.gmra.mxu0 %v2177
  %v2239 = vpop.f32.mrf.mxu0
  %v2240 = vadd.f32 %v2160, %v2239
  %v2241 = vpop.f32.mrf.mxu0
  %v2242 = vpop.f32.mrf.mxu0
  %v2243 = vadd.f32 %v2160, %v2242
  %v2244 = vpop.f32.mrf.mxu0
  %2245 = vmatprep.mubr.bf16.mxu0 0
  %2246 = vmatmul.mubr.bf16.gmra.mxu0 %v2180
  %v2247 = vpop.f32.mrf.mxu0
  %v2248 = vadd.f32 %v2160, %v2247
  %v2249 = vpop.f32.mrf.mxu0
  %v2250 = vpop.f32.mrf.mxu0
  %v2251 = vadd.f32 %v2160, %v2250
  %v2252 = vpop.f32.mrf.mxu0
  %2253 = vmatprep.mubr.bf16.mxu0 0
  %2254 = vmatmul.mubr.bf16.gmra.mxu0 %v2183
  %v2255 = vpop.f32.mrf.mxu0
  %v2256 = vadd.f32 %v2160, %v2255
  %v2257 = vpop.f32.mrf.mxu0
  %v2258 = vpop.f32.mrf.mxu0
  %v2259 = vadd.f32 %v2160, %v2258
  %v2260 = vpop.f32.mrf.mxu0
  %2261 = vmatprep.mubr.bf16.mxu0 0
  %2262 = vmatmul.mubr.bf16.gmra.mxu0 %v2186
  %v2263 = vpop.f32.mrf.mxu0
  %v2264 = vadd.f32 %v2160, %v2263
  %v2265 = vpop.f32.mrf.mxu0
  %v2266 = vpop.f32.mrf.mxu0
  %v2267 = vadd.f32 %v2160, %v2266
  %v2268 = vpop.f32.mrf.mxu0
  %2269 = vmatprep.mubr.bf16.mxu0 0
  %2270 = vmatmul.mubr.bf16.gmra.mxu0 %v2189
  %v2271 = vpop.f32.mrf.mxu0
  %v2272 = vadd.f32 %v2160, %v2271
  %v2273 = vpop.f32.mrf.mxu0
  %v2274 = vpop.f32.mrf.mxu0
  %v2275 = vadd.f32 %v2160, %v2274
  %v2276 = vpop.f32.mrf.mxu0
  %2277 = vmatprep.mubr.bf16.mxu0 0
  %2278 = vmatmul.mubr.bf16.gmra.mxu0 %v2192
  %v2279 = vpop.f32.mrf.mxu0
  %v2280 = vadd.f32 %v2160, %v2279
  %v2281 = vpop.f32.mrf.mxu0
  %v2282 = vpop.f32.mrf.mxu0
  %v2283 = vadd.f32 %v2160, %v2282
  %v2284 = vpop.f32.mrf.mxu0
  %2285 = vmatprep.mubr.bf16.mxu0 0
  %2286 = vmatmul.mubr.bf16.gmra.mxu0 %v2195
  %v2287 = vpop.f32.mrf.mxu0
  %v2288 = vadd.f32 %v2160, %v2287
  %v2289 = vpop.f32.mrf.mxu0
  %v2290 = vpop.f32.mrf.mxu0
  %v2291 = vadd.f32 %v2160, %v2290
  %v2292 = vpop.f32.mrf.mxu0
  %2293 = vdwg.mxu0
  %v2294 = vmax.f32 %v2232, 0.0
  %v2295 = vmax.f32 %v2235, 0.0
  %v2296 = vmax.f32 %v2240, 0.0
  %v2297 = vmax.f32 %v2243, 0.0
  %v2298 = vmax.f32 %v2248, 0.0
  %v2299 = vmax.f32 %v2251, 0.0
  %v2300 = vmax.f32 %v2256, 0.0
  %v2301 = vmax.f32 %v2259, 0.0
  %v2302 = vmax.f32 %v2264, 0.0
  %v2303 = vmax.f32 %v2267, 0.0
  %v2304 = vmax.f32 %v2272, 0.0
  %v2305 = vmax.f32 %v2275, 0.0
  %v2306 = vmax.f32 %v2280, 0.0
  %v2307 = vmax.f32 %v2283, 0.0
  %v2308 = vmax.f32 %v2288, 0.0
  %v2309 = vmax.f32 %v2291, 0.0
  %v2310 = vpack.c.bf16 %v2295, %v2294
  %v2311 = vpack.c.bf16 %v2297, %v2296
  %v2312 = vpack.c.bf16 %v2299, %v2298
  %v2313 = vpack.c.bf16 %v2301, %v2300
  %v2314 = vpack.c.bf16 %v2303, %v2302
  %v2315 = vpack.c.bf16 %v2305, %v2304
  %v2316 = vpack.c.bf16 %v2307, %v2306
  %v2317 = vpack.c.bf16 %v2309, %v2308
  %v2318 = vlaneseq
  %v2319 = vshrl.u32 %v2318, 7
  %v2320 = vsub.s32 0, %v2319
  %v2321 = vrot.slane %v1907, %v2320
  %v2326 = vunpack.c.l.b16 %v1903
  %v2327 = vunpack.c.l.b16 %v1904
  %v2328 = vunpack.c.l.b16 %v1905
  %v2329 = vunpack.c.l.b16 %v1906
  %v2330 = vpack.c.b16 %v2327, %v2326
  %v2331 = vpack.c.b16 %v2329, %v2328
  %v2335 = vsel %vm469, %v2310, 0
  %v2338 = vsel %vm469, %v2311, 0
  %v2341 = vsel %vm469, %v2312, 0
  %v2344 = vsel %vm469, %v2313, 0
  %v2347 = vsel %vm469, %v2314, 0
  %v2350 = vsel %vm469, %v2315, 0
  %v2353 = vsel %vm469, %v2316, 0
  %v2356 = vsel %vm469, %v2317, 0
  %2358 = vmatprep.subr.bf16.mxu0 0
  %2359 = vmatpush1.bf16.msra.mxu0 0
  %2360 = vmatprep.subr.bf16.mxu0 0
  %2361 = vmatpush1.bf16.msra.mxu0 0
  %2362 = vmatprep.subr.bf16.mxu0 0
  %2363 = vmatpush1.bf16.msra.mxu0 0
  %2364 = vmatprep.subr.bf16.mxu0 0
  %2365 = vmatpush1.bf16.msra.mxu0 0
  %2366 = vmatprep.subr.bf16.mxu0 0
  %2367 = vmatpush1.bf16.msra.mxu0 0
  %2368 = vmatprep.subr.bf16.mxu0 0
  %2369 = vmatpush1.bf16.msra.mxu0 0
  %2370 = vmatprep.subr.bf16.mxu0 0
  %2371 = vmatpush1.bf16.msra.mxu0 %v2331
  %2372 = vmatprep.subr.bf16.mxu0 0
  %2373 = vmatpush1.bf16.msra.mxu0 %v2330
  %2374 = vmatprep.subr.bf16.mxu0 0
  %2375 = vmatpush2.bf16.msra.mxu0 0
  %2376 = vmatprep.subr.bf16.mxu0 0
  %2377 = vmatpush2.bf16.msra.mxu0 0
  %2378 = vmatprep.subr.bf16.mxu0 0
  %2379 = vmatpush2.bf16.msra.mxu0 0
  %2380 = vmatprep.subr.bf16.mxu0 0
  %2381 = vmatpush2.bf16.msra.mxu0 0
  %2382 = vmatprep.subr.bf16.mxu0 0
  %2383 = vmatpush2.bf16.msra.mxu0 0
  %2384 = vmatprep.subr.bf16.mxu0 0
  %2385 = vmatpush2.bf16.msra.mxu0 0
  %2386 = vmatprep.subr.bf16.mxu0 0
  %2387 = vmatpush2.bf16.msra.mxu0 0
  %2388 = vmatprep.subr.bf16.mxu0 0
  %2389 = vmatpush2.bf16.msra.mxu0 0
  %2390 = vmatprep.mubr.bf16.mxu0 0
  %2391 = vmatmul.mubr.bf16.gmra.mxu0 %v2335
  %v2392 = vpop.f32.mrf.mxu0
  %v2393 = vadd.f32 %v2321, %v2392
  %v2394 = vpop.f32.mrf.mxu0
  %v2395 = vpop.f32.mrf.mxu0
  %v2396 = vadd.f32 %v2321, %v2395
  %v2397 = vpop.f32.mrf.mxu0
  %2398 = vmatprep.mubr.bf16.mxu0 0
  %2399 = vmatmul.mubr.bf16.gmra.mxu0 %v2338
  %v2400 = vpop.f32.mrf.mxu0
  %v2401 = vadd.f32 %v2321, %v2400
  %v2402 = vpop.f32.mrf.mxu0
  %v2403 = vpop.f32.mrf.mxu0
  %v2404 = vadd.f32 %v2321, %v2403
  %v2405 = vpop.f32.mrf.mxu0
  %2406 = vmatprep.mubr.bf16.mxu0 0
  %2407 = vmatmul.mubr.bf16.gmra.mxu0 %v2341
  %v2408 = vpop.f32.mrf.mxu0
  %v2409 = vadd.f32 %v2321, %v2408
  %v2410 = vpop.f32.mrf.mxu0
  %v2411 = vpop.f32.mrf.mxu0
  %v2412 = vadd.f32 %v2321, %v2411
  %v2413 = vpop.f32.mrf.mxu0
  %2414 = vmatprep.mubr.bf16.mxu0 0
  %2415 = vmatmul.mubr.bf16.gmra.mxu0 %v2344
  %v2416 = vpop.f32.mrf.mxu0
  %v2417 = vadd.f32 %v2321, %v2416
  %v2418 = vpop.f32.mrf.mxu0
  %v2419 = vpop.f32.mrf.mxu0
  %v2420 = vadd.f32 %v2321, %v2419
  %v2421 = vpop.f32.mrf.mxu0
  %2422 = vmatprep.mubr.bf16.mxu0 0
  %2423 = vmatmul.mubr.bf16.gmra.mxu0 %v2347
  %v2424 = vpop.f32.mrf.mxu0
  %v2425 = vadd.f32 %v2321, %v2424
  %v2426 = vpop.f32.mrf.mxu0
  %v2427 = vpop.f32.mrf.mxu0
  %v2428 = vadd.f32 %v2321, %v2427
  %v2429 = vpop.f32.mrf.mxu0
  %2430 = vmatprep.mubr.bf16.mxu0 0
  %2431 = vmatmul.mubr.bf16.gmra.mxu0 %v2350
  %v2432 = vpop.f32.mrf.mxu0
  %v2433 = vadd.f32 %v2321, %v2432
  %v2434 = vpop.f32.mrf.mxu0
  %v2435 = vpop.f32.mrf.mxu0
  %v2436 = vadd.f32 %v2321, %v2435
  %v2437 = vpop.f32.mrf.mxu0
  %2438 = vmatprep.mubr.bf16.mxu0 0
  %2439 = vmatmul.mubr.bf16.gmra.mxu0 %v2353
  %v2440 = vpop.f32.mrf.mxu0
  %v2441 = vadd.f32 %v2321, %v2440
  %v2442 = vpop.f32.mrf.mxu0
  %v2443 = vpop.f32.mrf.mxu0
  %v2444 = vadd.f32 %v2321, %v2443
  %v2445 = vpop.f32.mrf.mxu0
  %2446 = vmatprep.mubr.bf16.mxu0 0
  %2447 = vmatmul.mubr.bf16.gmra.mxu0 %v2356
  %v2448 = vpop.f32.mrf.mxu0
  %v2449 = vadd.f32 %v2321, %v2448
  %v2450 = vpop.f32.mrf.mxu0
  %v2451 = vpop.f32.mrf.mxu0
  %v2452 = vadd.f32 %v2321, %v2451
  %v2453 = vpop.f32.mrf.mxu0
  %2454 = vdwg.mxu0
  %v2455 = vmax.f32 %v2393, 0.0
  %v2456 = vmax.f32 %v2396, 0.0
  %v2457 = vmax.f32 %v2401, 0.0
  %v2458 = vmax.f32 %v2404, 0.0
  %v2459 = vmax.f32 %v2409, 0.0
  %v2460 = vmax.f32 %v2412, 0.0
  %v2461 = vmax.f32 %v2417, 0.0
  %v2462 = vmax.f32 %v2420, 0.0
  %v2463 = vmax.f32 %v2425, 0.0
  %v2464 = vmax.f32 %v2428, 0.0
  %v2465 = vmax.f32 %v2433, 0.0
  %v2466 = vmax.f32 %v2436, 0.0
  %v2467 = vmax.f32 %v2441, 0.0
  %v2468 = vmax.f32 %v2444, 0.0
  %v2469 = vmax.f32 %v2449, 0.0
  %v2470 = vmax.f32 %v2452, 0.0
  %v2471 = vpack.c.bf16 %v2456, %v2455
  %v2472 = vpack.c.bf16 %v2458, %v2457
  %v2473 = vpack.c.bf16 %v2460, %v2459
  %v2474 = vpack.c.bf16 %v2462, %v2461
  %v2475 = vpack.c.bf16 %v2464, %v2463
  %v2476 = vpack.c.bf16 %v2466, %v2465
  %v2477 = vpack.c.bf16 %v2468, %v2467
  %v2478 = vpack.c.bf16 %v2470, %v2469
  %v2487 = vunpack.c.l.b16 %v2471
  %v2488 = vunpack.c.h.b16 %v2471
  %v2489 = vunpack.c.l.b16 %v2472
  %v2490 = vunpack.c.h.b16 %v2472
  %v2491 = vunpack.c.l.b16 %v2473
  %v2492 = vunpack.c.h.b16 %v2473
  %v2493 = vunpack.c.l.b16 %v2474
  %v2494 = vunpack.c.h.b16 %v2474
  %v2495 = vunpack.c.l.b16 %v2475
  %v2496 = vunpack.c.h.b16 %v2475
  %v2497 = vunpack.c.l.b16 %v2476
  %v2498 = vunpack.c.h.b16 %v2476
  %v2499 = vunpack.c.l.b16 %v2477
  %v2500 = vunpack.c.h.b16 %v2477
  %v2501 = vunpack.c.l.b16 %v2478
  %v2502 = vunpack.c.h.b16 %v2478
  %v2503 = vpack.c.b16 %v2487, %v2487
  %v2504 = vpack.c.b16 %v2488, %v2488
  %v2505 = vpack.c.b16 %v2489, %v2489
  %v2506 = vpack.c.b16 %v2490, %v2490
  %v2507 = vpack.c.b16 %v2491, %v2491
  %v2508 = vpack.c.b16 %v2492, %v2492
  %v2509 = vpack.c.b16 %v2493, %v2493
  %v2510 = vpack.c.b16 %v2494, %v2494
  %v2511 = vpack.c.b16 %v2495, %v2495
  %v2512 = vpack.c.b16 %v2496, %v2496
  %v2513 = vpack.c.b16 %v2497, %v2497
  %v2514 = vpack.c.b16 %v2498, %v2498
  %v2515 = vpack.c.b16 %v2499, %v2499
  %v2516 = vpack.c.b16 %v2500, %v2500
  %v2517 = vpack.c.b16 %v2501, %v2501
  %v2518 = vpack.c.b16 %v2502, %v2502
  %2535 = vst.msk [vmem:[#allocation2] sm:$0xf] %vm671, %v2503
  %2536 = vst.msk [vmem:[#allocation2 + $0x4] sm:$0xf] %vm671, %v2504
  %2537 = vst.msk [vmem:[#allocation2 + $0x8] sm:$0xf] %vm671, %v2505
  %2538 = vst.msk [vmem:[#allocation2 + $0xc] sm:$0xf] %vm671, %v2506
  %2539 = vst.msk [vmem:[#allocation2 + $0x10] sm:$0xf] %vm671, %v2507
  %2540 = vst.msk [vmem:[#allocation2 + $0x14] sm:$0xf] %vm671, %v2508
  %2541 = vst.msk [vmem:[#allocation2 + $0x18] sm:$0xf] %vm671, %v2509
  %2542 = vst.msk [vmem:[#allocation2 + $0x1c] sm:$0xf] %vm671, %v2510
  %2543 = vst.msk [vmem:[#allocation2 + $0x20] sm:$0xf] %vm671, %v2511
  %2544 = vst.msk [vmem:[#allocation2 + $0x24] sm:$0xf] %vm671, %v2512
  %2545 = vst.msk [vmem:[#allocation2 + $0x28] sm:$0xf] %vm671, %v2513
  %2546 = vst.msk [vmem:[#allocation2 + $0x2c] sm:$0xf] %vm671, %v2514
  %2547 = vst.msk [vmem:[#allocation2 + $0x30] sm:$0xf] %vm671, %v2515
  %2548 = vst.msk [vmem:[#allocation2 + $0x34] sm:$0xf] %vm671, %v2516
  %2549 = vst.msk [vmem:[#allocation2 + $0x38] sm:$0xf] %vm671, %v2517
  %2550 = vst.msk [vmem:[#allocation2 + $0x3c] sm:$0xf] %vm671, %v2518
  %v2551 = vld [vmem:[#allocation2] sm:$0xf]
  %v2552 = vld [vmem:[#allocation2 + $0x4] sm:$0xf]
  %v2553 = vld [vmem:[#allocation2 + $0x8] sm:$0xf]
  %v2554 = vld [vmem:[#allocation2 + $0xc] sm:$0xf]
  %v2555 = vld [vmem:[#allocation2 + $0x10] sm:$0xf]
  %v2556 = vld [vmem:[#allocation2 + $0x14] sm:$0xf]
  %v2557 = vld [vmem:[#allocation2 + $0x18] sm:$0xf]
  %v2558 = vld [vmem:[#allocation2 + $0x1c] sm:$0xf]
  %v2559 = vld [vmem:[#allocation2 + $0x20] sm:$0xf]
  %v2560 = vld [vmem:[#allocation2 + $0x24] sm:$0xf]
  %v2561 = vld [vmem:[#allocation2 + $0x28] sm:$0xf]
  %v2562 = vld [vmem:[#allocation2 + $0x2c] sm:$0xf]
  %v2563 = vld [vmem:[#allocation2 + $0x30] sm:$0xf]
  %v2564 = vld [vmem:[#allocation2 + $0x34] sm:$0xf]
  %v2565 = vld [vmem:[#allocation2 + $0x38] sm:$0xf]
  %v2566 = vld [vmem:[#allocation2 + $0x3c] sm:$0xf]
  %v2567 = vld [vmem:[%s2 + $0x38] sm:$0xf]
  %v2568 = vld [vmem:[%s2 + $0x3c] sm:$0xf]
  %v2569 = vld [vmem:[%s2 + $0x40] sm:$0xf]
  %v2570 = vld [vmem:[%s2 + $0x44] sm:$0xf]
  %v2571 = vld [vmem:[%s3 + $0x4] sm:$0x1]
  %v2572 = vlaneseq
  %v2573 = vshrl.u32 %v2572, 7
  %v2574 = vsub.s32 0, %v2573
  %v2575 = vrot.slane %v2571, %v2574
  %v2592 = vunpack.c.l.b16 %v2551
  %v2593 = vunpack.c.l.b16 %v2552
  %v2594 = vunpack.c.l.b16 %v2553
  %v2595 = vunpack.c.l.b16 %v2554
  %v2596 = vunpack.c.l.b16 %v2555
  %v2597 = vunpack.c.l.b16 %v2556
  %v2598 = vunpack.c.l.b16 %v2557
  %v2599 = vunpack.c.l.b16 %v2558
  %v2600 = vunpack.c.l.b16 %v2559
  %v2601 = vunpack.c.l.b16 %v2560
  %v2602 = vunpack.c.l.b16 %v2561
  %v2603 = vunpack.c.l.b16 %v2562
  %v2604 = vunpack.c.l.b16 %v2563
  %v2605 = vunpack.c.l.b16 %v2564
  %v2606 = vunpack.c.l.b16 %v2565
  %v2607 = vunpack.c.l.b16 %v2566
  %v2608 = vpack.c.b16 %v2593, %v2592
  %v2609 = vpack.c.b16 %v2595, %v2594
  %v2610 = vpack.c.b16 %v2597, %v2596
  %v2611 = vpack.c.b16 %v2599, %v2598
  %v2612 = vpack.c.b16 %v2601, %v2600
  %v2613 = vpack.c.b16 %v2603, %v2602
  %v2614 = vpack.c.b16 %v2605, %v2604
  %v2615 = vpack.c.b16 %v2607, %v2606
  %v2620 = vunpack.c.l.b16 %v2567
  %v2621 = vunpack.c.l.b16 %v2568
  %v2622 = vunpack.c.l.b16 %v2569
  %v2623 = vunpack.c.l.b16 %v2570
  %v2624 = vpack.c.b16 %v2621, %v2620
  %v2625 = vpack.c.b16 %v2623, %v2622
  %v2629 = vsel %vm469, %v2608, 0
  %v2632 = vsel %vm469, %v2609, 0
  %v2635 = vsel %vm469, %v2610, 0
  %v2638 = vsel %vm469, %v2611, 0
  %v2641 = vsel %vm469, %v2612, 0
  %v2644 = vsel %vm469, %v2613, 0
  %v2647 = vsel %vm469, %v2614, 0
  %v2650 = vsel %vm469, %v2615, 0
  %2652 = vmatprep.subr.bf16.mxu0 0
  %2653 = vmatpush1.bf16.msra.mxu0 0
  %2654 = vmatprep.subr.bf16.mxu0 0
  %2655 = vmatpush1.bf16.msra.mxu0 0
  %2656 = vmatprep.subr.bf16.mxu0 0
  %2657 = vmatpush1.bf16.msra.mxu0 0
  %2658 = vmatprep.subr.bf16.mxu0 0
  %2659 = vmatpush1.bf16.msra.mxu0 0
  %2660 = vmatprep.subr.bf16.mxu0 0
  %2661 = vmatpush1.bf16.msra.mxu0 0
  %2662 = vmatprep.subr.bf16.mxu0 0
  %2663 = vmatpush1.bf16.msra.mxu0 0
  %2664 = vmatprep.subr.bf16.mxu0 0
  %2665 = vmatpush1.bf16.msra.mxu0 %v2625
  %2666 = vmatprep.subr.bf16.mxu0 0
  %2667 = vmatpush1.bf16.msra.mxu0 %v2624
  %2668 = vmatprep.subr.bf16.mxu0 0
  %2669 = vmatpush2.bf16.msra.mxu0 0
  %2670 = vmatprep.subr.bf16.mxu0 0
  %2671 = vmatpush2.bf16.msra.mxu0 0
  %2672 = vmatprep.subr.bf16.mxu0 0
  %2673 = vmatpush2.bf16.msra.mxu0 0
  %2674 = vmatprep.subr.bf16.mxu0 0
  %2675 = vmatpush2.bf16.msra.mxu0 0
  %2676 = vmatprep.subr.bf16.mxu0 0
  %2677 = vmatpush2.bf16.msra.mxu0 0
  %2678 = vmatprep.subr.bf16.mxu0 0
  %2679 = vmatpush2.bf16.msra.mxu0 0
  %2680 = vmatprep.subr.bf16.mxu0 0
  %2681 = vmatpush2.bf16.msra.mxu0 0
  %2682 = vmatprep.subr.bf16.mxu0 0
  %2683 = vmatpush2.bf16.msra.mxu0 0
  %2684 = vmatprep.mubr.bf16.mxu0 0
  %2685 = vmatmul.mubr.bf16.gmra.mxu0 %v2629
  %v2686 = vpop.f32.mrf.mxu0
  %v2687 = vadd.f32 %v2575, %v2686
  %v2688 = vpop.f32.mrf.mxu0
  %v2689 = vpop.f32.mrf.mxu0
  %v2690 = vadd.f32 %v2575, %v2689
  %v2691 = vpop.f32.mrf.mxu0
  %2692 = vmatprep.mubr.bf16.mxu0 0
  %2693 = vmatmul.mubr.bf16.gmra.mxu0 %v2632
  %v2694 = vpop.f32.mrf.mxu0
  %v2695 = vadd.f32 %v2575, %v2694
  %v2696 = vpop.f32.mrf.mxu0
  %v2697 = vpop.f32.mrf.mxu0
  %v2698 = vadd.f32 %v2575, %v2697
  %v2699 = vpop.f32.mrf.mxu0
  %2700 = vmatprep.mubr.bf16.mxu0 0
  %2701 = vmatmul.mubr.bf16.gmra.mxu0 %v2635
  %v2702 = vpop.f32.mrf.mxu0
  %v2703 = vadd.f32 %v2575, %v2702
  %v2704 = vpop.f32.mrf.mxu0
  %v2705 = vpop.f32.mrf.mxu0
  %v2706 = vadd.f32 %v2575, %v2705
  %v2707 = vpop.f32.mrf.mxu0
  %2708 = vmatprep.mubr.bf16.mxu0 0
  %2709 = vmatmul.mubr.bf16.gmra.mxu0 %v2638
  %v2710 = vpop.f32.mrf.mxu0
  %v2711 = vadd.f32 %v2575, %v2710
  %v2712 = vpop.f32.mrf.mxu0
  %v2713 = vpop.f32.mrf.mxu0
  %v2714 = vadd.f32 %v2575, %v2713
  %v2715 = vpop.f32.mrf.mxu0
  %2716 = vmatprep.mubr.bf16.mxu0 0
  %2717 = vmatmul.mubr.bf16.gmra.mxu0 %v2641
  %v2718 = vpop.f32.mrf.mxu0
  %v2719 = vadd.f32 %v2575, %v2718
  %v2720 = vpop.f32.mrf.mxu0
  %v2721 = vpop.f32.mrf.mxu0
  %v2722 = vadd.f32 %v2575, %v2721
  %v2723 = vpop.f32.mrf.mxu0
  %2724 = vmatprep.mubr.bf16.mxu0 0
  %2725 = vmatmul.mubr.bf16.gmra.mxu0 %v2644
  %v2726 = vpop.f32.mrf.mxu0
  %v2727 = vadd.f32 %v2575, %v2726
  %v2728 = vpop.f32.mrf.mxu0
  %v2729 = vpop.f32.mrf.mxu0
  %v2730 = vadd.f32 %v2575, %v2729
  %v2731 = vpop.f32.mrf.mxu0
  %2732 = vmatprep.mubr.bf16.mxu0 0
  %2733 = vmatmul.mubr.bf16.gmra.mxu0 %v2647
  %v2734 = vpop.f32.mrf.mxu0
  %v2735 = vadd.f32 %v2575, %v2734
  %v2736 = vpop.f32.mrf.mxu0
  %v2737 = vpop.f32.mrf.mxu0
  %v2738 = vadd.f32 %v2575, %v2737
  %v2739 = vpop.f32.mrf.mxu0
  %2740 = vmatprep.mubr.bf16.mxu0 0
  %2741 = vmatmul.mubr.bf16.gmra.mxu0 %v2650
  %v2742 = vpop.f32.mrf.mxu0
  %v2743 = vadd.f32 %v2575, %v2742
  %v2744 = vpop.f32.mrf.mxu0
  %v2745 = vpop.f32.mrf.mxu0
  %v2746 = vadd.f32 %v2575, %v2745
  %v2747 = vpop.f32.mrf.mxu0
  %2748 = vdwg.mxu0
  %2749 = vst.msk [vmem:[#allocation3] sm:$0xff] %vm886, %v2687
  %2750 = vst.msk [vmem:[#allocation3 + $0x8] sm:$0xff] %vm886, %v2690
  %2751 = vst.msk [vmem:[#allocation3 + $0x10] sm:$0xff] %vm886, %v2695
  %2752 = vst.msk [vmem:[#allocation3 + $0x18] sm:$0xff] %vm886, %v2698
  %2753 = vst.msk [vmem:[#allocation3 + $0x20] sm:$0xff] %vm886, %v2703
  %2754 = vst.msk [vmem:[#allocation3 + $0x28] sm:$0xff] %vm886, %v2706
  %2755 = vst.msk [vmem:[#allocation3 + $0x30] sm:$0xff] %vm886, %v2711
  %2756 = vst.msk [vmem:[#allocation3 + $0x38] sm:$0xff] %vm886, %v2714
  %2757 = vst.msk [vmem:[#allocation3 + $0x40] sm:$0xff] %vm886, %v2719
  %2758 = vst.msk [vmem:[#allocation3 + $0x48] sm:$0xff] %vm886, %v2722
  %2759 = vst.msk [vmem:[#allocation3 + $0x50] sm:$0xff] %vm886, %v2727
  %2760 = vst.msk [vmem:[#allocation3 + $0x58] sm:$0xff] %vm886, %v2730
  %2761 = vst.msk [vmem:[#allocation3 + $0x60] sm:$0xff] %vm886, %v2735
  %2762 = vst.msk [vmem:[#allocation3 + $0x68] sm:$0xff] %vm886, %v2738
  %2763 = vst.msk [vmem:[#allocation3 + $0x70] sm:$0xff] %vm886, %v2743
  %2764 = vst.msk [vmem:[#allocation3 + $0x78] sm:$0xff] %vm886, %v2746
  %v2765 = vld [vmem:[%s2 + $0x48] sm:$0xf]
  %v2766 = vld [vmem:[%s2 + $0x4c] sm:$0xf]
  %v2767 = vld [vmem:[%s2 + $0x50] sm:$0xf]
  %v2768 = vld [vmem:[%s2 + $0x54] sm:$0xf]
  %v2769 = vld [vmem:[%s3 + $0x5] sm:$0x1]
  %v2770 = vld [vmem:[#allocation3] sm:$0xff]
  %v2771 = vld [vmem:[#allocation3 + $0x8] sm:$0xff]
  %v2772 = vlaneseq
  %v2773 = vshrl.u32 %v2772, 7
  %v2774 = vsub.s32 0, %v2773
  %v2775 = vrot.slane %v2769, %v2774
  %v2780 = vunpack.c.l.b16 %v2765
  %v2781 = vunpack.c.l.b16 %v2766
  %v2782 = vunpack.c.l.b16 %v2767
  %v2783 = vunpack.c.l.b16 %v2768
  %v2784 = vpack.c.b16 %v2781, %v2780
  %v2785 = vpack.c.b16 %v2783, %v2782
  %2788 = vmatprep.subr.bf16.mxu0 0
  %2789 = vmatpush1.bf16.msra.mxu0 0
  %2790 = vmatprep.subr.bf16.mxu0 0
  %2791 = vmatpush1.bf16.msra.mxu0 0
  %2792 = vmatprep.subr.bf16.mxu0 0
  %2793 = vmatpush1.bf16.msra.mxu0 0
  %2794 = vmatprep.subr.bf16.mxu0 0
  %2795 = vmatpush1.bf16.msra.mxu0 0
  %2796 = vmatprep.subr.bf16.mxu0 0
  %2797 = vmatpush1.bf16.msra.mxu0 0
  %2798 = vmatprep.subr.bf16.mxu0 0
  %2799 = vmatpush1.bf16.msra.mxu0 0
  %2800 = vmatprep.subr.bf16.mxu0 0
  %2801 = vmatpush1.bf16.msra.mxu0 %v2785
  %2802 = vmatprep.subr.bf16.mxu0 0
  %2803 = vmatpush1.bf16.msra.mxu0 %v2784
  %2804 = vmatprep.subr.bf16.mxu0 0
  %2805 = vmatpush2.bf16.msra.mxu0 0
  %2806 = vmatprep.subr.bf16.mxu0 0
  %2807 = vmatpush2.bf16.msra.mxu0 0
  %2808 = vmatprep.subr.bf16.mxu0 0
  %2809 = vmatpush2.bf16.msra.mxu0 0
  %2810 = vmatprep.subr.bf16.mxu0 0
  %2811 = vmatpush2.bf16.msra.mxu0 0
  %2812 = vmatprep.subr.bf16.mxu0 0
  %2813 = vmatpush2.bf16.msra.mxu0 0
  %2814 = vmatprep.subr.bf16.mxu0 0
  %2815 = vmatpush2.bf16.msra.mxu0 0
  %2816 = vmatprep.subr.bf16.mxu0 0
  %2817 = vmatpush2.bf16.msra.mxu0 0
  %2818 = vmatprep.subr.bf16.mxu0 0
  %2819 = vmatpush2.bf16.msra.mxu0 0
  %2820 = vmatprep.mubr.bf16.mxu0 0
  %2821 = vmatmul.mubr.bf16.gmra.mxu0 %v927
  %v2822 = vpop.f32.mrf.mxu0
  %v2823 = vadd.f32 %v2775, %v2822
  %v2824 = vpop.f32.mrf.mxu0
  %v2825 = vpop.f32.mrf.mxu0
  %v2826 = vadd.f32 %v2775, %v2825
  %v2827 = vpop.f32.mrf.mxu0
  %2828 = vdwg.mxu0
  %v2829 = vadd.f32 %v2770, %v2823
  %v2830 = vadd.f32 %v2771, %v2826
  %v2831 = vxor.u32 %v2829, 2147483648
  %v2832 = vxor.u32 %v2830, 2147483648
  %v2833 = vmul.f32 %v2831, 1.442695
  %v2834 = vpow.pop %v2833
  %v2835 = vmul.f32 %v2832, 1.442695
  %v2836 = vpow.pop %v2835
  %v2837 = vadd.f32 %v2834, 1.0
  %v2838 = vadd.f32 %v2836, 1.0
  %v2839 = vrcp.pop %v2837
  %v2840 = vmul.f32 1.0, %v2839
  %v2841 = vrcp.pop %v2838
  %v2842 = vmul.f32 1.0, %v2841
  %2845 = vrot.lane.b32.xlu0 %v2823, 64
  %v2846 = vpop.permute.xlu0 %2845
  %2847 = vrot.lane.b32.xlu0 %v2826, 64
  %v2848 = vpop.permute.xlu0 %2847
  %v2851 = vmul.f32 %v2840, %v2846
  %v2852 = vmul.f32 %v2842, %v2848
  %2855 = vrot.lane.b32.xlu0 %v2851, 64
  %v2856 = vpop.permute.xlu0 %2855
  %2857 = vrot.lane.b32.xlu0 %v2852, 64
  %v2858 = vpop.permute.xlu0 %2857
  %v2861 = vadd.f32 %v2770, %v2856
  %v2862 = vadd.f32 %v2771, %v2858
  %v2863 = vtanh.pop %v2861
  %v2864 = vtanh.pop %v2862
  %v2865 = vsub.f32 0.0, %v2863
  %v2866 = vsub.f32 0.0, %v2864
  %2869 = vrot.lane.b32.xlu0 %v2865, 96
  %v2870 = vpop.permute.xlu0 %2869
  %2871 = vrot.lane.b32.xlu0 %v2866, 96
  %v2872 = vpop.permute.xlu0 %2871
  %v2875 = vmul.f32 %v2840, %v2870
  %v2876 = vmul.f32 %v2842, %v2872
  %2879 = vrot.lane.b32.xlu0 %v2875, 32
  %v2880 = vpop.permute.xlu0 %2879
  %2881 = vrot.lane.b32.xlu0 %v2876, 32
  %v2882 = vpop.permute.xlu0 %2881
  %v2885 = vadd.f32 %v2863, %v2880
  %v2886 = vadd.f32 %v2864, %v2882
  %v2887 = vld [vmem:[#allocation3 + $0x10] sm:$0xff]
  %v2888 = vld [vmem:[#allocation3 + $0x18] sm:$0xff]
  %v2889 = vpack.c.bf16 %v2886, %v2885
  %2891 = vrot.lane.b32.xlu0 %v2889, 64
  %v2892 = vpop.permute.xlu0 %2891
  %v2894 = vsel %vm469, %v2892, 0
  %2896 = vmatprep.subr.bf16.mxu0 0
  %2897 = vmatpush1.bf16.msra.mxu0 0
  %2898 = vmatprep.subr.bf16.mxu0 0
  %2899 = vmatpush1.bf16.msra.mxu0 0
  %2900 = vmatprep.subr.bf16.mxu0 0
  %2901 = vmatpush1.bf16.msra.mxu0 0
  %2902 = vmatprep.subr.bf16.mxu0 0
  %2903 = vmatpush1.bf16.msra.mxu0 0
  %2904 = vmatprep.subr.bf16.mxu0 0
  %2905 = vmatpush1.bf16.msra.mxu0 0
  %2906 = vmatprep.subr.bf16.mxu0 0
  %2907 = vmatpush1.bf16.msra.mxu0 0
  %2908 = vmatprep.subr.bf16.mxu0 0
  %2909 = vmatpush1.bf16.msra.mxu0 %v2785
  %2910 = vmatprep.subr.bf16.mxu0 0
  %2911 = vmatpush1.bf16.msra.mxu0 %v2784
  %2912 = vmatprep.subr.bf16.mxu0 0
  %2913 = vmatpush2.bf16.msra.mxu0 0
  %2914 = vmatprep.subr.bf16.mxu0 0
  %2915 = vmatpush2.bf16.msra.mxu0 0
  %2916 = vmatprep.subr.bf16.mxu0 0
  %2917 = vmatpush2.bf16.msra.mxu0 0
  %2918 = vmatprep.subr.bf16.mxu0 0
  %2919 = vmatpush2.bf16.msra.mxu0 0
  %2920 = vmatprep.subr.bf16.mxu0 0
  %2921 = vmatpush2.bf16.msra.mxu0 0
  %2922 = vmatprep.subr.bf16.mxu0 0
  %2923 = vmatpush2.bf16.msra.mxu0 0
  %2924 = vmatprep.subr.bf16.mxu0 0
  %2925 = vmatpush2.bf16.msra.mxu0 0
  %2926 = vmatprep.subr.bf16.mxu0 0
  %2927 = vmatpush2.bf16.msra.mxu0 0
  %2928 = vmatprep.mubr.bf16.mxu0 0
  %2929 = vmatmul.mubr.bf16.gmra.mxu0 %v2894
  %v2930 = vpop.f32.mrf.mxu0
  %v2931 = vadd.f32 %v2775, %v2930
  %v2932 = vpop.f32.mrf.mxu0
  %v2933 = vpop.f32.mrf.mxu0
  %v2934 = vadd.f32 %v2775, %v2933
  %v2935 = vpop.f32.mrf.mxu0
  %2936 = vdwg.mxu0
  %v2937 = vadd.f32 %v2887, %v2931
  %v2938 = vadd.f32 %v2888, %v2934
  %v2939 = vxor.u32 %v2937, 2147483648
  %v2940 = vxor.u32 %v2938, 2147483648
  %v2941 = vmul.f32 %v2939, 1.442695
  %v2942 = vpow.pop %v2941
  %v2943 = vmul.f32 %v2940, 1.442695
  %v2944 = vpow.pop %v2943
  %v2945 = vadd.f32 %v2942, 1.0
  %v2946 = vadd.f32 %v2944, 1.0
  %v2947 = vrcp.pop %v2945
  %v2948 = vmul.f32 1.0, %v2947
  %v2949 = vrcp.pop %v2946
  %v2950 = vmul.f32 1.0, %v2949
  %2953 = vrot.lane.b32.xlu0 %v2931, 64
  %v2954 = vpop.permute.xlu0 %2953
  %2955 = vrot.lane.b32.xlu0 %v2934, 64
  %v2956 = vpop.permute.xlu0 %2955
  %v2959 = vmul.f32 %v2948, %v2954
  %v2960 = vmul.f32 %v2950, %v2956
  %2963 = vrot.lane.b32.xlu0 %v2959, 64
  %v2964 = vpop.permute.xlu0 %2963
  %2965 = vrot.lane.b32.xlu0 %v2960, 64
  %v2966 = vpop.permute.xlu0 %2965
  %v2969 = vadd.f32 %v2887, %v2964
  %v2970 = vadd.f32 %v2888, %v2966
  %v2971 = vtanh.pop %v2969
  %v2972 = vtanh.pop %v2970
  %v2973 = vsub.f32 %v2885, %v2971
  %v2974 = vsub.f32 %v2886, %v2972
  %2977 = vrot.lane.b32.xlu0 %v2973, 96
  %v2978 = vpop.permute.xlu0 %2977
  %2979 = vrot.lane.b32.xlu0 %v2974, 96
  %v2980 = vpop.permute.xlu0 %2979
  %v2983 = vmul.f32 %v2948, %v2978
  %v2984 = vmul.f32 %v2950, %v2980
  %2987 = vrot.lane.b32.xlu0 %v2983, 32
  %v2988 = vpop.permute.xlu0 %2987
  %2989 = vrot.lane.b32.xlu0 %v2984, 32
  %v2990 = vpop.permute.xlu0 %2989
  %v2993 = vadd.f32 %v2971, %v2988
  %v2994 = vadd.f32 %v2972, %v2990
  %v2995 = vld [vmem:[#allocation3 + $0x20] sm:$0xff]
  %v2996 = vld [vmem:[#allocation3 + $0x28] sm:$0xff]
  %v2997 = vpack.c.bf16 %v2994, %v2993
  %2999 = vrot.lane.b32.xlu0 %v2997, 64
  %v3000 = vpop.permute.xlu0 %2999
  %v3002 = vsel %vm469, %v3000, 0
  %3004 = vmatprep.subr.bf16.mxu0 0
  %3005 = vmatpush1.bf16.msra.mxu0 0
  %3006 = vmatprep.subr.bf16.mxu0 0
  %3007 = vmatpush1.bf16.msra.mxu0 0
  %3008 = vmatprep.subr.bf16.mxu0 0
  %3009 = vmatpush1.bf16.msra.mxu0 0
  %3010 = vmatprep.subr.bf16.mxu0 0
  %3011 = vmatpush1.bf16.msra.mxu0 0
  %3012 = vmatprep.subr.bf16.mxu0 0
  %3013 = vmatpush1.bf16.msra.mxu0 0
  %3014 = vmatprep.subr.bf16.mxu0 0
  %3015 = vmatpush1.bf16.msra.mxu0 0
  %3016 = vmatprep.subr.bf16.mxu0 0
  %3017 = vmatpush1.bf16.msra.mxu0 %v2785
  %3018 = vmatprep.subr.bf16.mxu0 0
  %3019 = vmatpush1.bf16.msra.mxu0 %v2784
  %3020 = vmatprep.subr.bf16.mxu0 0
  %3021 = vmatpush2.bf16.msra.mxu0 0
  %3022 = vmatprep.subr.bf16.mxu0 0
  %3023 = vmatpush2.bf16.msra.mxu0 0
  %3024 = vmatprep.subr.bf16.mxu0 0
  %3025 = vmatpush2.bf16.msra.mxu0 0
  %3026 = vmatprep.subr.bf16.mxu0 0
  %3027 = vmatpush2.bf16.msra.mxu0 0
  %3028 = vmatprep.subr.bf16.mxu0 0
  %3029 = vmatpush2.bf16.msra.mxu0 0
  %3030 = vmatprep.subr.bf16.mxu0 0
  %3031 = vmatpush2.bf16.msra.mxu0 0
  %3032 = vmatprep.subr.bf16.mxu0 0
  %3033 = vmatpush2.bf16.msra.mxu0 0
  %3034 = vmatprep.subr.bf16.mxu0 0
  %3035 = vmatpush2.bf16.msra.mxu0 0
  %3036 = vmatprep.mubr.bf16.mxu0 0
  %3037 = vmatmul.mubr.bf16.gmra.mxu0 %v3002
  %v3038 = vpop.f32.mrf.mxu0
  %v3039 = vadd.f32 %v2775, %v3038
  %v3040 = vpop.f32.mrf.mxu0
  %v3041 = vpop.f32.mrf.mxu0
  %v3042 = vadd.f32 %v2775, %v3041
  %v3043 = vpop.f32.mrf.mxu0
  %3044 = vdwg.mxu0
  %v3045 = vadd.f32 %v2995, %v3039
  %v3046 = vadd.f32 %v2996, %v3042
  %v3047 = vxor.u32 %v3045, 2147483648
  %v3048 = vxor.u32 %v3046, 2147483648
  %v3049 = vmul.f32 %v3047, 1.442695
  %v3050 = vpow.pop %v3049
  %v3051 = vmul.f32 %v3048, 1.442695
  %v3052 = vpow.pop %v3051
  %v3053 = vadd.f32 %v3050, 1.0
  %v3054 = vadd.f32 %v3052, 1.0
  %v3055 = vrcp.pop %v3053
  %v3056 = vmul.f32 1.0, %v3055
  %v3057 = vrcp.pop %v3054
  %v3058 = vmul.f32 1.0, %v3057
  %3061 = vrot.lane.b32.xlu0 %v3039, 64
  %v3062 = vpop.permute.xlu0 %3061
  %3063 = vrot.lane.b32.xlu0 %v3042, 64
  %v3064 = vpop.permute.xlu0 %3063
  %v3067 = vmul.f32 %v3056, %v3062
  %v3068 = vmul.f32 %v3058, %v3064
  %3071 = vrot.lane.b32.xlu0 %v3067, 64
  %v3072 = vpop.permute.xlu0 %3071
  %3073 = vrot.lane.b32.xlu0 %v3068, 64
  %v3074 = vpop.permute.xlu0 %3073
  %v3077 = vadd.f32 %v2995, %v3072
  %v3078 = vadd.f32 %v2996, %v3074
  %v3079 = vtanh.pop %v3077
  %v3080 = vtanh.pop %v3078
  %v3081 = vsub.f32 %v2993, %v3079
  %v3082 = vsub.f32 %v2994, %v3080
  %3085 = vrot.lane.b32.xlu0 %v3081, 96
  %v3086 = vpop.permute.xlu0 %3085
  %3087 = vrot.lane.b32.xlu0 %v3082, 96
  %v3088 = vpop.permute.xlu0 %3087
  %v3091 = vmul.f32 %v3056, %v3086
  %v3092 = vmul.f32 %v3058, %v3088
  %3095 = vrot.lane.b32.xlu0 %v3091, 32
  %v3096 = vpop.permute.xlu0 %3095
  %3097 = vrot.lane.b32.xlu0 %v3092, 32
  %v3098 = vpop.permute.xlu0 %3097
  %v3101 = vadd.f32 %v3079, %v3096
  %v3102 = vadd.f32 %v3080, %v3098
  %v3103 = vld [vmem:[#allocation3 + $0x30] sm:$0xff]
  %v3104 = vld [vmem:[#allocation3 + $0x38] sm:$0xff]
  %v3105 = vpack.c.bf16 %v3102, %v3101
  %3107 = vrot.lane.b32.xlu0 %v3105, 64
  %v3108 = vpop.permute.xlu0 %3107
  %v3110 = vsel %vm469, %v3108, 0
  %3112 = vmatprep.subr.bf16.mxu0 0
  %3113 = vmatpush1.bf16.msra.mxu0 0
  %3114 = vmatprep.subr.bf16.mxu0 0
  %3115 = vmatpush1.bf16.msra.mxu0 0
  %3116 = vmatprep.subr.bf16.mxu0 0
  %3117 = vmatpush1.bf16.msra.mxu0 0
  %3118 = vmatprep.subr.bf16.mxu0 0
  %3119 = vmatpush1.bf16.msra.mxu0 0
  %3120 = vmatprep.subr.bf16.mxu0 0
  %3121 = vmatpush1.bf16.msra.mxu0 0
  %3122 = vmatprep.subr.bf16.mxu0 0
  %3123 = vmatpush1.bf16.msra.mxu0 0
  %3124 = vmatprep.subr.bf16.mxu0 0
  %3125 = vmatpush1.bf16.msra.mxu0 %v2785
  %3126 = vmatprep.subr.bf16.mxu0 0
  %3127 = vmatpush1.bf16.msra.mxu0 %v2784
  %3128 = vmatprep.subr.bf16.mxu0 0
  %3129 = vmatpush2.bf16.msra.mxu0 0
  %3130 = vmatprep.subr.bf16.mxu0 0
  %3131 = vmatpush2.bf16.msra.mxu0 0
  %3132 = vmatprep.subr.bf16.mxu0 0
  %3133 = vmatpush2.bf16.msra.mxu0 0
  %3134 = vmatprep.subr.bf16.mxu0 0
  %3135 = vmatpush2.bf16.msra.mxu0 0
  %3136 = vmatprep.subr.bf16.mxu0 0
  %3137 = vmatpush2.bf16.msra.mxu0 0
  %3138 = vmatprep.subr.bf16.mxu0 0
  %3139 = vmatpush2.bf16.msra.mxu0 0
  %3140 = vmatprep.subr.bf16.mxu0 0
  %3141 = vmatpush2.bf16.msra.mxu0 0
  %3142 = vmatprep.subr.bf16.mxu0 0
  %3143 = vmatpush2.bf16.msra.mxu0 0
  %3144 = vmatprep.mubr.bf16.mxu0 0
  %3145 = vmatmul.mubr.bf16.gmra.mxu0 %v3110
  %v3146 = vpop.f32.mrf.mxu0
  %v3147 = vadd.f32 %v2775, %v3146
  %v3148 = vpop.f32.mrf.mxu0
  %v3149 = vpop.f32.mrf.mxu0
  %v3150 = vadd.f32 %v2775, %v3149
  %v3151 = vpop.f32.mrf.mxu0
  %3152 = vdwg.mxu0
  %v3153 = vadd.f32 %v3103, %v3147
  %v3154 = vadd.f32 %v3104, %v3150
  %v3155 = vxor.u32 %v3153, 2147483648
  %v3156 = vxor.u32 %v3154, 2147483648
  %v3157 = vmul.f32 %v3155, 1.442695
  %v3158 = vpow.pop %v3157
  %v3159 = vmul.f32 %v3156, 1.442695
  %v3160 = vpow.pop %v3159
  %v3161 = vadd.f32 %v3158, 1.0
  %v3162 = vadd.f32 %v3160, 1.0
  %v3163 = vrcp.pop %v3161
  %v3164 = vmul.f32 1.0, %v3163
  %v3165 = vrcp.pop %v3162
  %v3166 = vmul.f32 1.0, %v3165
  %3169 = vrot.lane.b32.xlu0 %v3147, 64
  %v3170 = vpop.permute.xlu0 %3169
  %3171 = vrot.lane.b32.xlu0 %v3150, 64
  %v3172 = vpop.permute.xlu0 %3171
  %v3175 = vmul.f32 %v3164, %v3170
  %v3176 = vmul.f32 %v3166, %v3172
  %3179 = vrot.lane.b32.xlu0 %v3175, 64
  %v3180 = vpop.permute.xlu0 %3179
  %3181 = vrot.lane.b32.xlu0 %v3176, 64
  %v3182 = vpop.permute.xlu0 %3181
  %v3185 = vadd.f32 %v3103, %v3180
  %v3186 = vadd.f32 %v3104, %v3182
  %v3187 = vtanh.pop %v3185
  %v3188 = vtanh.pop %v3186
  %v3189 = vsub.f32 %v3101, %v3187
  %v3190 = vsub.f32 %v3102, %v3188
  %3193 = vrot.lane.b32.xlu0 %v3189, 96
  %v3194 = vpop.permute.xlu0 %3193
  %3195 = vrot.lane.b32.xlu0 %v3190, 96
  %v3196 = vpop.permute.xlu0 %3195
  %v3199 = vmul.f32 %v3164, %v3194
  %v3200 = vmul.f32 %v3166, %v3196
  %3203 = vrot.lane.b32.xlu0 %v3199, 32
  %v3204 = vpop.permute.xlu0 %3203
  %3205 = vrot.lane.b32.xlu0 %v3200, 32
  %v3206 = vpop.permute.xlu0 %3205
  %v3209 = vadd.f32 %v3187, %v3204
  %v3210 = vadd.f32 %v3188, %v3206
  %v3211 = vld [vmem:[#allocation3 + $0x40] sm:$0xff]
  %v3212 = vld [vmem:[#allocation3 + $0x48] sm:$0xff]
  %v3213 = vpack.c.bf16 %v3210, %v3209
  %3215 = vrot.lane.b32.xlu0 %v3213, 64
  %v3216 = vpop.permute.xlu0 %3215
  %v3218 = vsel %vm469, %v3216, 0
  %3220 = vmatprep.subr.bf16.mxu0 0
  %3221 = vmatpush1.bf16.msra.mxu0 0
  %3222 = vmatprep.subr.bf16.mxu0 0
  %3223 = vmatpush1.bf16.msra.mxu0 0
  %3224 = vmatprep.subr.bf16.mxu0 0
  %3225 = vmatpush1.bf16.msra.mxu0 0
  %3226 = vmatprep.subr.bf16.mxu0 0
  %3227 = vmatpush1.bf16.msra.mxu0 0
  %3228 = vmatprep.subr.bf16.mxu0 0
  %3229 = vmatpush1.bf16.msra.mxu0 0
  %3230 = vmatprep.subr.bf16.mxu0 0
  %3231 = vmatpush1.bf16.msra.mxu0 0
  %3232 = vmatprep.subr.bf16.mxu0 0
  %3233 = vmatpush1.bf16.msra.mxu0 %v2785
  %3234 = vmatprep.subr.bf16.mxu0 0
  %3235 = vmatpush1.bf16.msra.mxu0 %v2784
  %3236 = vmatprep.subr.bf16.mxu0 0
  %3237 = vmatpush2.bf16.msra.mxu0 0
  %3238 = vmatprep.subr.bf16.mxu0 0
  %3239 = vmatpush2.bf16.msra.mxu0 0
  %3240 = vmatprep.subr.bf16.mxu0 0
  %3241 = vmatpush2.bf16.msra.mxu0 0
  %3242 = vmatprep.subr.bf16.mxu0 0
  %3243 = vmatpush2.bf16.msra.mxu0 0
  %3244 = vmatprep.subr.bf16.mxu0 0
  %3245 = vmatpush2.bf16.msra.mxu0 0
  %3246 = vmatprep.subr.bf16.mxu0 0
  %3247 = vmatpush2.bf16.msra.mxu0 0
  %3248 = vmatprep.subr.bf16.mxu0 0
  %3249 = vmatpush2.bf16.msra.mxu0 0
  %3250 = vmatprep.subr.bf16.mxu0 0
  %3251 = vmatpush2.bf16.msra.mxu0 0
  %3252 = vmatprep.mubr.bf16.mxu0 0
  %3253 = vmatmul.mubr.bf16.gmra.mxu0 %v3218
  %v3254 = vpop.f32.mrf.mxu0
  %v3255 = vadd.f32 %v2775, %v3254
  %v3256 = vpop.f32.mrf.mxu0
  %v3257 = vpop.f32.mrf.mxu0
  %v3258 = vadd.f32 %v2775, %v3257
  %v3259 = vpop.f32.mrf.mxu0
  %3260 = vdwg.mxu0
  %v3261 = vadd.f32 %v3211, %v3255
  %v3262 = vadd.f32 %v3212, %v3258
  %v3263 = vxor.u32 %v3261, 2147483648
  %v3264 = vxor.u32 %v3262, 2147483648
  %v3265 = vmul.f32 %v3263, 1.442695
  %v3266 = vpow.pop %v3265
  %v3267 = vmul.f32 %v3264, 1.442695
  %v3268 = vpow.pop %v3267
  %v3269 = vadd.f32 %v3266, 1.0
  %v3270 = vadd.f32 %v3268, 1.0
  %v3271 = vrcp.pop %v3269
  %v3272 = vmul.f32 1.0, %v3271
  %v3273 = vrcp.pop %v3270
  %v3274 = vmul.f32 1.0, %v3273
  %3277 = vrot.lane.b32.xlu0 %v3255, 64
  %v3278 = vpop.permute.xlu0 %3277
  %3279 = vrot.lane.b32.xlu0 %v3258, 64
  %v3280 = vpop.permute.xlu0 %3279
  %v3283 = vmul.f32 %v3272, %v3278
  %v3284 = vmul.f32 %v3274, %v3280
  %3287 = vrot.lane.b32.xlu0 %v3283, 64
  %v3288 = vpop.permute.xlu0 %3287
  %3289 = vrot.lane.b32.xlu0 %v3284, 64
  %v3290 = vpop.permute.xlu0 %3289
  %v3293 = vadd.f32 %v3211, %v3288
  %v3294 = vadd.f32 %v3212, %v3290
  %v3295 = vtanh.pop %v3293
  %v3296 = vtanh.pop %v3294
  %v3297 = vsub.f32 %v3209, %v3295
  %v3298 = vsub.f32 %v3210, %v3296
  %3301 = vrot.lane.b32.xlu0 %v3297, 96
  %v3302 = vpop.permute.xlu0 %3301
  %3303 = vrot.lane.b32.xlu0 %v3298, 96
  %v3304 = vpop.permute.xlu0 %3303
  %v3307 = vmul.f32 %v3272, %v3302
  %v3308 = vmul.f32 %v3274, %v3304
  %3311 = vrot.lane.b32.xlu0 %v3307, 32
  %v3312 = vpop.permute.xlu0 %3311
  %3313 = vrot.lane.b32.xlu0 %v3308, 32
  %v3314 = vpop.permute.xlu0 %3313
  %v3317 = vadd.f32 %v3295, %v3312
  %v3318 = vadd.f32 %v3296, %v3314
  %v3319 = vld [vmem:[#allocation3 + $0x50] sm:$0xff]
  %v3320 = vld [vmem:[#allocation3 + $0x58] sm:$0xff]
  %v3321 = vpack.c.bf16 %v3318, %v3317
  %3323 = vrot.lane.b32.xlu0 %v3321, 64
  %v3324 = vpop.permute.xlu0 %3323
  %v3326 = vsel %vm469, %v3324, 0
  %3328 = vmatprep.subr.bf16.mxu0 0
  %3329 = vmatpush1.bf16.msra.mxu0 0
  %3330 = vmatprep.subr.bf16.mxu0 0
  %3331 = vmatpush1.bf16.msra.mxu0 0
  %3332 = vmatprep.subr.bf16.mxu0 0
  %3333 = vmatpush1.bf16.msra.mxu0 0
  %3334 = vmatprep.subr.bf16.mxu0 0
  %3335 = vmatpush1.bf16.msra.mxu0 0
  %3336 = vmatprep.subr.bf16.mxu0 0
  %3337 = vmatpush1.bf16.msra.mxu0 0
  %3338 = vmatprep.subr.bf16.mxu0 0
  %3339 = vmatpush1.bf16.msra.mxu0 0
  %3340 = vmatprep.subr.bf16.mxu0 0
  %3341 = vmatpush1.bf16.msra.mxu0 %v2785
  %3342 = vmatprep.subr.bf16.mxu0 0
  %3343 = vmatpush1.bf16.msra.mxu0 %v2784
  %3344 = vmatprep.subr.bf16.mxu0 0
  %3345 = vmatpush2.bf16.msra.mxu0 0
  %3346 = vmatprep.subr.bf16.mxu0 0
  %3347 = vmatpush2.bf16.msra.mxu0 0
  %3348 = vmatprep.subr.bf16.mxu0 0
  %3349 = vmatpush2.bf16.msra.mxu0 0
  %3350 = vmatprep.subr.bf16.mxu0 0
  %3351 = vmatpush2.bf16.msra.mxu0 0
  %3352 = vmatprep.subr.bf16.mxu0 0
  %3353 = vmatpush2.bf16.msra.mxu0 0
  %3354 = vmatprep.subr.bf16.mxu0 0
  %3355 = vmatpush2.bf16.msra.mxu0 0
  %3356 = vmatprep.subr.bf16.mxu0 0
  %3357 = vmatpush2.bf16.msra.mxu0 0
  %3358 = vmatprep.subr.bf16.mxu0 0
  %3359 = vmatpush2.bf16.msra.mxu0 0
  %3360 = vmatprep.mubr.bf16.mxu0 0
  %3361 = vmatmul.mubr.bf16.gmra.mxu0 %v3326
  %v3362 = vpop.f32.mrf.mxu0
  %v3363 = vadd.f32 %v2775, %v3362
  %v3364 = vpop.f32.mrf.mxu0
  %v3365 = vpop.f32.mrf.mxu0
  %v3366 = vadd.f32 %v2775, %v3365
  %v3367 = vpop.f32.mrf.mxu0
  %3368 = vdwg.mxu0
  %v3369 = vadd.f32 %v3319, %v3363
  %v3370 = vadd.f32 %v3320, %v3366
  %v3371 = vxor.u32 %v3369, 2147483648
  %v3372 = vxor.u32 %v3370, 2147483648
  %v3373 = vmul.f32 %v3371, 1.442695
  %v3374 = vpow.pop %v3373
  %v3375 = vmul.f32 %v3372, 1.442695
  %v3376 = vpow.pop %v3375
  %v3377 = vadd.f32 %v3374, 1.0
  %v3378 = vadd.f32 %v3376, 1.0
  %v3379 = vrcp.pop %v3377
  %v3380 = vmul.f32 1.0, %v3379
  %v3381 = vrcp.pop %v3378
  %v3382 = vmul.f32 1.0, %v3381
  %3385 = vrot.lane.b32.xlu0 %v3363, 64
  %v3386 = vpop.permute.xlu0 %3385
  %3387 = vrot.lane.b32.xlu0 %v3366, 64
  %v3388 = vpop.permute.xlu0 %3387
  %v3391 = vmul.f32 %v3380, %v3386
  %v3392 = vmul.f32 %v3382, %v3388
  %3395 = vrot.lane.b32.xlu0 %v3391, 64
  %v3396 = vpop.permute.xlu0 %3395
  %3397 = vrot.lane.b32.xlu0 %v3392, 64
  %v3398 = vpop.permute.xlu0 %3397
  %v3401 = vadd.f32 %v3319, %v3396
  %v3402 = vadd.f32 %v3320, %v3398
  %v3403 = vtanh.pop %v3401
  %v3404 = vtanh.pop %v3402
  %v3405 = vsub.f32 %v3317, %v3403
  %v3406 = vsub.f32 %v3318, %v3404
  %3409 = vrot.lane.b32.xlu0 %v3405, 96
  %v3410 = vpop.permute.xlu0 %3409
  %3411 = vrot.lane.b32.xlu0 %v3406, 96
  %v3412 = vpop.permute.xlu0 %3411
  %v3415 = vmul.f32 %v3380, %v3410
  %v3416 = vmul.f32 %v3382, %v3412
  %3419 = vrot.lane.b32.xlu0 %v3415, 32
  %v3420 = vpop.permute.xlu0 %3419
  %3421 = vrot.lane.b32.xlu0 %v3416, 32
  %v3422 = vpop.permute.xlu0 %3421
  %v3425 = vadd.f32 %v3403, %v3420
  %v3426 = vadd.f32 %v3404, %v3422
  %v3427 = vld [vmem:[#allocation3 + $0x60] sm:$0xff]
  %v3428 = vld [vmem:[#allocation3 + $0x68] sm:$0xff]
  %v3429 = vpack.c.bf16 %v3426, %v3425
  %3431 = vrot.lane.b32.xlu0 %v3429, 64
  %v3432 = vpop.permute.xlu0 %3431
  %v3434 = vsel %vm469, %v3432, 0
  %3436 = vmatprep.subr.bf16.mxu0 0
  %3437 = vmatpush1.bf16.msra.mxu0 0
  %3438 = vmatprep.subr.bf16.mxu0 0
  %3439 = vmatpush1.bf16.msra.mxu0 0
  %3440 = vmatprep.subr.bf16.mxu0 0
  %3441 = vmatpush1.bf16.msra.mxu0 0
  %3442 = vmatprep.subr.bf16.mxu0 0
  %3443 = vmatpush1.bf16.msra.mxu0 0
  %3444 = vmatprep.subr.bf16.mxu0 0
  %3445 = vmatpush1.bf16.msra.mxu0 0
  %3446 = vmatprep.subr.bf16.mxu0 0
  %3447 = vmatpush1.bf16.msra.mxu0 0
  %3448 = vmatprep.subr.bf16.mxu0 0
  %3449 = vmatpush1.bf16.msra.mxu0 %v2785
  %3450 = vmatprep.subr.bf16.mxu0 0
  %3451 = vmatpush1.bf16.msra.mxu0 %v2784
  %3452 = vmatprep.subr.bf16.mxu0 0
  %3453 = vmatpush2.bf16.msra.mxu0 0
  %3454 = vmatprep.subr.bf16.mxu0 0
  %3455 = vmatpush2.bf16.msra.mxu0 0
  %3456 = vmatprep.subr.bf16.mxu0 0
  %3457 = vmatpush2.bf16.msra.mxu0 0
  %3458 = vmatprep.subr.bf16.mxu0 0
  %3459 = vmatpush2.bf16.msra.mxu0 0
  %3460 = vmatprep.subr.bf16.mxu0 0
  %3461 = vmatpush2.bf16.msra.mxu0 0
  %3462 = vmatprep.subr.bf16.mxu0 0
  %3463 = vmatpush2.bf16.msra.mxu0 0
  %3464 = vmatprep.subr.bf16.mxu0 0
  %3465 = vmatpush2.bf16.msra.mxu0 0
  %3466 = vmatprep.subr.bf16.mxu0 0
  %3467 = vmatpush2.bf16.msra.mxu0 0
  %3468 = vmatprep.mubr.bf16.mxu0 0
  %3469 = vmatmul.mubr.bf16.gmra.mxu0 %v3434
  %v3470 = vpop.f32.mrf.mxu0
  %v3471 = vadd.f32 %v2775, %v3470
  %v3472 = vpop.f32.mrf.mxu0
  %v3473 = vpop.f32.mrf.mxu0
  %v3474 = vadd.f32 %v2775, %v3473
  %v3475 = vpop.f32.mrf.mxu0
  %3476 = vdwg.mxu0
  %v3477 = vadd.f32 %v3427, %v3471
  %v3478 = vadd.f32 %v3428, %v3474
  %v3479 = vxor.u32 %v3477, 2147483648
  %v3480 = vxor.u32 %v3478, 2147483648
  %v3481 = vmul.f32 %v3479, 1.442695
  %v3482 = vpow.pop %v3481
  %v3483 = vmul.f32 %v3480, 1.442695
  %v3484 = vpow.pop %v3483
  %v3485 = vadd.f32 %v3482, 1.0
  %v3486 = vadd.f32 %v3484, 1.0
  %v3487 = vrcp.pop %v3485
  %v3488 = vmul.f32 1.0, %v3487
  %v3489 = vrcp.pop %v3486
  %v3490 = vmul.f32 1.0, %v3489
  %3493 = vrot.lane.b32.xlu0 %v3471, 64
  %v3494 = vpop.permute.xlu0 %3493
  %3495 = vrot.lane.b32.xlu0 %v3474, 64
  %v3496 = vpop.permute.xlu0 %3495
  %v3499 = vmul.f32 %v3488, %v3494
  %v3500 = vmul.f32 %v3490, %v3496
  %3503 = vrot.lane.b32.xlu0 %v3499, 64
  %v3504 = vpop.permute.xlu0 %3503
  %3505 = vrot.lane.b32.xlu0 %v3500, 64
  %v3506 = vpop.permute.xlu0 %3505
  %v3509 = vadd.f32 %v3427, %v3504
  %v3510 = vadd.f32 %v3428, %v3506
  %v3511 = vtanh.pop %v3509
  %v3512 = vtanh.pop %v3510
  %v3513 = vsub.f32 %v3425, %v3511
  %v3514 = vsub.f32 %v3426, %v3512
  %3517 = vrot.lane.b32.xlu0 %v3513, 96
  %v3518 = vpop.permute.xlu0 %3517
  %3519 = vrot.lane.b32.xlu0 %v3514, 96
  %v3520 = vpop.permute.xlu0 %3519
  %v3523 = vmul.f32 %v3488, %v3518
  %v3524 = vmul.f32 %v3490, %v3520
  %3527 = vrot.lane.b32.xlu0 %v3523, 32
  %v3528 = vpop.permute.xlu0 %3527
  %3529 = vrot.lane.b32.xlu0 %v3524, 32
  %v3530 = vpop.permute.xlu0 %3529
  %v3533 = vadd.f32 %v3511, %v3528
  %v3534 = vadd.f32 %v3512, %v3530
  %v3535 = vld [vmem:[#allocation3 + $0x70] sm:$0xff]
  %v3536 = vld [vmem:[#allocation3 + $0x78] sm:$0xff]
  %v3537 = vpack.c.bf16 %v3534, %v3533
  %3539 = vrot.lane.b32.xlu0 %v3537, 64
  %v3540 = vpop.permute.xlu0 %3539
  %v3542 = vsel %vm469, %v3540, 0
  %3544 = vmatprep.subr.bf16.mxu0 0
  %3545 = vmatpush1.bf16.msra.mxu0 0
  %3546 = vmatprep.subr.bf16.mxu0 0
  %3547 = vmatpush1.bf16.msra.mxu0 0
  %3548 = vmatprep.subr.bf16.mxu0 0
  %3549 = vmatpush1.bf16.msra.mxu0 0
  %3550 = vmatprep.subr.bf16.mxu0 0
  %3551 = vmatpush1.bf16.msra.mxu0 0
  %3552 = vmatprep.subr.bf16.mxu0 0
  %3553 = vmatpush1.bf16.msra.mxu0 0
  %3554 = vmatprep.subr.bf16.mxu0 0
  %3555 = vmatpush1.bf16.msra.mxu0 0
  %3556 = vmatprep.subr.bf16.mxu0 0
  %3557 = vmatpush1.bf16.msra.mxu0 %v2785
  %3558 = vmatprep.subr.bf16.mxu0 0
  %3559 = vmatpush1.bf16.msra.mxu0 %v2784
  %3560 = vmatprep.subr.bf16.mxu0 0
  %3561 = vmatpush2.bf16.msra.mxu0 0
  %3562 = vmatprep.subr.bf16.mxu0 0
  %3563 = vmatpush2.bf16.msra.mxu0 0
  %3564 = vmatprep.subr.bf16.mxu0 0
  %3565 = vmatpush2.bf16.msra.mxu0 0
  %3566 = vmatprep.subr.bf16.mxu0 0
  %3567 = vmatpush2.bf16.msra.mxu0 0
  %3568 = vmatprep.subr.bf16.mxu0 0
  %3569 = vmatpush2.bf16.msra.mxu0 0
  %3570 = vmatprep.subr.bf16.mxu0 0
  %3571 = vmatpush2.bf16.msra.mxu0 0
  %3572 = vmatprep.subr.bf16.mxu0 0
  %3573 = vmatpush2.bf16.msra.mxu0 0
  %3574 = vmatprep.subr.bf16.mxu0 0
  %3575 = vmatpush2.bf16.msra.mxu0 0
  %3576 = vmatprep.mubr.bf16.mxu0 0
  %3577 = vmatmul.mubr.bf16.gmra.mxu0 %v3542
  %v3578 = vpop.f32.mrf.mxu0
  %v3579 = vadd.f32 %v2775, %v3578
  %v3580 = vpop.f32.mrf.mxu0
  %v3581 = vpop.f32.mrf.mxu0
  %v3582 = vadd.f32 %v2775, %v3581
  %v3583 = vpop.f32.mrf.mxu0
  %3584 = vdwg.mxu0
  %v3585 = vadd.f32 %v3535, %v3579
  %v3586 = vadd.f32 %v3536, %v3582
  %v3587 = vxor.u32 %v3585, 2147483648
  %v3588 = vxor.u32 %v3586, 2147483648
  %v3589 = vmul.f32 %v3587, 1.442695
  %v3590 = vpow.pop %v3589
  %v3591 = vmul.f32 %v3588, 1.442695
  %v3592 = vpow.pop %v3591
  %v3593 = vadd.f32 %v3590, 1.0
  %v3594 = vadd.f32 %v3592, 1.0
  %v3595 = vrcp.pop %v3593
  %v3596 = vmul.f32 1.0, %v3595
  %v3597 = vrcp.pop %v3594
  %v3598 = vmul.f32 1.0, %v3597
  %3601 = vrot.lane.b32.xlu0 %v3579, 64
  %v3602 = vpop.permute.xlu0 %3601
  %3603 = vrot.lane.b32.xlu0 %v3582, 64
  %v3604 = vpop.permute.xlu0 %3603
  %v3607 = vmul.f32 %v3596, %v3602
  %v3608 = vmul.f32 %v3598, %v3604
  %3611 = vrot.lane.b32.xlu0 %v3607, 64
  %v3612 = vpop.permute.xlu0 %3611
  %3613 = vrot.lane.b32.xlu0 %v3608, 64
  %v3614 = vpop.permute.xlu0 %3613
  %v3617 = vadd.f32 %v3535, %v3612
  %v3618 = vadd.f32 %v3536, %v3614
  %v3619 = vtanh.pop %v3617
  %v3620 = vtanh.pop %v3618
  %v3621 = vsub.f32 %v3533, %v3619
  %v3622 = vsub.f32 %v3534, %v3620
  %3625 = vrot.lane.b32.xlu0 %v3621, 96
  %v3626 = vpop.permute.xlu0 %3625
  %3627 = vrot.lane.b32.xlu0 %v3622, 96
  %v3628 = vpop.permute.xlu0 %3627
  %v3631 = vmul.f32 %v3596, %v3626
  %v3632 = vmul.f32 %v3598, %v3628
  %3635 = vrot.lane.b32.xlu0 %v3631, 32
  %v3636 = vpop.permute.xlu0 %3635
  %3637 = vrot.lane.b32.xlu0 %v3632, 32
  %v3638 = vpop.permute.xlu0 %3637
  %v3641 = vadd.f32 %v3619, %v3636
  %v3642 = vadd.f32 %v3620, %v3638
  %v3643 = vld [vmem:[%s4] sm:$0x3]
  %v3644 = vpack.c.bf16 %v3642, %v3641
  %3646 = vrot.lane.b32.xlu0 %v3644, 64
  %v3647 = vpop.permute.xlu0 %3646
  %vm3649 = vcmask 130048
  %v3651 = vsel %vm3649, %v3643, 0
  %3653 = vmatprep.subr.bf16.mxu0 0
  %3654 = vmatpush1.bf16.msra.mxu0 0
  %3655 = vmatprep.subr.bf16.mxu0 0
  %3656 = vmatpush1.bf16.msra.mxu0 0
  %3657 = vmatprep.subr.bf16.mxu0 0
  %3658 = vmatpush1.bf16.msra.mxu0 0
  %3659 = vmatprep.subr.bf16.mxu0 0
  %3660 = vmatpush1.bf16.msra.mxu0 0
  %3661 = vmatprep.subr.bf16.mxu0 0
  %3662 = vmatpush1.bf16.msra.mxu0 0
  %3663 = vmatprep.subr.bf16.mxu0 0
  %3664 = vmatpush1.bf16.msra.mxu0 0
  %3665 = vmatprep.subr.bf16.mxu0 0
  %3666 = vmatpush1.bf16.msra.mxu0 0
  %3667 = vmatprep.subr.bf16.mxu0 0
  %3668 = vmatpush1.bf16.msra.mxu0 %v3647
  %3669 = vmatprep.subr.bf16.mxu0 0
  %3670 = vmatpush2.bf16.msra.mxu0 0
  %3671 = vmatprep.subr.bf16.mxu0 0
  %3672 = vmatpush2.bf16.msra.mxu0 0
  %3673 = vmatprep.subr.bf16.mxu0 0
  %3674 = vmatpush2.bf16.msra.mxu0 0
  %3675 = vmatprep.subr.bf16.mxu0 0
  %3676 = vmatpush2.bf16.msra.mxu0 0
  %3677 = vmatprep.subr.bf16.mxu0 0
  %3678 = vmatpush2.bf16.msra.mxu0 0
  %3679 = vmatprep.subr.bf16.mxu0 0
  %3680 = vmatpush2.bf16.msra.mxu0 0
  %3681 = vmatprep.subr.bf16.mxu0 0
  %3682 = vmatpush2.bf16.msra.mxu0 0
  %3683 = vmatprep.subr.bf16.mxu0 0
  %3684 = vmatpush2.bf16.msra.mxu0 0
  %3685 = vmatprep.mubr.bf16.mxu0 0
  %3686 = vmatmul.mubr.bf16.gmra.mxu0 %v3651
  %v3687 = vpop.f32.mrf.mxu0
  %v3688 = vadd.f32 0.0, %v3687
  %v3689 = vpop.f32.mrf.mxu0
  %v3690 = vpop.f32.mrf.mxu0
  %v3691 = vpop.f32.mrf.mxu0
  %3692 = vdwg.mxu0
  %v3693 = vpack.c.bf16 %v3688, %v3688
  %v3694 = vld [vmem:[%s2 + $0x58] sm:$0xf]
  %v3695 = vld [vmem:[%s2 + $0x5c] sm:$0xf]
  %v3696 = vld [vmem:[%s2 + $0x60] sm:$0xf]
  %v3697 = vld [vmem:[%s2 + $0x64] sm:$0xf]
  %v3698 = vld [vmem:[%s2 + $0x68] sm:$0xf]
  %v3699 = vld [vmem:[%s2 + $0x6c] sm:$0x1]
  %v3702 = vunpack.c.l.s4 1983009808
  %v3703 = vunpack.c.0.s8 %v3702
  %v3704 = vlaneseq
  %v3705 = vshrl.u32 %v3704, 7
  %v3706 = vsub.s32 %v3703, %v3705
  %v3707 = vrot.slane %v3643, %v3706
  %3708 = vrot.lane.b32.xlu0 %v3707, 112
  %v3709 = vpop.permute.xlu0 %3708
  %v3712 = vunpack.c.l.b16 %v3698
  %v3713 = vunpack.c.l.b16 %v3699
  %v3714 = vpack.c.b16 %v3713, %v3712
  %vm3715 = vcmask 80896
  %v3717 = vsel %vm3715, %v3709, 0
  %vm3719 = vcmask 1044480
  %v3721 = vsel %vm3719, %v3714, 0
  %3723 = vmatprep.subr.bf16.mxu0 0
  %3724 = vmatpush1.bf16.msra.mxu0 0
  %3725 = vmatprep.subr.bf16.mxu0 0
  %3726 = vmatpush1.bf16.msra.mxu0 0
  %3727 = vmatprep.subr.bf16.mxu0 0
  %3728 = vmatpush1.bf16.msra.mxu0 0
  %3729 = vmatprep.subr.bf16.mxu0 0
  %3730 = vmatpush1.bf16.msra.mxu0 0
  %3731 = vmatprep.subr.bf16.mxu0 0
  %3732 = vmatpush1.bf16.msra.mxu0 0
  %3733 = vmatprep.subr.bf16.mxu0 0
  %3734 = vmatpush1.bf16.msra.mxu0 0
  %3735 = vmatprep.subr.bf16.mxu0 0
  %3736 = vmatpush1.bf16.msra.mxu0 0
  %3737 = vmatprep.subr.bf16.mxu0 0
  %3738 = vmatpush1.bf16.msra.mxu0 %v3721
  %3739 = vmatprep.subr.bf16.mxu0 0
  %3740 = vmatpush2.bf16.msra.mxu0 0
  %3741 = vmatprep.subr.bf16.mxu0 0
  %3742 = vmatpush2.bf16.msra.mxu0 0
  %3743 = vmatprep.subr.bf16.mxu0 0
  %3744 = vmatpush2.bf16.msra.mxu0 0
  %3745 = vmatprep.subr.bf16.mxu0 0
  %3746 = vmatpush2.bf16.msra.mxu0 0
  %3747 = vmatprep.subr.bf16.mxu0 0
  %3748 = vmatpush2.bf16.msra.mxu0 0
  %3749 = vmatprep.subr.bf16.mxu0 0
  %3750 = vmatpush2.bf16.msra.mxu0 0
  %3751 = vmatprep.subr.bf16.mxu0 0
  %3752 = vmatpush2.bf16.msra.mxu0 0
  %3753 = vmatprep.subr.bf16.mxu0 0
  %3754 = vmatpush2.bf16.msra.mxu0 0
  %3755 = vmatprep.mubr.bf16.mxu0 0
  %3756 = vmatmul.mubr.bf16.gmra.mxu0 %v3717
  %v3757 = vpop.f32.mrf.mxu0
  %v3758 = vadd.f32 0.0, %v3757
  %v3759 = vpop.f32.mrf.mxu0
  %v3760 = vpop.f32.mrf.mxu0
  %v3761 = vpop.f32.mrf.mxu0
  %3762 = vdwg.mxu0
  %v3767 = vunpack.c.l.b16 %v3694
  %v3768 = vunpack.c.l.b16 %v3695
  %v3769 = vunpack.c.l.b16 %v3696
  %v3770 = vunpack.c.l.b16 %v3697
  %v3771 = vpack.c.b16 %v3768, %v3767
  %v3772 = vpack.c.b16 %v3770, %v3769
  %v3776 = vsel %vm469, %v3693, 0
  %3778 = vmatprep.subr.bf16.mxu0 0
  %3779 = vmatpush1.bf16.msra.mxu0 0
  %3780 = vmatprep.subr.bf16.mxu0 0
  %3781 = vmatpush1.bf16.msra.mxu0 0
  %3782 = vmatprep.subr.bf16.mxu0 0
  %3783 = vmatpush1.bf16.msra.mxu0 0
  %3784 = vmatprep.subr.bf16.mxu0 0
  %3785 = vmatpush1.bf16.msra.mxu0 0
  %3786 = vmatprep.subr.bf16.mxu0 0
  %3787 = vmatpush1.bf16.msra.mxu0 0
  %3788 = vmatprep.subr.bf16.mxu0 0
  %3789 = vmatpush1.bf16.msra.mxu0 0
  %3790 = vmatprep.subr.bf16.mxu0 0
  %3791 = vmatpush1.bf16.msra.mxu0 %v3772
  %3792 = vmatprep.subr.bf16.mxu0 0
  %3793 = vmatpush1.bf16.msra.mxu0 %v3771
  %3794 = vmatprep.subr.bf16.mxu0 0
  %3795 = vmatpush2.bf16.msra.mxu0 0
  %3796 = vmatprep.subr.bf16.mxu0 0
  %3797 = vmatpush2.bf16.msra.mxu0 0
  %3798 = vmatprep.subr.bf16.mxu0 0
  %3799 = vmatpush2.bf16.msra.mxu0 0
  %3800 = vmatprep.subr.bf16.mxu0 0
  %3801 = vmatpush2.bf16.msra.mxu0 0
  %3802 = vmatprep.subr.bf16.mxu0 0
  %3803 = vmatpush2.bf16.msra.mxu0 0
  %3804 = vmatprep.subr.bf16.mxu0 0
  %3805 = vmatpush2.bf16.msra.mxu0 0
  %3806 = vmatprep.subr.bf16.mxu0 0
  %3807 = vmatpush2.bf16.msra.mxu0 0
  %3808 = vmatprep.subr.bf16.mxu0 0
  %3809 = vmatpush2.bf16.msra.mxu0 0
  %3810 = vmatprep.mubr.bf16.mxu0 0
  %3811 = vmatmul.mubr.bf16.gmra.mxu0 %v3776
  %v3812 = vpop.f32.mrf.mxu0
  %v3813 = vadd.f32 %v3758, %v3812
  %v3814 = vpop.f32.mrf.mxu0
  %v3815 = vpop.f32.mrf.mxu0
  %v3816 = vpop.f32.mrf.mxu0
  %3817 = vdwg.mxu0
  %v3818 = vld [vmem:[%s3 + $0x6] sm:$0x1]
  %v3819 = vlaneseq
  %v3820 = vshrl.u32 %v3819, 7
  %v3821 = vsub.s32 0, %v3820
  %v3822 = vrot.slane %v3818, %v3821
  %v3823 = vadd.f32 %v3813, %v3822
  %vm3824 = vcmp.gt.f32.partialorder %v3823, 0.0
  %v3825 = vmul.f32 %v3823, 0.1
  %v3826 = vsel %vm3824, %v3823, %v3825
  %v3827 = vpack.c.bf16 %v3826, %v3826
  %v3828 = vld [vmem:[%s2 + $0x70] sm:$0xf]
  %v3829 = vld [vmem:[%s2 + $0x74] sm:$0xf]
  %v3832 = vunpack.c.l.b16 %v3828
  %v3833 = vunpack.c.l.b16 %v3829
  %v3834 = vpack.c.b16 %v3833, %v3832
  %3837 = vrot.lane.b32.xlu0 %v3822, 112
  %v3838 = vpop.permute.xlu0 %3837
  %v3841 = vsel %vm3649, %v3827, 0
  %3843 = vmatprep.subr.bf16.mxu0 0
  %3844 = vmatpush1.bf16.msra.mxu0 0
  %3845 = vmatprep.subr.bf16.mxu0 0
  %3846 = vmatpush1.bf16.msra.mxu0 0
  %3847 = vmatprep.subr.bf16.mxu0 0
  %3848 = vmatpush1.bf16.msra.mxu0 0
  %3849 = vmatprep.subr.bf16.mxu0 0
  %3850 = vmatpush1.bf16.msra.mxu0 0
  %3851 = vmatprep.subr.bf16.mxu0 0
  %3852 = vmatpush1.bf16.msra.mxu0 0
  %3853 = vmatprep.subr.bf16.mxu0 0
  %3854 = vmatpush1.bf16.msra.mxu0 0
  %3855 = vmatprep.subr.bf16.mxu0 0
  %3856 = vmatpush1.bf16.msra.mxu0 0
  %3857 = vmatprep.subr.bf16.mxu0 0
  %3858 = vmatpush1.bf16.msra.mxu0 %v3834
  %3859 = vmatprep.subr.bf16.mxu0 0
  %3860 = vmatpush2.bf16.msra.mxu0 0
  %3861 = vmatprep.subr.bf16.mxu0 0
  %3862 = vmatpush2.bf16.msra.mxu0 0
  %3863 = vmatprep.subr.bf16.mxu0 0
  %3864 = vmatpush2.bf16.msra.mxu0 0
  %3865 = vmatprep.subr.bf16.mxu0 0
  %3866 = vmatpush2.bf16.msra.mxu0 0
  %3867 = vmatprep.subr.bf16.mxu0 0
  %3868 = vmatpush2.bf16.msra.mxu0 0
  %3869 = vmatprep.subr.bf16.mxu0 0
  %3870 = vmatpush2.bf16.msra.mxu0 0
  %3871 = vmatprep.subr.bf16.mxu0 0
  %3872 = vmatpush2.bf16.msra.mxu0 0
  %3873 = vmatprep.subr.bf16.mxu0 0
  %3874 = vmatpush2.bf16.msra.mxu0 0
  %3875 = vmatprep.mubr.bf16.mxu0 0
  %3876 = vmatmul.mubr.bf16.gmra.mxu0 %v3841
  %v3877 = vpop.f32.mrf.mxu0
  %v3878 = vadd.f32 %v3838, %v3877
  %v3879 = vpop.f32.mrf.mxu0
  %v3880 = vpop.f32.mrf.mxu0
  %v3881 = vpop.f32.mrf.mxu0
  %3882 = vdwg.mxu0
  %vm3883 = vcmp.gt.f32.partialorder %v3878, 0.0
  %v3884 = vmul.f32 %v3878, 0.05
  %v3885 = vsel %vm3883, %v3878, %v3884
  %v3886 = vld [vmem:[%s2 + $0x78] sm:$0x1]
  %v3887 = vunpack.c.l.bf16 %v3886
  %v3888 = vlaneseq
  %v3889 = vshrl.u32 %v3888, 7
  %v3890 = vsub.s32 0, %v3889
  %v3891 = vrot.slane %v3887, %v3890
  %v3892 = vmul.f32 %v3885, %v3891
  %vm3893 = vcmask 60416
  %v3894 = vsel %vm3893, %v3892, 0.0
  %3895 = vadd.xlane.f32.xlu0 %v3894
  %v3896 = vpop.xlane.xlu0 %3895
  %v3897 = vadd.f32 %v3896, %v3822
  %3899 = vrot.lane.b32.xlu0 %v3897, 104
  %v3900 = vpop.permute.xlu0 %3899
  %vm3902 = vcmask 3072
  %3903 = vst.msk [vmem:[%s5] sm:$0xf] %vm3902, %v3900
  // Predicated region
  $region22: #{postal_temporal_gin_gru_forward.1} parent=0 // pred_check
    _
  $region23: #{postal_temporal_gin_gru_forward.1} parent=0 // pred_check_branch
    %3905 = sbr.rel (0) target = $region25
  $region24: #{postal_temporal_gin_gru_forward.1} parent=0 // pred_region
    _
  $region25: #{postal_temporal_gin_gru_forward.1} parent=0 // pred_fallthru
    _
  // Predicated region
  $region26: #{postal_temporal_gin_gru_forward.1} parent=0 // pred_check
    _
  $region27: #{postal_temporal_gin_gru_forward.1} parent=0 // pred_check_branch
    %3907 = sbr.rel (0) target = $region29
  $region28: #{postal_temporal_gin_gru_forward.1} parent=0 // pred_region
    _
  $region29: #{postal_temporal_gin_gru_forward.1} parent=0 // pred_fallthru
    _

</llo_original>
